<compile_context>
chip_gen: v5e
topology: v5e:2x2
jax: 0.10.0
libtpu: 0.0.40
codegen_flags: <defaults>
</compile_context>

<pallas_src>
import functools

import jax
import jax.numpy as jnp
from jax.experimental import pallas as pl
from jax.experimental.pallas import tpu as pltpu


def _row_of_flat(flat_idx, row_len, n_rows):
    """floor(flat_idx / row_len) for a flat spatial iota, without vector integer division."""
    r = jnp.zeros_like(flat_idx)
    for k in range(1, n_rows):
        r = r + jnp.where(flat_idx >= k * row_len, 1, 0)
    return r


def _decoder_kernel(x_ref, w1_ref, b1_ref, w2_ref, b2_ref, o_ref, *, H, W):
    f32 = jnp.float32
    HW = H * W
    H2, W2 = 2 * H, 2 * W
    HW2 = H2 * W2
    H4, W4 = 4 * H, 4 * W

    x = x_ref[0]          # (Cin, H*W)    channel-major, flat spatial on lanes
    w1 = w1_ref[...]      # (Cmid, 9*Cin) im2col-ordered weights
    b1 = b1_ref[...]      # (Cmid, 1)
    w2 = w2_ref[...]      # (Cmid, 9)     per-tap weight columns
    b2 = b2_ref[...]      # (1, 1)
    Cmid = w2.shape[0]

    # -------------------- conv1 (3x3, pad=1, Cin->Cmid) + bias + ReLU --------------------
    # Each tap's "shift + zero pad" is a 0/1 selection matrix on the flat spatial axis:
    #   shifted[c, p] = sum_q x[c, q] * sel[q, p],  sel[q, p] = (q == p + dy*W + dx) & valid(p)
    q_col = jax.lax.broadcasted_iota(jnp.int32, (HW, 1), 0)   # source pixel
    p_row = jax.lax.broadcasted_iota(jnp.int32, (1, HW), 1)   # destination pixel
    y_p = _row_of_flat(p_row, W, H)
    x_p = p_row - y_p * W

    taps = []
    for ky in range(3):
        for kx in range(3):
            dy, dx = ky - 1, kx - 1
            valid = ((y_p + dy >= 0) & (y_p + dy < H) &
                     (x_p + dx >= 0) & (x_p + dx < W))                          # (1, HW)
            sel = jnp.where((q_col == p_row + (dy * W + dx)) & valid, 1.0, 0.0)  # (HW, HW)
            taps.append(jnp.dot(x, sel, preferred_element_type=f32))             # (Cin, HW)
    patches = jnp.concatenate(taps, axis=0)                                       # (9*Cin, HW)
    c1 = jnp.dot(w1, patches, preferred_element_type=f32) + b1                    # (Cmid, HW)
    c1 = jnp.maximum(c1, 0.0)

    # ------------ nearest x2 upsample fused into conv2's 3x3 taps (VPU channel sum) ------------
    # On the 2H x 2W grid (dest pixel P = Y*W2 + X), tap (dy, dx) needs
    #   up_shift[c, P] = c1[c, ((Y+dy)//2)*W + (X+dx)//2]   (0 outside the image)
    # which is again c1 @ sel2 with an iota-built 0/1 matrix.  The Cmid->1 contraction is a
    # VPU broadcast-multiply + sublane reduction (MXU not used for the channel contraction).
    pc_col = jax.lax.broadcasted_iota(jnp.int32, (HW, 1), 0)   # source pixel in c1
    y_pc = _row_of_flat(pc_col, W, H)
    x_pc = pc_col - y_pc * W
    P_row = jax.lax.broadcasted_iota(jnp.int32, (1, HW2), 1)   # dest pixel on 2H x 2W grid
    Y_P = _row_of_flat(P_row, W2, H2)
    X_P = P_row - Y_P * W2

    acc2 = jnp.zeros((Cmid, HW2), f32)
    for ky in range(3):
        for kx in range(3):
            dy, dx = ky - 1, kx - 1
            yy = Y_P + dy
            xx = X_P + dx
            valid = (yy >= 0) & (yy < H2) & (xx >= 0) & (xx < W2)                 # (1, HW2)
            # y_pc == yy // 2  <=>  2*y_pc <= yy <= 2*y_pc + 1   (same for x); division-free.
            match = ((yy >= 2 * y_pc) & (yy <= 2 * y_pc + 1) &
                     (xx >= 2 * x_pc) & (xx <= 2 * x_pc + 1))                     # (HW, HW2)
            sel2 = jnp.where(match & valid, 1.0, 0.0)                             # (HW, HW2)
            shifted = jnp.dot(c1, sel2, preferred_element_type=f32)               # (Cmid, HW2)
            acc2 = acc2 + shifted * w2[:, ky * 3 + kx:ky * 3 + kx + 1]
    c2 = jnp.sum(acc2, axis=0, keepdims=True) + b2                                 # (1, HW2)
    c2 = jnp.maximum(c2, 0.0)

    # -------- final nearest x2 upsample + flat -> (4H, 4W) layout, fused as (A * c2) @ B --------
    #   out[YY, XX] = c2[(YY//2)*W2 + XX//2]
    #   A[YY, P] = (P // W2 == YY // 2),  B[P, XX] = (P % W2 == XX // 2)
    YY_col = jax.lax.broadcasted_iota(jnp.int32, (H4, 1), 0)
    A = jnp.where((YY_col >= 2 * Y_P) & (YY_col <= 2 * Y_P + 1), 1.0, 0.0)         # (H4, HW2)
    Pb_col = jax.lax.broadcasted_iota(jnp.int32, (HW2, 1), 0)
    Yb = _row_of_flat(Pb_col, W2, H2)
    Xb = Pb_col - Yb * W2
    XX_row = jax.lax.broadcasted_iota(jnp.int32, (1, W4), 1)
    B = jnp.where((XX_row >= 2 * Xb) & (XX_row <= 2 * Xb + 1), 1.0, 0.0)           # (HW2, W4)
    o_ref[...] = jnp.dot(A * c2, B, preferred_element_type=f32)[None]              # (1, 4H, 4W)


def decoder_forward(x_nchw, params):
    """Matches Decoder.forward: input (N, 32, H, W) NCHW, output (N, 1, 4H, 4W)."""
    N, Cin, H, W = x_nchw.shape
    Cmid = params["w1"].shape[0]
    H4, W4 = 4 * H, 4 * W

    # Whole-image-per-step design: selection matrices / intermediates are O((H*W)^2) in VMEM.
    # Fine for small decoder heads on all generations (incl. v7x's 64 MiB VMEM); larger feature
    # maps would need row tiling with a halo instead.
    assert H * W <= 256, "fused decoder kernel expects small spatial dims (tile rows for larger maps)"

    # Contiguous reshapes / tiny weight repacks only (no activation transposes, no jnp.pad).
    x_flat = x_nchw.reshape(N, Cin, H * W)
    w1_mat = jnp.transpose(params["w1"], (0, 2, 3, 1)).reshape(Cmid, 9 * Cin)   # [co, tap*Cin+ci]
    b1_col = params["b1"].reshape(Cmid, 1)
    w2_mat = params["w2"][0].reshape(Cmid, 9)                                   # [ci, tap]
    b2_mat = params["b2"].reshape(1, 1)

    grid_spec = pltpu.PrefetchScalarGridSpec(
        num_scalar_prefetch=0,
        grid=(N,),
        in_specs=[
            pl.BlockSpec((1, Cin, H * W), lambda n: (n, 0, 0)),
            pl.BlockSpec((Cmid, 9 * Cin), lambda n: (0, 0)),
            pl.BlockSpec((Cmid, 1), lambda n: (0, 0)),
            pl.BlockSpec((Cmid, 9), lambda n: (0, 0)),
            pl.BlockSpec((1, 1), lambda n: (0, 0)),
        ],
        out_specs=pl.BlockSpec((1, H4, W4), lambda n: (n, 0, 0)),
    )

    out = pl.pallas_call(
        functools.partial(_decoder_kernel, H=H, W=W),
        out_shape=jax.ShapeDtypeStruct((N, H4, W4), jnp.float32),
        grid_spec=grid_spec,
        compiler_params=pltpu.CompilerParams(
            # Batch elements are independent: lets v7x spread the grid over its 2 TensorCores;
            # harmless on single-TC v5e/v6e.
            dimension_semantics=("parallel",),
        ),
    )(x_flat, w1_mat, b1_col, w2_mat, b2_mat)

    # (N, 4H, 4W) -> (N, 1, 4H, 4W): contiguous reshape, no data movement.
    return out.reshape(N, 1, H4, W4)


def _reference_forward(x_nchw, params):
    """Pure-JAX (lax conv) reference matching the PyTorch module."""
    def conv(x, w, b):
        y = jax.lax.conv_general_dilated(
            x, w, window_strides=(1, 1), padding=((1, 1), (1, 1)),
            dimension_numbers=("NCHW", "OIHW", "NCHW"))
        return jnp.maximum(y + b.reshape(1, -1, 1, 1), 0.0)

    def up2(x):
        return jnp.repeat(jnp.repeat(x, 2, axis=2), 2, axis=3)

    out = up2(conv(x_nchw, params["w1"], params["b1"]))
    out = up2(conv(out, params["w2"], params["b2"]))
    return out


def init_params(key):
    # PyTorch-convention (OIHW) weights for Conv2d(32,16,3,pad=1) and Conv2d(16,1,3,pad=1).
    k1, k2, k3, k4 = jax.random.split(key, 4)
    return {
        "w1": jax.random.normal(k1, (16, 32, 3, 3), jnp.float32) * 0.1,
        "b1": jax.random.normal(k2, (16,), jnp.float32) * 0.1,
        "w2": jax.random.normal(k3, (1, 16, 3, 3), jnp.float32) * 0.1,
        "b2": jax.random.normal(k4, (1,), jnp.float32) * 0.1,
    }


if __name__ == "__main__":
    key = jax.random.PRNGKey(0)
    kx, kp = jax.random.split(key)

    # Small shapes: batch=2, in-channels fixed at 32 by the module, spatial=8x8.
    x = jax.random.normal(kx, (2, 32, 8, 8), jnp.float32)
    params = init_params(kp)

    out = jax.block_until_ready(jax.jit(decoder_forward)(x, params))
    assert out.shape == (2, 1, 32, 32), out.shape

    ref = jax.block_until_ready(_reference_forward(x, params))
    assert jnp.allclose(out, ref, atol=1e-4, rtol=1e-4), float(jnp.max(jnp.abs(out - ref)))

    print("KERNEL_OK")
</pallas_src>

<mosaic_0001>
module attributes {stable_mosaic.version = 11 : i64} {
  func.func @_decoder_kernel(%arg0: i32, %arg1: memref<1x32x64xf32, #tpu.memory_space<vmem>>, %arg2: memref<16x288xf32, #tpu.memory_space<vmem>>, %arg3: memref<16x1xf32, #tpu.memory_space<vmem>>, %arg4: memref<16x9xf32, #tpu.memory_space<vmem>>, %arg5: memref<1x1xf32, #tpu.memory_space<vmem>>, %arg6: memref<1x32x32xf32, #tpu.memory_space<vmem>>) attributes {dimension_semantics = [#tpu.dimension_semantics<parallel>], iteration_bounds = array<i64: 2>, scalar_prefetch = 0 : i64, scratch_operands = 0 : i64, tpu.core_type = #tpu.core_type<tc>, window_params = [{transform_indices = @transform_0, window_bounds = array<i64: 1, 32, 64>}, {pipeline_mode = #tpu.pipeline_mode<synchronous>, transform_indices = @transform_1, window_bounds = array<i64: 16, 288>}, {pipeline_mode = #tpu.pipeline_mode<synchronous>, transform_indices = @transform_2, window_bounds = array<i64: 16, 1>}, {pipeline_mode = #tpu.pipeline_mode<synchronous>, transform_indices = @transform_3, window_bounds = array<i64: 16, 9>}, {pipeline_mode = #tpu.pipeline_mode<synchronous>, transform_indices = @transform_4, window_bounds = array<i64: 1, 1>}, {transform_indices = @transform_5, window_bounds = array<i64: 1, 32, 32>}]} {
    %c0 = arith.constant 0 : index
    %c0_0 = arith.constant 0 : index
    %c0_1 = arith.constant 0 : index
    %0 = vector.load %arg1[%c0, %c0_0, %c0_1] : memref<1x32x64xf32, #tpu.memory_space<vmem>>, vector<1x32x64xf32>
    %1 = vector.shape_cast %0 : vector<1x32x64xf32> to vector<32x64xf32>
    %c0_2 = arith.constant 0 : index
    %c0_3 = arith.constant 0 : index
    %2 = vector.load %arg2[%c0_2, %c0_3] : memref<16x288xf32, #tpu.memory_space<vmem>>, vector<16x288xf32>
    %c0_4 = arith.constant 0 : index
    %c0_5 = arith.constant 0 : index
    %3 = vector.load %arg3[%c0_4, %c0_5] : memref<16x1xf32, #tpu.memory_space<vmem>>, vector<16x1xf32>
    %c0_6 = arith.constant 0 : index
    %c0_7 = arith.constant 0 : index
    %4 = vector.load %arg4[%c0_6, %c0_7] : memref<16x9xf32, #tpu.memory_space<vmem>>, vector<16x9xf32>
    %c0_8 = arith.constant 0 : index
    %c0_9 = arith.constant 0 : index
    %5 = vector.load %arg5[%c0_8, %c0_9] : memref<1x1xf32, #tpu.memory_space<vmem>>, vector<1x1xf32>
    %6 = tpu.iota {dimensions = array<i32: 0>} : vector<64x1xi32>
    %7 = tpu.iota {dimensions = array<i32: 1>} : vector<1x64xi32>
    %c0_i32 = arith.constant 0 : i32
    %8 = vector.broadcast %c0_i32 : i32 to vector<1x64xi32>
    %c8_i32 = arith.constant 8 : i32
    %9 = vector.broadcast %c8_i32 : i32 to vector<1x64xi32>
    %10 = arith.cmpi sge, %7, %9 : vector<1x64xi32>
    %c1_i32 = arith.constant 1 : i32
    %c0_i32_10 = arith.constant 0 : i32
    %11 = vector.broadcast %c1_i32 : i32 to vector<1x64xi32>
    %12 = vector.broadcast %c0_i32_10 : i32 to vector<1x64xi32>
    %13 = arith.select %10, %11, %12 : vector<1x64xi1>, vector<1x64xi32>
    %14 = arith.addi %8, %13 : vector<1x64xi32>
    %c16_i32 = arith.constant 16 : i32
    %15 = vector.broadcast %c16_i32 : i32 to vector<1x64xi32>
    %16 = arith.cmpi sge, %7, %15 : vector<1x64xi32>
    %c1_i32_11 = arith.constant 1 : i32
    %c0_i32_12 = arith.constant 0 : i32
    %17 = vector.broadcast %c1_i32_11 : i32 to vector<1x64xi32>
    %18 = vector.broadcast %c0_i32_12 : i32 to vector<1x64xi32>
    %19 = arith.select %16, %17, %18 : vector<1x64xi1>, vector<1x64xi32>
    %20 = arith.addi %14, %19 : vector<1x64xi32>
    %c24_i32 = arith.constant 24 : i32
    %21 = vector.broadcast %c24_i32 : i32 to vector<1x64xi32>
    %22 = arith.cmpi sge, %7, %21 : vector<1x64xi32>
    %c1_i32_13 = arith.constant 1 : i32
    %c0_i32_14 = arith.constant 0 : i32
    %23 = vector.broadcast %c1_i32_13 : i32 to vector<1x64xi32>
    %24 = vector.broadcast %c0_i32_14 : i32 to vector<1x64xi32>
    %25 = arith.select %22, %23, %24 : vector<1x64xi1>, vector<1x64xi32>
    %26 = arith.addi %20, %25 : vector<1x64xi32>
    %c32_i32 = arith.constant 32 : i32
    %27 = vector.broadcast %c32_i32 : i32 to vector<1x64xi32>
    %28 = arith.cmpi sge, %7, %27 : vector<1x64xi32>
    %c1_i32_15 = arith.constant 1 : i32
    %c0_i32_16 = arith.constant 0 : i32
    %29 = vector.broadcast %c1_i32_15 : i32 to vector<1x64xi32>
    %30 = vector.broadcast %c0_i32_16 : i32 to vector<1x64xi32>
    %31 = arith.select %28, %29, %30 : vector<1x64xi1>, vector<1x64xi32>
    %32 = arith.addi %26, %31 : vector<1x64xi32>
    %c40_i32 = arith.constant 40 : i32
    %33 = vector.broadcast %c40_i32 : i32 to vector<1x64xi32>
    %34 = arith.cmpi sge, %7, %33 : vector<1x64xi32>
    %c1_i32_17 = arith.constant 1 : i32
    %c0_i32_18 = arith.constant 0 : i32
    %35 = vector.broadcast %c1_i32_17 : i32 to vector<1x64xi32>
    %36 = vector.broadcast %c0_i32_18 : i32 to vector<1x64xi32>
    %37 = arith.select %34, %35, %36 : vector<1x64xi1>, vector<1x64xi32>
    %38 = arith.addi %32, %37 : vector<1x64xi32>
    %c48_i32 = arith.constant 48 : i32
    %39 = vector.broadcast %c48_i32 : i32 to vector<1x64xi32>
    %40 = arith.cmpi sge, %7, %39 : vector<1x64xi32>
    %c1_i32_19 = arith.constant 1 : i32
    %c0_i32_20 = arith.constant 0 : i32
    %41 = vector.broadcast %c1_i32_19 : i32 to vector<1x64xi32>
    %42 = vector.broadcast %c0_i32_20 : i32 to vector<1x64xi32>
    %43 = arith.select %40, %41, %42 : vector<1x64xi1>, vector<1x64xi32>
    %44 = arith.addi %38, %43 : vector<1x64xi32>
    %c56_i32 = arith.constant 56 : i32
    %45 = vector.broadcast %c56_i32 : i32 to vector<1x64xi32>
    %46 = arith.cmpi sge, %7, %45 : vector<1x64xi32>
    %c1_i32_21 = arith.constant 1 : i32
    %c0_i32_22 = arith.constant 0 : i32
    %47 = vector.broadcast %c1_i32_21 : i32 to vector<1x64xi32>
    %48 = vector.broadcast %c0_i32_22 : i32 to vector<1x64xi32>
    %49 = arith.select %46, %47, %48 : vector<1x64xi1>, vector<1x64xi32>
    %50 = arith.addi %44, %49 : vector<1x64xi32>
    %c8_i32_23 = arith.constant 8 : i32
    %51 = vector.broadcast %c8_i32_23 : i32 to vector<1x64xi32>
    %52 = arith.muli %50, %51 : vector<1x64xi32>
    %53 = arith.subi %7, %52 : vector<1x64xi32>
    %c-1_i32 = arith.constant -1 : i32
    %54 = vector.broadcast %c-1_i32 : i32 to vector<1x64xi32>
    %55 = arith.addi %50, %54 : vector<1x64xi32>
    %c0_i32_24 = arith.constant 0 : i32
    %56 = vector.broadcast %c0_i32_24 : i32 to vector<1x64xi32>
    %57 = arith.cmpi sge, %55, %56 : vector<1x64xi32>
    %c-1_i32_25 = arith.constant -1 : i32
    %58 = vector.broadcast %c-1_i32_25 : i32 to vector<1x64xi32>
    %59 = arith.addi %50, %58 : vector<1x64xi32>
    %c8_i32_26 = arith.constant 8 : i32
    %60 = vector.broadcast %c8_i32_26 : i32 to vector<1x64xi32>
    %61 = arith.cmpi slt, %59, %60 : vector<1x64xi32>
    %62 = arith.andi %57, %61 : vector<1x64xi1>
    %c-1_i32_27 = arith.constant -1 : i32
    %63 = vector.broadcast %c-1_i32_27 : i32 to vector<1x64xi32>
    %64 = arith.addi %53, %63 : vector<1x64xi32>
    %c0_i32_28 = arith.constant 0 : i32
    %65 = vector.broadcast %c0_i32_28 : i32 to vector<1x64xi32>
    %66 = arith.cmpi sge, %64, %65 : vector<1x64xi32>
    %67 = arith.andi %62, %66 : vector<1x64xi1>
    %c-1_i32_29 = arith.constant -1 : i32
    %68 = vector.broadcast %c-1_i32_29 : i32 to vector<1x64xi32>
    %69 = arith.addi %53, %68 : vector<1x64xi32>
    %c8_i32_30 = arith.constant 8 : i32
    %70 = vector.broadcast %c8_i32_30 : i32 to vector<1x64xi32>
    %71 = arith.cmpi slt, %69, %70 : vector<1x64xi32>
    %72 = arith.andi %67, %71 : vector<1x64xi1>
    %c-9_i32 = arith.constant -9 : i32
    %73 = vector.broadcast %c-9_i32 : i32 to vector<1x64xi32>
    %74 = arith.addi %7, %73 : vector<1x64xi32>
    %75 = vector.broadcast %6 : vector<64x1xi32> to vector<64x64xi32>
    %76 = vector.broadcast %74 : vector<1x64xi32> to vector<64x64xi32>
    %77 = arith.cmpi eq, %75, %76 : vector<64x64xi32>
    %78 = vector.broadcast %72 : vector<1x64xi1> to vector<64x64xi1>
    %79 = arith.andi %77, %78 : vector<64x64xi1>
    %cst = arith.constant 1.000000e+00 : f32
    %cst_31 = arith.constant 0.000000e+00 : f32
    %80 = vector.broadcast %cst : f32 to vector<64x64xf32>
    %81 = vector.broadcast %cst_31 : f32 to vector<64x64xf32>
    %82 = arith.select %79, %80, %81 : vector<64x64xi1>, vector<64x64xf32>
    %cst_32 = arith.constant dense<0.000000e+00> : vector<32x64xf32>
    %83 = tpu.matmul %1, %82, %cst_32 {dimension_numbers = #tpu.dot_dimension_numbers<[1], [0], [0], [1], [0, 0, 1, 1], [], []>} : vector<32x64xf32>, vector<64x64xf32>, vector<32x64xf32> -> vector<32x64xf32>
    %c-1_i32_33 = arith.constant -1 : i32
    %84 = vector.broadcast %c-1_i32_33 : i32 to vector<1x64xi32>
    %85 = arith.addi %50, %84 : vector<1x64xi32>
    %c0_i32_34 = arith.constant 0 : i32
    %86 = vector.broadcast %c0_i32_34 : i32 to vector<1x64xi32>
    %87 = arith.cmpi sge, %85, %86 : vector<1x64xi32>
    %c-1_i32_35 = arith.constant -1 : i32
    %88 = vector.broadcast %c-1_i32_35 : i32 to vector<1x64xi32>
    %89 = arith.addi %50, %88 : vector<1x64xi32>
    %c8_i32_36 = arith.constant 8 : i32
    %90 = vector.broadcast %c8_i32_36 : i32 to vector<1x64xi32>
    %91 = arith.cmpi slt, %89, %90 : vector<1x64xi32>
    %92 = arith.andi %87, %91 : vector<1x64xi1>
    %c0_i32_37 = arith.constant 0 : i32
    %93 = vector.broadcast %c0_i32_37 : i32 to vector<1x64xi32>
    %94 = arith.addi %53, %93 : vector<1x64xi32>
    %c0_i32_38 = arith.constant 0 : i32
    %95 = vector.broadcast %c0_i32_38 : i32 to vector<1x64xi32>
    %96 = arith.cmpi sge, %94, %95 : vector<1x64xi32>
    %97 = arith.andi %92, %96 : vector<1x64xi1>
    %c0_i32_39 = arith.constant 0 : i32
    %98 = vector.broadcast %c0_i32_39 : i32 to vector<1x64xi32>
    %99 = arith.addi %53, %98 : vector<1x64xi32>
    %c8_i32_40 = arith.constant 8 : i32
    %100 = vector.broadcast %c8_i32_40 : i32 to vector<1x64xi32>
    %101 = arith.cmpi slt, %99, %100 : vector<1x64xi32>
    %102 = arith.andi %97, %101 : vector<1x64xi1>
    %c-8_i32 = arith.constant -8 : i32
    %103 = vector.broadcast %c-8_i32 : i32 to vector<1x64xi32>
    %104 = arith.addi %7, %103 : vector<1x64xi32>
    %105 = vector.broadcast %6 : vector<64x1xi32> to vector<64x64xi32>
    %106 = vector.broadcast %104 : vector<1x64xi32> to vector<64x64xi32>
    %107 = arith.cmpi eq, %105, %106 : vector<64x64xi32>
    %108 = vector.broadcast %102 : vector<1x64xi1> to vector<64x64xi1>
    %109 = arith.andi %107, %108 : vector<64x64xi1>
    %cst_41 = arith.constant 1.000000e+00 : f32
    %cst_42 = arith.constant 0.000000e+00 : f32
    %110 = vector.broadcast %cst_41 : f32 to vector<64x64xf32>
    %111 = vector.broadcast %cst_42 : f32 to vector<64x64xf32>
    %112 = arith.select %109, %110, %111 : vector<64x64xi1>, vector<64x64xf32>
    %cst_43 = arith.constant dense<0.000000e+00> : vector<32x64xf32>
    %113 = tpu.matmul %1, %112, %cst_43 {dimension_numbers = #tpu.dot_dimension_numbers<[1], [0], [0], [1], [0, 0, 1, 1], [], []>} : vector<32x64xf32>, vector<64x64xf32>, vector<32x64xf32> -> vector<32x64xf32>
    %c-1_i32_44 = arith.constant -1 : i32
    %114 = vector.broadcast %c-1_i32_44 : i32 to vector<1x64xi32>
    %115 = arith.addi %50, %114 : vector<1x64xi32>
    %c0_i32_45 = arith.constant 0 : i32
    %116 = vector.broadcast %c0_i32_45 : i32 to vector<1x64xi32>
    %117 = arith.cmpi sge, %115, %116 : vector<1x64xi32>
    %c-1_i32_46 = arith.constant -1 : i32
    %118 = vector.broadcast %c-1_i32_46 : i32 to vector<1x64xi32>
    %119 = arith.addi %50, %118 : vector<1x64xi32>
    %c8_i32_47 = arith.constant 8 : i32
    %120 = vector.broadcast %c8_i32_47 : i32 to vector<1x64xi32>
    %121 = arith.cmpi slt, %119, %120 : vector<1x64xi32>
    %122 = arith.andi %117, %121 : vector<1x64xi1>
    %c1_i32_48 = arith.constant 1 : i32
    %123 = vector.broadcast %c1_i32_48 : i32 to vector<1x64xi32>
    %124 = arith.addi %53, %123 : vector<1x64xi32>
    %c0_i32_49 = arith.constant 0 : i32
    %125 = vector.broadcast %c0_i32_49 : i32 to vector<1x64xi32>
    %126 = arith.cmpi sge, %124, %125 : vector<1x64xi32>
    %127 = arith.andi %122, %126 : vector<1x64xi1>
    %c1_i32_50 = arith.constant 1 : i32
    %128 = vector.broadcast %c1_i32_50 : i32 to vector<1x64xi32>
    %129 = arith.addi %53, %128 : vector<1x64xi32>
    %c8_i32_51 = arith.constant 8 : i32
    %130 = vector.broadcast %c8_i32_51 : i32 to vector<1x64xi32>
    %131 = arith.cmpi slt, %129, %130 : vector<1x64xi32>
    %132 = arith.andi %127, %131 : vector<1x64xi1>
    %c-7_i32 = arith.constant -7 : i32
    %133 = vector.broadcast %c-7_i32 : i32 to vector<1x64xi32>
    %134 = arith.addi %7, %133 : vector<1x64xi32>
    %135 = vector.broadcast %6 : vector<64x1xi32> to vector<64x64xi32>
    %136 = vector.broadcast %134 : vector<1x64xi32> to vector<64x64xi32>
    %137 = arith.cmpi eq, %135, %136 : vector<64x64xi32>
    %138 = vector.broadcast %132 : vector<1x64xi1> to vector<64x64xi1>
    %139 = arith.andi %137, %138 : vector<64x64xi1>
    %cst_52 = arith.constant 1.000000e+00 : f32
    %cst_53 = arith.constant 0.000000e+00 : f32
    %140 = vector.broadcast %cst_52 : f32 to vector<64x64xf32>
    %141 = vector.broadcast %cst_53 : f32 to vector<64x64xf32>
    %142 = arith.select %139, %140, %141 : vector<64x64xi1>, vector<64x64xf32>
    %cst_54 = arith.constant dense<0.000000e+00> : vector<32x64xf32>
    %143 = tpu.matmul %1, %142, %cst_54 {dimension_numbers = #tpu.dot_dimension_numbers<[1], [0], [0], [1], [0, 0, 1, 1], [], []>} : vector<32x64xf32>, vector<64x64xf32>, vector<32x64xf32> -> vector<32x64xf32>
    %c0_i32_55 = arith.constant 0 : i32
    %144 = vector.broadcast %c0_i32_55 : i32 to vector<1x64xi32>
    %145 = arith.addi %50, %144 : vector<1x64xi32>
    %c0_i32_56 = arith.constant 0 : i32
    %146 = vector.broadcast %c0_i32_56 : i32 to vector<1x64xi32>
    %147 = arith.cmpi sge, %145, %146 : vector<1x64xi32>
    %c0_i32_57 = arith.constant 0 : i32
    %148 = vector.broadcast %c0_i32_57 : i32 to vector<1x64xi32>
    %149 = arith.addi %50, %148 : vector<1x64xi32>
    %c8_i32_58 = arith.constant 8 : i32
    %150 = vector.broadcast %c8_i32_58 : i32 to vector<1x64xi32>
    %151 = arith.cmpi slt, %149, %150 : vector<1x64xi32>
    %152 = arith.andi %147, %151 : vector<1x64xi1>
    %c-1_i32_59 = arith.constant -1 : i32
    %153 = vector.broadcast %c-1_i32_59 : i32 to vector<1x64xi32>
    %154 = arith.addi %53, %153 : vector<1x64xi32>
    %c0_i32_60 = arith.constant 0 : i32
    %155 = vector.broadcast %c0_i32_60 : i32 to vector<1x64xi32>
    %156 = arith.cmpi sge, %154, %155 : vector<1x64xi32>
    %157 = arith.andi %152, %156 : vector<1x64xi1>
    %c-1_i32_61 = arith.constant -1 : i32
    %158 = vector.broadcast %c-1_i32_61 : i32 to vector<1x64xi32>
    %159 = arith.addi %53, %158 : vector<1x64xi32>
    %c8_i32_62 = arith.constant 8 : i32
    %160 = vector.broadcast %c8_i32_62 : i32 to vector<1x64xi32>
    %161 = arith.cmpi slt, %159, %160 : vector<1x64xi32>
    %162 = arith.andi %157, %161 : vector<1x64xi1>
    %c-1_i32_63 = arith.constant -1 : i32
    %163 = vector.broadcast %c-1_i32_63 : i32 to vector<1x64xi32>
    %164 = arith.addi %7, %163 : vector<1x64xi32>
    %165 = vector.broadcast %6 : vector<64x1xi32> to vector<64x64xi32>
    %166 = vector.broadcast %164 : vector<1x64xi32> to vector<64x64xi32>
    %167 = arith.cmpi eq, %165, %166 : vector<64x64xi32>
    %168 = vector.broadcast %162 : vector<1x64xi1> to vector<64x64xi1>
    %169 = arith.andi %167, %168 : vector<64x64xi1>
    %cst_64 = arith.constant 1.000000e+00 : f32
    %cst_65 = arith.constant 0.000000e+00 : f32
    %170 = vector.broadcast %cst_64 : f32 to vector<64x64xf32>
    %171 = vector.broadcast %cst_65 : f32 to vector<64x64xf32>
    %172 = arith.select %169, %170, %171 : vector<64x64xi1>, vector<64x64xf32>
    %cst_66 = arith.constant dense<0.000000e+00> : vector<32x64xf32>
    %173 = tpu.matmul %1, %172, %cst_66 {dimension_numbers = #tpu.dot_dimension_numbers<[1], [0], [0], [1], [0, 0, 1, 1], [], []>} : vector<32x64xf32>, vector<64x64xf32>, vector<32x64xf32> -> vector<32x64xf32>
    %c0_i32_67 = arith.constant 0 : i32
    %174 = vector.broadcast %c0_i32_67 : i32 to vector<1x64xi32>
    %175 = arith.addi %50, %174 : vector<1x64xi32>
    %c0_i32_68 = arith.constant 0 : i32
    %176 = vector.broadcast %c0_i32_68 : i32 to vector<1x64xi32>
    %177 = arith.cmpi sge, %175, %176 : vector<1x64xi32>
    %c0_i32_69 = arith.constant 0 : i32
    %178 = vector.broadcast %c0_i32_69 : i32 to vector<1x64xi32>
    %179 = arith.addi %50, %178 : vector<1x64xi32>
    %c8_i32_70 = arith.constant 8 : i32
    %180 = vector.broadcast %c8_i32_70 : i32 to vector<1x64xi32>
    %181 = arith.cmpi slt, %179, %180 : vector<1x64xi32>
    %182 = arith.andi %177, %181 : vector<1x64xi1>
    %c0_i32_71 = arith.constant 0 : i32
    %183 = vector.broadcast %c0_i32_71 : i32 to vector<1x64xi32>
    %184 = arith.addi %53, %183 : vector<1x64xi32>
    %c0_i32_72 = arith.constant 0 : i32
    %185 = vector.broadcast %c0_i32_72 : i32 to vector<1x64xi32>
    %186 = arith.cmpi sge, %184, %185 : vector<1x64xi32>
    %187 = arith.andi %182, %186 : vector<1x64xi1>
    %c0_i32_73 = arith.constant 0 : i32
    %188 = vector.broadcast %c0_i32_73 : i32 to vector<1x64xi32>
    %189 = arith.addi %53, %188 : vector<1x64xi32>
    %c8_i32_74 = arith.constant 8 : i32
    %190 = vector.broadcast %c8_i32_74 : i32 to vector<1x64xi32>
    %191 = arith.cmpi slt, %189, %190 : vector<1x64xi32>
    %192 = arith.andi %187, %191 : vector<1x64xi1>
    %c0_i32_75 = arith.constant 0 : i32
    %193 = vector.broadcast %c0_i32_75 : i32 to vector<1x64xi32>
    %194 = arith.addi %7, %193 : vector<1x64xi32>
    %195 = vector.broadcast %6 : vector<64x1xi32> to vector<64x64xi32>
    %196 = vector.broadcast %194 : vector<1x64xi32> to vector<64x64xi32>
    %197 = arith.cmpi eq, %195, %196 : vector<64x64xi32>
    %198 = vector.broadcast %192 : vector<1x64xi1> to vector<64x64xi1>
    %199 = arith.andi %197, %198 : vector<64x64xi1>
    %cst_76 = arith.constant 1.000000e+00 : f32
    %cst_77 = arith.constant 0.000000e+00 : f32
    %200 = vector.broadcast %cst_76 : f32 to vector<64x64xf32>
    %201 = vector.broadcast %cst_77 : f32 to vector<64x64xf32>
    %202 = arith.select %199, %200, %201 : vector<64x64xi1>, vector<64x64xf32>
    %cst_78 = arith.constant dense<0.000000e+00> : vector<32x64xf32>
    %203 = tpu.matmul %1, %202, %cst_78 {dimension_numbers = #tpu.dot_dimension_numbers<[1], [0], [0], [1], [0, 0, 1, 1], [], []>} : vector<32x64xf32>, vector<64x64xf32>, vector<32x64xf32> -> vector<32x64xf32>
    %c0_i32_79 = arith.constant 0 : i32
    %204 = vector.broadcast %c0_i32_79 : i32 to vector<1x64xi32>
    %205 = arith.addi %50, %204 : vector<1x64xi32>
    %c0_i32_80 = arith.constant 0 : i32
    %206 = vector.broadcast %c0_i32_80 : i32 to vector<1x64xi32>
    %207 = arith.cmpi sge, %205, %206 : vector<1x64xi32>
    %c0_i32_81 = arith.constant 0 : i32
    %208 = vector.broadcast %c0_i32_81 : i32 to vector<1x64xi32>
    %209 = arith.addi %50, %208 : vector<1x64xi32>
    %c8_i32_82 = arith.constant 8 : i32
    %210 = vector.broadcast %c8_i32_82 : i32 to vector<1x64xi32>
    %211 = arith.cmpi slt, %209, %210 : vector<1x64xi32>
    %212 = arith.andi %207, %211 : vector<1x64xi1>
    %c1_i32_83 = arith.constant 1 : i32
    %213 = vector.broadcast %c1_i32_83 : i32 to vector<1x64xi32>
    %214 = arith.addi %53, %213 : vector<1x64xi32>
    %c0_i32_84 = arith.constant 0 : i32
    %215 = vector.broadcast %c0_i32_84 : i32 to vector<1x64xi32>
    %216 = arith.cmpi sge, %214, %215 : vector<1x64xi32>
    %217 = arith.andi %212, %216 : vector<1x64xi1>
    %c1_i32_85 = arith.constant 1 : i32
    %218 = vector.broadcast %c1_i32_85 : i32 to vector<1x64xi32>
    %219 = arith.addi %53, %218 : vector<1x64xi32>
    %c8_i32_86 = arith.constant 8 : i32
    %220 = vector.broadcast %c8_i32_86 : i32 to vector<1x64xi32>
    %221 = arith.cmpi slt, %219, %220 : vector<1x64xi32>
    %222 = arith.andi %217, %221 : vector<1x64xi1>
    %c1_i32_87 = arith.constant 1 : i32
    %223 = vector.broadcast %c1_i32_87 : i32 to vector<1x64xi32>
    %224 = arith.addi %7, %223 : vector<1x64xi32>
    %225 = vector.broadcast %6 : vector<64x1xi32> to vector<64x64xi32>
    %226 = vector.broadcast %224 : vector<1x64xi32> to vector<64x64xi32>
    %227 = arith.cmpi eq, %225, %226 : vector<64x64xi32>
    %228 = vector.broadcast %222 : vector<1x64xi1> to vector<64x64xi1>
    %229 = arith.andi %227, %228 : vector<64x64xi1>
    %cst_88 = arith.constant 1.000000e+00 : f32
    %cst_89 = arith.constant 0.000000e+00 : f32
    %230 = vector.broadcast %cst_88 : f32 to vector<64x64xf32>
    %231 = vector.broadcast %cst_89 : f32 to vector<64x64xf32>
    %232 = arith.select %229, %230, %231 : vector<64x64xi1>, vector<64x64xf32>
    %cst_90 = arith.constant dense<0.000000e+00> : vector<32x64xf32>
    %233 = tpu.matmul %1, %232, %cst_90 {dimension_numbers = #tpu.dot_dimension_numbers<[1], [0], [0], [1], [0, 0, 1, 1], [], []>} : vector<32x64xf32>, vector<64x64xf32>, vector<32x64xf32> -> vector<32x64xf32>
    %c1_i32_91 = arith.constant 1 : i32
    %234 = vector.broadcast %c1_i32_91 : i32 to vector<1x64xi32>
    %235 = arith.addi %50, %234 : vector<1x64xi32>
    %c0_i32_92 = arith.constant 0 : i32
    %236 = vector.broadcast %c0_i32_92 : i32 to vector<1x64xi32>
    %237 = arith.cmpi sge, %235, %236 : vector<1x64xi32>
    %c1_i32_93 = arith.constant 1 : i32
    %238 = vector.broadcast %c1_i32_93 : i32 to vector<1x64xi32>
    %239 = arith.addi %50, %238 : vector<1x64xi32>
    %c8_i32_94 = arith.constant 8 : i32
    %240 = vector.broadcast %c8_i32_94 : i32 to vector<1x64xi32>
    %241 = arith.cmpi slt, %239, %240 : vector<1x64xi32>
    %242 = arith.andi %237, %241 : vector<1x64xi1>
    %c-1_i32_95 = arith.constant -1 : i32
    %243 = vector.broadcast %c-1_i32_95 : i32 to vector<1x64xi32>
    %244 = arith.addi %53, %243 : vector<1x64xi32>
    %c0_i32_96 = arith.constant 0 : i32
    %245 = vector.broadcast %c0_i32_96 : i32 to vector<1x64xi32>
    %246 = arith.cmpi sge, %244, %245 : vector<1x64xi32>
    %247 = arith.andi %242, %246 : vector<1x64xi1>
    %c-1_i32_97 = arith.constant -1 : i32
    %248 = vector.broadcast %c-1_i32_97 : i32 to vector<1x64xi32>
    %249 = arith.addi %53, %248 : vector<1x64xi32>
    %c8_i32_98 = arith.constant 8 : i32
    %250 = vector.broadcast %c8_i32_98 : i32 to vector<1x64xi32>
    %251 = arith.cmpi slt, %249, %250 : vector<1x64xi32>
    %252 = arith.andi %247, %251 : vector<1x64xi1>
    %c7_i32 = arith.constant 7 : i32
    %253 = vector.broadcast %c7_i32 : i32 to vector<1x64xi32>
    %254 = arith.addi %7, %253 : vector<1x64xi32>
    %255 = vector.broadcast %6 : vector<64x1xi32> to vector<64x64xi32>
    %256 = vector.broadcast %254 : vector<1x64xi32> to vector<64x64xi32>
    %257 = arith.cmpi eq, %255, %256 : vector<64x64xi32>
    %258 = vector.broadcast %252 : vector<1x64xi1> to vector<64x64xi1>
    %259 = arith.andi %257, %258 : vector<64x64xi1>
    %cst_99 = arith.constant 1.000000e+00 : f32
    %cst_100 = arith.constant 0.000000e+00 : f32
    %260 = vector.broadcast %cst_99 : f32 to vector<64x64xf32>
    %261 = vector.broadcast %cst_100 : f32 to vector<64x64xf32>
    %262 = arith.select %259, %260, %261 : vector<64x64xi1>, vector<64x64xf32>
    %cst_101 = arith.constant dense<0.000000e+00> : vector<32x64xf32>
    %263 = tpu.matmul %1, %262, %cst_101 {dimension_numbers = #tpu.dot_dimension_numbers<[1], [0], [0], [1], [0, 0, 1, 1], [], []>} : vector<32x64xf32>, vector<64x64xf32>, vector<32x64xf32> -> vector<32x64xf32>
    %c1_i32_102 = arith.constant 1 : i32
    %264 = vector.broadcast %c1_i32_102 : i32 to vector<1x64xi32>
    %265 = arith.addi %50, %264 : vector<1x64xi32>
    %c0_i32_103 = arith.constant 0 : i32
    %266 = vector.broadcast %c0_i32_103 : i32 to vector<1x64xi32>
    %267 = arith.cmpi sge, %265, %266 : vector<1x64xi32>
    %c1_i32_104 = arith.constant 1 : i32
    %268 = vector.broadcast %c1_i32_104 : i32 to vector<1x64xi32>
    %269 = arith.addi %50, %268 : vector<1x64xi32>
    %c8_i32_105 = arith.constant 8 : i32
    %270 = vector.broadcast %c8_i32_105 : i32 to vector<1x64xi32>
    %271 = arith.cmpi slt, %269, %270 : vector<1x64xi32>
    %272 = arith.andi %267, %271 : vector<1x64xi1>
    %c0_i32_106 = arith.constant 0 : i32
    %273 = vector.broadcast %c0_i32_106 : i32 to vector<1x64xi32>
    %274 = arith.addi %53, %273 : vector<1x64xi32>
    %c0_i32_107 = arith.constant 0 : i32
    %275 = vector.broadcast %c0_i32_107 : i32 to vector<1x64xi32>
    %276 = arith.cmpi sge, %274, %275 : vector<1x64xi32>
    %277 = arith.andi %272, %276 : vector<1x64xi1>
    %c0_i32_108 = arith.constant 0 : i32
    %278 = vector.broadcast %c0_i32_108 : i32 to vector<1x64xi32>
    %279 = arith.addi %53, %278 : vector<1x64xi32>
    %c8_i32_109 = arith.constant 8 : i32
    %280 = vector.broadcast %c8_i32_109 : i32 to vector<1x64xi32>
    %281 = arith.cmpi slt, %279, %280 : vector<1x64xi32>
    %282 = arith.andi %277, %281 : vector<1x64xi1>
    %c8_i32_110 = arith.constant 8 : i32
    %283 = vector.broadcast %c8_i32_110 : i32 to vector<1x64xi32>
    %284 = arith.addi %7, %283 : vector<1x64xi32>
    %285 = vector.broadcast %6 : vector<64x1xi32> to vector<64x64xi32>
    %286 = vector.broadcast %284 : vector<1x64xi32> to vector<64x64xi32>
    %287 = arith.cmpi eq, %285, %286 : vector<64x64xi32>
    %288 = vector.broadcast %282 : vector<1x64xi1> to vector<64x64xi1>
    %289 = arith.andi %287, %288 : vector<64x64xi1>
    %cst_111 = arith.constant 1.000000e+00 : f32
    %cst_112 = arith.constant 0.000000e+00 : f32
    %290 = vector.broadcast %cst_111 : f32 to vector<64x64xf32>
    %291 = vector.broadcast %cst_112 : f32 to vector<64x64xf32>
    %292 = arith.select %289, %290, %291 : vector<64x64xi1>, vector<64x64xf32>
    %cst_113 = arith.constant dense<0.000000e+00> : vector<32x64xf32>
    %293 = tpu.matmul %1, %292, %cst_113 {dimension_numbers = #tpu.dot_dimension_numbers<[1], [0], [0], [1], [0, 0, 1, 1], [], []>} : vector<32x64xf32>, vector<64x64xf32>, vector<32x64xf32> -> vector<32x64xf32>
    %c1_i32_114 = arith.constant 1 : i32
    %294 = vector.broadcast %c1_i32_114 : i32 to vector<1x64xi32>
    %295 = arith.addi %50, %294 : vector<1x64xi32>
    %c0_i32_115 = arith.constant 0 : i32
    %296 = vector.broadcast %c0_i32_115 : i32 to vector<1x64xi32>
    %297 = arith.cmpi sge, %295, %296 : vector<1x64xi32>
    %c1_i32_116 = arith.constant 1 : i32
    %298 = vector.broadcast %c1_i32_116 : i32 to vector<1x64xi32>
    %299 = arith.addi %50, %298 : vector<1x64xi32>
    %c8_i32_117 = arith.constant 8 : i32
    %300 = vector.broadcast %c8_i32_117 : i32 to vector<1x64xi32>
    %301 = arith.cmpi slt, %299, %300 : vector<1x64xi32>
    %302 = arith.andi %297, %301 : vector<1x64xi1>
    %c1_i32_118 = arith.constant 1 : i32
    %303 = vector.broadcast %c1_i32_118 : i32 to vector<1x64xi32>
    %304 = arith.addi %53, %303 : vector<1x64xi32>
    %c0_i32_119 = arith.constant 0 : i32
    %305 = vector.broadcast %c0_i32_119 : i32 to vector<1x64xi32>
    %306 = arith.cmpi sge, %304, %305 : vector<1x64xi32>
    %307 = arith.andi %302, %306 : vector<1x64xi1>
    %c1_i32_120 = arith.constant 1 : i32
    %308 = vector.broadcast %c1_i32_120 : i32 to vector<1x64xi32>
    %309 = arith.addi %53, %308 : vector<1x64xi32>
    %c8_i32_121 = arith.constant 8 : i32
    %310 = vector.broadcast %c8_i32_121 : i32 to vector<1x64xi32>
    %311 = arith.cmpi slt, %309, %310 : vector<1x64xi32>
    %312 = arith.andi %307, %311 : vector<1x64xi1>
    %c9_i32 = arith.constant 9 : i32
    %313 = vector.broadcast %c9_i32 : i32 to vector<1x64xi32>
    %314 = arith.addi %7, %313 : vector<1x64xi32>
    %315 = vector.broadcast %6 : vector<64x1xi32> to vector<64x64xi32>
    %316 = vector.broadcast %314 : vector<1x64xi32> to vector<64x64xi32>
    %317 = arith.cmpi eq, %315, %316 : vector<64x64xi32>
    %318 = vector.broadcast %312 : vector<1x64xi1> to vector<64x64xi1>
    %319 = arith.andi %317, %318 : vector<64x64xi1>
    %cst_122 = arith.constant 1.000000e+00 : f32
    %cst_123 = arith.constant 0.000000e+00 : f32
    %320 = vector.broadcast %cst_122 : f32 to vector<64x64xf32>
    %321 = vector.broadcast %cst_123 : f32 to vector<64x64xf32>
    %322 = arith.select %319, %320, %321 : vector<64x64xi1>, vector<64x64xf32>
    %cst_124 = arith.constant dense<0.000000e+00> : vector<32x64xf32>
    %323 = tpu.matmul %1, %322, %cst_124 {dimension_numbers = #tpu.dot_dimension_numbers<[1], [0], [0], [1], [0, 0, 1, 1], [], []>} : vector<32x64xf32>, vector<64x64xf32>, vector<32x64xf32> -> vector<32x64xf32>
    %324 = tpu.concatenate %83, %113, %143, %173, %203, %233, %263, %293, %323 in 0 : vector<32x64xf32>, vector<32x64xf32>, vector<32x64xf32>, vector<32x64xf32>, vector<32x64xf32>, vector<32x64xf32>, vector<32x64xf32>, vector<32x64xf32>, vector<32x64xf32> -> vector<288x64xf32>
    %cst_125 = arith.constant dense<0.000000e+00> : vector<16x64xf32>
    %325 = tpu.matmul %2, %324, %cst_125 {dimension_numbers = #tpu.dot_dimension_numbers<[1], [0], [0], [1], [0, 0, 1, 1], [], []>} : vector<16x288xf32>, vector<288x64xf32>, vector<16x64xf32> -> vector<16x64xf32>
    %326 = vector.broadcast %3 : vector<16x1xf32> to vector<16x64xf32>
    %327 = arith.addf %325, %326 : vector<16x64xf32>
    %cst_126 = arith.constant 0.000000e+00 : f32
    %328 = vector.broadcast %cst_126 : f32 to vector<16x64xf32>
    %329 = arith.maximumf %327, %328 : vector<16x64xf32>
    %330 = tpu.iota {dimensions = array<i32: 0>} : vector<64x1xi32>
    %c0_i32_127 = arith.constant 0 : i32
    %331 = vector.broadcast %c0_i32_127 : i32 to vector<64x1xi32>
    %c8_i32_128 = arith.constant 8 : i32
    %332 = vector.broadcast %c8_i32_128 : i32 to vector<64x1xi32>
    %333 = arith.cmpi sge, %330, %332 : vector<64x1xi32>
    %c1_i32_129 = arith.constant 1 : i32
    %c0_i32_130 = arith.constant 0 : i32
    %334 = vector.broadcast %c1_i32_129 : i32 to vector<64x1xi32>
    %335 = vector.broadcast %c0_i32_130 : i32 to vector<64x1xi32>
    %336 = arith.select %333, %334, %335 : vector<64x1xi1>, vector<64x1xi32>
    %337 = arith.addi %331, %336 : vector<64x1xi32>
    %c16_i32_131 = arith.constant 16 : i32
    %338 = vector.broadcast %c16_i32_131 : i32 to vector<64x1xi32>
    %339 = arith.cmpi sge, %330, %338 : vector<64x1xi32>
    %c1_i32_132 = arith.constant 1 : i32
    %c0_i32_133 = arith.constant 0 : i32
    %340 = vector.broadcast %c1_i32_132 : i32 to vector<64x1xi32>
    %341 = vector.broadcast %c0_i32_133 : i32 to vector<64x1xi32>
    %342 = arith.select %339, %340, %341 : vector<64x1xi1>, vector<64x1xi32>
    %343 = arith.addi %337, %342 : vector<64x1xi32>
    %c24_i32_134 = arith.constant 24 : i32
    %344 = vector.broadcast %c24_i32_134 : i32 to vector<64x1xi32>
    %345 = arith.cmpi sge, %330, %344 : vector<64x1xi32>
    %c1_i32_135 = arith.constant 1 : i32
    %c0_i32_136 = arith.constant 0 : i32
    %346 = vector.broadcast %c1_i32_135 : i32 to vector<64x1xi32>
    %347 = vector.broadcast %c0_i32_136 : i32 to vector<64x1xi32>
    %348 = arith.select %345, %346, %347 : vector<64x1xi1>, vector<64x1xi32>
    %349 = arith.addi %343, %348 : vector<64x1xi32>
    %c32_i32_137 = arith.constant 32 : i32
    %350 = vector.broadcast %c32_i32_137 : i32 to vector<64x1xi32>
    %351 = arith.cmpi sge, %330, %350 : vector<64x1xi32>
    %c1_i32_138 = arith.constant 1 : i32
    %c0_i32_139 = arith.constant 0 : i32
    %352 = vector.broadcast %c1_i32_138 : i32 to vector<64x1xi32>
    %353 = vector.broadcast %c0_i32_139 : i32 to vector<64x1xi32>
    %354 = arith.select %351, %352, %353 : vector<64x1xi1>, vector<64x1xi32>
    %355 = arith.addi %349, %354 : vector<64x1xi32>
    %c40_i32_140 = arith.constant 40 : i32
    %356 = vector.broadcast %c40_i32_140 : i32 to vector<64x1xi32>
    %357 = arith.cmpi sge, %330, %356 : vector<64x1xi32>
    %c1_i32_141 = arith.constant 1 : i32
    %c0_i32_142 = arith.constant 0 : i32
    %358 = vector.broadcast %c1_i32_141 : i32 to vector<64x1xi32>
    %359 = vector.broadcast %c0_i32_142 : i32 to vector<64x1xi32>
    %360 = arith.select %357, %358, %359 : vector<64x1xi1>, vector<64x1xi32>
    %361 = arith.addi %355, %360 : vector<64x1xi32>
    %c48_i32_143 = arith.constant 48 : i32
    %362 = vector.broadcast %c48_i32_143 : i32 to vector<64x1xi32>
    %363 = arith.cmpi sge, %330, %362 : vector<64x1xi32>
    %c1_i32_144 = arith.constant 1 : i32
    %c0_i32_145 = arith.constant 0 : i32
    %364 = vector.broadcast %c1_i32_144 : i32 to vector<64x1xi32>
    %365 = vector.broadcast %c0_i32_145 : i32 to vector<64x1xi32>
    %366 = arith.select %363, %364, %365 : vector<64x1xi1>, vector<64x1xi32>
    %367 = arith.addi %361, %366 : vector<64x1xi32>
    %c56_i32_146 = arith.constant 56 : i32
    %368 = vector.broadcast %c56_i32_146 : i32 to vector<64x1xi32>
    %369 = arith.cmpi sge, %330, %368 : vector<64x1xi32>
    %c1_i32_147 = arith.constant 1 : i32
    %c0_i32_148 = arith.constant 0 : i32
    %370 = vector.broadcast %c1_i32_147 : i32 to vector<64x1xi32>
    %371 = vector.broadcast %c0_i32_148 : i32 to vector<64x1xi32>
    %372 = arith.select %369, %370, %371 : vector<64x1xi1>, vector<64x1xi32>
    %373 = arith.addi %367, %372 : vector<64x1xi32>
    %c8_i32_149 = arith.constant 8 : i32
    %374 = vector.broadcast %c8_i32_149 : i32 to vector<64x1xi32>
    %375 = arith.muli %373, %374 : vector<64x1xi32>
    %376 = arith.subi %330, %375 : vector<64x1xi32>
    %377 = tpu.iota {dimensions = array<i32: 1>} : vector<1x256xi32>
    %c0_i32_150 = arith.constant 0 : i32
    %378 = vector.broadcast %c0_i32_150 : i32 to vector<1x256xi32>
    %c16_i32_151 = arith.constant 16 : i32
    %379 = vector.broadcast %c16_i32_151 : i32 to vector<1x256xi32>
    %380 = arith.cmpi sge, %377, %379 : vector<1x256xi32>
    %c1_i32_152 = arith.constant 1 : i32
    %c0_i32_153 = arith.constant 0 : i32
    %381 = vector.broadcast %c1_i32_152 : i32 to vector<1x256xi32>
    %382 = vector.broadcast %c0_i32_153 : i32 to vector<1x256xi32>
    %383 = arith.select %380, %381, %382 : vector<1x256xi1>, vector<1x256xi32>
    %384 = arith.addi %378, %383 : vector<1x256xi32>
    %c32_i32_154 = arith.constant 32 : i32
    %385 = vector.broadcast %c32_i32_154 : i32 to vector<1x256xi32>
    %386 = arith.cmpi sge, %377, %385 : vector<1x256xi32>
    %c1_i32_155 = arith.constant 1 : i32
    %c0_i32_156 = arith.constant 0 : i32
    %387 = vector.broadcast %c1_i32_155 : i32 to vector<1x256xi32>
    %388 = vector.broadcast %c0_i32_156 : i32 to vector<1x256xi32>
    %389 = arith.select %386, %387, %388 : vector<1x256xi1>, vector<1x256xi32>
    %390 = arith.addi %384, %389 : vector<1x256xi32>
    %c48_i32_157 = arith.constant 48 : i32
    %391 = vector.broadcast %c48_i32_157 : i32 to vector<1x256xi32>
    %392 = arith.cmpi sge, %377, %391 : vector<1x256xi32>
    %c1_i32_158 = arith.constant 1 : i32
    %c0_i32_159 = arith.constant 0 : i32
    %393 = vector.broadcast %c1_i32_158 : i32 to vector<1x256xi32>
    %394 = vector.broadcast %c0_i32_159 : i32 to vector<1x256xi32>
    %395 = arith.select %392, %393, %394 : vector<1x256xi1>, vector<1x256xi32>
    %396 = arith.addi %390, %395 : vector<1x256xi32>
    %c64_i32 = arith.constant 64 : i32
    %397 = vector.broadcast %c64_i32 : i32 to vector<1x256xi32>
    %398 = arith.cmpi sge, %377, %397 : vector<1x256xi32>
    %c1_i32_160 = arith.constant 1 : i32
    %c0_i32_161 = arith.constant 0 : i32
    %399 = vector.broadcast %c1_i32_160 : i32 to vector<1x256xi32>
    %400 = vector.broadcast %c0_i32_161 : i32 to vector<1x256xi32>
    %401 = arith.select %398, %399, %400 : vector<1x256xi1>, vector<1x256xi32>
    %402 = arith.addi %396, %401 : vector<1x256xi32>
    %c80_i32 = arith.constant 80 : i32
    %403 = vector.broadcast %c80_i32 : i32 to vector<1x256xi32>
    %404 = arith.cmpi sge, %377, %403 : vector<1x256xi32>
    %c1_i32_162 = arith.constant 1 : i32
    %c0_i32_163 = arith.constant 0 : i32
    %405 = vector.broadcast %c1_i32_162 : i32 to vector<1x256xi32>
    %406 = vector.broadcast %c0_i32_163 : i32 to vector<1x256xi32>
    %407 = arith.select %404, %405, %406 : vector<1x256xi1>, vector<1x256xi32>
    %408 = arith.addi %402, %407 : vector<1x256xi32>
    %c96_i32 = arith.constant 96 : i32
    %409 = vector.broadcast %c96_i32 : i32 to vector<1x256xi32>
    %410 = arith.cmpi sge, %377, %409 : vector<1x256xi32>
    %c1_i32_164 = arith.constant 1 : i32
    %c0_i32_165 = arith.constant 0 : i32
    %411 = vector.broadcast %c1_i32_164 : i32 to vector<1x256xi32>
    %412 = vector.broadcast %c0_i32_165 : i32 to vector<1x256xi32>
    %413 = arith.select %410, %411, %412 : vector<1x256xi1>, vector<1x256xi32>
    %414 = arith.addi %408, %413 : vector<1x256xi32>
    %c112_i32 = arith.constant 112 : i32
    %415 = vector.broadcast %c112_i32 : i32 to vector<1x256xi32>
    %416 = arith.cmpi sge, %377, %415 : vector<1x256xi32>
    %c1_i32_166 = arith.constant 1 : i32
    %c0_i32_167 = arith.constant 0 : i32
    %417 = vector.broadcast %c1_i32_166 : i32 to vector<1x256xi32>
    %418 = vector.broadcast %c0_i32_167 : i32 to vector<1x256xi32>
    %419 = arith.select %416, %417, %418 : vector<1x256xi1>, vector<1x256xi32>
    %420 = arith.addi %414, %419 : vector<1x256xi32>
    %c128_i32 = arith.constant 128 : i32
    %421 = vector.broadcast %c128_i32 : i32 to vector<1x256xi32>
    %422 = arith.cmpi sge, %377, %421 : vector<1x256xi32>
    %c1_i32_168 = arith.constant 1 : i32
    %c0_i32_169 = arith.constant 0 : i32
    %423 = vector.broadcast %c1_i32_168 : i32 to vector<1x256xi32>
    %424 = vector.broadcast %c0_i32_169 : i32 to vector<1x256xi32>
    %425 = arith.select %422, %423, %424 : vector<1x256xi1>, vector<1x256xi32>
    %426 = arith.addi %420, %425 : vector<1x256xi32>
    %c144_i32 = arith.constant 144 : i32
    %427 = vector.broadcast %c144_i32 : i32 to vector<1x256xi32>
    %428 = arith.cmpi sge, %377, %427 : vector<1x256xi32>
    %c1_i32_170 = arith.constant 1 : i32
    %c0_i32_171 = arith.constant 0 : i32
    %429 = vector.broadcast %c1_i32_170 : i32 to vector<1x256xi32>
    %430 = vector.broadcast %c0_i32_171 : i32 to vector<1x256xi32>
    %431 = arith.select %428, %429, %430 : vector<1x256xi1>, vector<1x256xi32>
    %432 = arith.addi %426, %431 : vector<1x256xi32>
    %c160_i32 = arith.constant 160 : i32
    %433 = vector.broadcast %c160_i32 : i32 to vector<1x256xi32>
    %434 = arith.cmpi sge, %377, %433 : vector<1x256xi32>
    %c1_i32_172 = arith.constant 1 : i32
    %c0_i32_173 = arith.constant 0 : i32
    %435 = vector.broadcast %c1_i32_172 : i32 to vector<1x256xi32>
    %436 = vector.broadcast %c0_i32_173 : i32 to vector<1x256xi32>
    %437 = arith.select %434, %435, %436 : vector<1x256xi1>, vector<1x256xi32>
    %438 = arith.addi %432, %437 : vector<1x256xi32>
    %c176_i32 = arith.constant 176 : i32
    %439 = vector.broadcast %c176_i32 : i32 to vector<1x256xi32>
    %440 = arith.cmpi sge, %377, %439 : vector<1x256xi32>
    %c1_i32_174 = arith.constant 1 : i32
    %c0_i32_175 = arith.constant 0 : i32
    %441 = vector.broadcast %c1_i32_174 : i32 to vector<1x256xi32>
    %442 = vector.broadcast %c0_i32_175 : i32 to vector<1x256xi32>
    %443 = arith.select %440, %441, %442 : vector<1x256xi1>, vector<1x256xi32>
    %444 = arith.addi %438, %443 : vector<1x256xi32>
    %c192_i32 = arith.constant 192 : i32
    %445 = vector.broadcast %c192_i32 : i32 to vector<1x256xi32>
    %446 = arith.cmpi sge, %377, %445 : vector<1x256xi32>
    %c1_i32_176 = arith.constant 1 : i32
    %c0_i32_177 = arith.constant 0 : i32
    %447 = vector.broadcast %c1_i32_176 : i32 to vector<1x256xi32>
    %448 = vector.broadcast %c0_i32_177 : i32 to vector<1x256xi32>
    %449 = arith.select %446, %447, %448 : vector<1x256xi1>, vector<1x256xi32>
    %450 = arith.addi %444, %449 : vector<1x256xi32>
    %c208_i32 = arith.constant 208 : i32
    %451 = vector.broadcast %c208_i32 : i32 to vector<1x256xi32>
    %452 = arith.cmpi sge, %377, %451 : vector<1x256xi32>
    %c1_i32_178 = arith.constant 1 : i32
    %c0_i32_179 = arith.constant 0 : i32
    %453 = vector.broadcast %c1_i32_178 : i32 to vector<1x256xi32>
    %454 = vector.broadcast %c0_i32_179 : i32 to vector<1x256xi32>
    %455 = arith.select %452, %453, %454 : vector<1x256xi1>, vector<1x256xi32>
    %456 = arith.addi %450, %455 : vector<1x256xi32>
    %c224_i32 = arith.constant 224 : i32
    %457 = vector.broadcast %c224_i32 : i32 to vector<1x256xi32>
    %458 = arith.cmpi sge, %377, %457 : vector<1x256xi32>
    %c1_i32_180 = arith.constant 1 : i32
    %c0_i32_181 = arith.constant 0 : i32
    %459 = vector.broadcast %c1_i32_180 : i32 to vector<1x256xi32>
    %460 = vector.broadcast %c0_i32_181 : i32 to vector<1x256xi32>
    %461 = arith.select %458, %459, %460 : vector<1x256xi1>, vector<1x256xi32>
    %462 = arith.addi %456, %461 : vector<1x256xi32>
    %c240_i32 = arith.constant 240 : i32
    %463 = vector.broadcast %c240_i32 : i32 to vector<1x256xi32>
    %464 = arith.cmpi sge, %377, %463 : vector<1x256xi32>
    %c1_i32_182 = arith.constant 1 : i32
    %c0_i32_183 = arith.constant 0 : i32
    %465 = vector.broadcast %c1_i32_182 : i32 to vector<1x256xi32>
    %466 = vector.broadcast %c0_i32_183 : i32 to vector<1x256xi32>
    %467 = arith.select %464, %465, %466 : vector<1x256xi1>, vector<1x256xi32>
    %468 = arith.addi %462, %467 : vector<1x256xi32>
    %c16_i32_184 = arith.constant 16 : i32
    %469 = vector.broadcast %c16_i32_184 : i32 to vector<1x256xi32>
    %470 = arith.muli %468, %469 : vector<1x256xi32>
    %471 = arith.subi %377, %470 : vector<1x256xi32>
    %cst_185 = arith.constant 0.000000e+00 : f32
    %472 = vector.broadcast %cst_185 : f32 to vector<16x256xf32>
    %c-1_i32_186 = arith.constant -1 : i32
    %473 = vector.broadcast %c-1_i32_186 : i32 to vector<1x256xi32>
    %474 = arith.addi %468, %473 : vector<1x256xi32>
    %c-1_i32_187 = arith.constant -1 : i32
    %475 = vector.broadcast %c-1_i32_187 : i32 to vector<1x256xi32>
    %476 = arith.addi %471, %475 : vector<1x256xi32>
    %c0_i32_188 = arith.constant 0 : i32
    %477 = vector.broadcast %c0_i32_188 : i32 to vector<1x256xi32>
    %478 = arith.cmpi sge, %474, %477 : vector<1x256xi32>
    %c16_i32_189 = arith.constant 16 : i32
    %479 = vector.broadcast %c16_i32_189 : i32 to vector<1x256xi32>
    %480 = arith.cmpi slt, %474, %479 : vector<1x256xi32>
    %481 = arith.andi %478, %480 : vector<1x256xi1>
    %c0_i32_190 = arith.constant 0 : i32
    %482 = vector.broadcast %c0_i32_190 : i32 to vector<1x256xi32>
    %483 = arith.cmpi sge, %476, %482 : vector<1x256xi32>
    %484 = arith.andi %481, %483 : vector<1x256xi1>
    %c16_i32_191 = arith.constant 16 : i32
    %485 = vector.broadcast %c16_i32_191 : i32 to vector<1x256xi32>
    %486 = arith.cmpi slt, %476, %485 : vector<1x256xi32>
    %487 = arith.andi %484, %486 : vector<1x256xi1>
    %c2_i32 = arith.constant 2 : i32
    %488 = vector.broadcast %c2_i32 : i32 to vector<64x1xi32>
    %489 = arith.muli %488, %373 : vector<64x1xi32>
    %490 = vector.broadcast %474 : vector<1x256xi32> to vector<64x256xi32>
    %491 = vector.broadcast %489 : vector<64x1xi32> to vector<64x256xi32>
    %492 = arith.cmpi sge, %490, %491 : vector<64x256xi32>
    %c2_i32_192 = arith.constant 2 : i32
    %493 = vector.broadcast %c2_i32_192 : i32 to vector<64x1xi32>
    %494 = arith.muli %493, %373 : vector<64x1xi32>
    %c1_i32_193 = arith.constant 1 : i32
    %495 = vector.broadcast %c1_i32_193 : i32 to vector<64x1xi32>
    %496 = arith.addi %494, %495 : vector<64x1xi32>
    %497 = vector.broadcast %474 : vector<1x256xi32> to vector<64x256xi32>
    %498 = vector.broadcast %496 : vector<64x1xi32> to vector<64x256xi32>
    %499 = arith.cmpi sle, %497, %498 : vector<64x256xi32>
    %500 = arith.andi %492, %499 : vector<64x256xi1>
    %c2_i32_194 = arith.constant 2 : i32
    %501 = vector.broadcast %c2_i32_194 : i32 to vector<64x1xi32>
    %502 = arith.muli %501, %376 : vector<64x1xi32>
    %503 = vector.broadcast %476 : vector<1x256xi32> to vector<64x256xi32>
    %504 = vector.broadcast %502 : vector<64x1xi32> to vector<64x256xi32>
    %505 = arith.cmpi sge, %503, %504 : vector<64x256xi32>
    %506 = arith.andi %500, %505 : vector<64x256xi1>
    %c2_i32_195 = arith.constant 2 : i32
    %507 = vector.broadcast %c2_i32_195 : i32 to vector<64x1xi32>
    %508 = arith.muli %507, %376 : vector<64x1xi32>
    %c1_i32_196 = arith.constant 1 : i32
    %509 = vector.broadcast %c1_i32_196 : i32 to vector<64x1xi32>
    %510 = arith.addi %508, %509 : vector<64x1xi32>
    %511 = vector.broadcast %476 : vector<1x256xi32> to vector<64x256xi32>
    %512 = vector.broadcast %510 : vector<64x1xi32> to vector<64x256xi32>
    %513 = arith.cmpi sle, %511, %512 : vector<64x256xi32>
    %514 = arith.andi %506, %513 : vector<64x256xi1>
    %515 = vector.broadcast %487 : vector<1x256xi1> to vector<64x256xi1>
    %516 = arith.andi %514, %515 : vector<64x256xi1>
    %cst_197 = arith.constant 1.000000e+00 : f32
    %cst_198 = arith.constant 0.000000e+00 : f32
    %517 = vector.broadcast %cst_197 : f32 to vector<64x256xf32>
    %518 = vector.broadcast %cst_198 : f32 to vector<64x256xf32>
    %519 = arith.select %516, %517, %518 : vector<64x256xi1>, vector<64x256xf32>
    %cst_199 = arith.constant dense<0.000000e+00> : vector<16x256xf32>
    %520 = tpu.matmul %329, %519, %cst_199 {dimension_numbers = #tpu.dot_dimension_numbers<[1], [0], [0], [1], [0, 0, 1, 1], [], []>} : vector<16x64xf32>, vector<64x256xf32>, vector<16x256xf32> -> vector<16x256xf32>
    %521 = vector.extract_strided_slice %4 {offsets = [0, 0], sizes = [16, 1], strides = [1, 1]} : vector<16x9xf32> to vector<16x1xf32>
    %522 = vector.broadcast %521 : vector<16x1xf32> to vector<16x256xf32>
    %523 = arith.mulf %520, %522 : vector<16x256xf32>
    %524 = arith.addf %472, %523 : vector<16x256xf32>
    %c-1_i32_200 = arith.constant -1 : i32
    %525 = vector.broadcast %c-1_i32_200 : i32 to vector<1x256xi32>
    %526 = arith.addi %468, %525 : vector<1x256xi32>
    %c0_i32_201 = arith.constant 0 : i32
    %527 = vector.broadcast %c0_i32_201 : i32 to vector<1x256xi32>
    %528 = arith.addi %471, %527 : vector<1x256xi32>
    %c0_i32_202 = arith.constant 0 : i32
    %529 = vector.broadcast %c0_i32_202 : i32 to vector<1x256xi32>
    %530 = arith.cmpi sge, %526, %529 : vector<1x256xi32>
    %c16_i32_203 = arith.constant 16 : i32
    %531 = vector.broadcast %c16_i32_203 : i32 to vector<1x256xi32>
    %532 = arith.cmpi slt, %526, %531 : vector<1x256xi32>
    %533 = arith.andi %530, %532 : vector<1x256xi1>
    %c0_i32_204 = arith.constant 0 : i32
    %534 = vector.broadcast %c0_i32_204 : i32 to vector<1x256xi32>
    %535 = arith.cmpi sge, %528, %534 : vector<1x256xi32>
    %536 = arith.andi %533, %535 : vector<1x256xi1>
    %c16_i32_205 = arith.constant 16 : i32
    %537 = vector.broadcast %c16_i32_205 : i32 to vector<1x256xi32>
    %538 = arith.cmpi slt, %528, %537 : vector<1x256xi32>
    %539 = arith.andi %536, %538 : vector<1x256xi1>
    %c2_i32_206 = arith.constant 2 : i32
    %540 = vector.broadcast %c2_i32_206 : i32 to vector<64x1xi32>
    %541 = arith.muli %540, %373 : vector<64x1xi32>
    %542 = vector.broadcast %526 : vector<1x256xi32> to vector<64x256xi32>
    %543 = vector.broadcast %541 : vector<64x1xi32> to vector<64x256xi32>
    %544 = arith.cmpi sge, %542, %543 : vector<64x256xi32>
    %c2_i32_207 = arith.constant 2 : i32
    %545 = vector.broadcast %c2_i32_207 : i32 to vector<64x1xi32>
    %546 = arith.muli %545, %373 : vector<64x1xi32>
    %c1_i32_208 = arith.constant 1 : i32
    %547 = vector.broadcast %c1_i32_208 : i32 to vector<64x1xi32>
    %548 = arith.addi %546, %547 : vector<64x1xi32>
    %549 = vector.broadcast %526 : vector<1x256xi32> to vector<64x256xi32>
    %550 = vector.broadcast %548 : vector<64x1xi32> to vector<64x256xi32>
    %551 = arith.cmpi sle, %549, %550 : vector<64x256xi32>
    %552 = arith.andi %544, %551 : vector<64x256xi1>
    %c2_i32_209 = arith.constant 2 : i32
    %553 = vector.broadcast %c2_i32_209 : i32 to vector<64x1xi32>
    %554 = arith.muli %553, %376 : vector<64x1xi32>
    %555 = vector.broadcast %528 : vector<1x256xi32> to vector<64x256xi32>
    %556 = vector.broadcast %554 : vector<64x1xi32> to vector<64x256xi32>
    %557 = arith.cmpi sge, %555, %556 : vector<64x256xi32>
    %558 = arith.andi %552, %557 : vector<64x256xi1>
    %c2_i32_210 = arith.constant 2 : i32
    %559 = vector.broadcast %c2_i32_210 : i32 to vector<64x1xi32>
    %560 = arith.muli %559, %376 : vector<64x1xi32>
    %c1_i32_211 = arith.constant 1 : i32
    %561 = vector.broadcast %c1_i32_211 : i32 to vector<64x1xi32>
    %562 = arith.addi %560, %561 : vector<64x1xi32>
    %563 = vector.broadcast %528 : vector<1x256xi32> to vector<64x256xi32>
    %564 = vector.broadcast %562 : vector<64x1xi32> to vector<64x256xi32>
    %565 = arith.cmpi sle, %563, %564 : vector<64x256xi32>
    %566 = arith.andi %558, %565 : vector<64x256xi1>
    %567 = vector.broadcast %539 : vector<1x256xi1> to vector<64x256xi1>
    %568 = arith.andi %566, %567 : vector<64x256xi1>
    %cst_212 = arith.constant 1.000000e+00 : f32
    %cst_213 = arith.constant 0.000000e+00 : f32
    %569 = vector.broadcast %cst_212 : f32 to vector<64x256xf32>
    %570 = vector.broadcast %cst_213 : f32 to vector<64x256xf32>
    %571 = arith.select %568, %569, %570 : vector<64x256xi1>, vector<64x256xf32>
    %cst_214 = arith.constant dense<0.000000e+00> : vector<16x256xf32>
    %572 = tpu.matmul %329, %571, %cst_214 {dimension_numbers = #tpu.dot_dimension_numbers<[1], [0], [0], [1], [0, 0, 1, 1], [], []>} : vector<16x64xf32>, vector<64x256xf32>, vector<16x256xf32> -> vector<16x256xf32>
    %573 = vector.extract_strided_slice %4 {offsets = [0, 1], sizes = [16, 1], strides = [1, 1]} : vector<16x9xf32> to vector<16x1xf32>
    %574 = vector.broadcast %573 : vector<16x1xf32> to vector<16x256xf32>
    %575 = arith.mulf %572, %574 : vector<16x256xf32>
    %576 = arith.addf %524, %575 : vector<16x256xf32>
    %c-1_i32_215 = arith.constant -1 : i32
    %577 = vector.broadcast %c-1_i32_215 : i32 to vector<1x256xi32>
    %578 = arith.addi %468, %577 : vector<1x256xi32>
    %c1_i32_216 = arith.constant 1 : i32
    %579 = vector.broadcast %c1_i32_216 : i32 to vector<1x256xi32>
    %580 = arith.addi %471, %579 : vector<1x256xi32>
    %c0_i32_217 = arith.constant 0 : i32
    %581 = vector.broadcast %c0_i32_217 : i32 to vector<1x256xi32>
    %582 = arith.cmpi sge, %578, %581 : vector<1x256xi32>
    %c16_i32_218 = arith.constant 16 : i32
    %583 = vector.broadcast %c16_i32_218 : i32 to vector<1x256xi32>
    %584 = arith.cmpi slt, %578, %583 : vector<1x256xi32>
    %585 = arith.andi %582, %584 : vector<1x256xi1>
    %c0_i32_219 = arith.constant 0 : i32
    %586 = vector.broadcast %c0_i32_219 : i32 to vector<1x256xi32>
    %587 = arith.cmpi sge, %580, %586 : vector<1x256xi32>
    %588 = arith.andi %585, %587 : vector<1x256xi1>
    %c16_i32_220 = arith.constant 16 : i32
    %589 = vector.broadcast %c16_i32_220 : i32 to vector<1x256xi32>
    %590 = arith.cmpi slt, %580, %589 : vector<1x256xi32>
    %591 = arith.andi %588, %590 : vector<1x256xi1>
    %c2_i32_221 = arith.constant 2 : i32
    %592 = vector.broadcast %c2_i32_221 : i32 to vector<64x1xi32>
    %593 = arith.muli %592, %373 : vector<64x1xi32>
    %594 = vector.broadcast %578 : vector<1x256xi32> to vector<64x256xi32>
    %595 = vector.broadcast %593 : vector<64x1xi32> to vector<64x256xi32>
    %596 = arith.cmpi sge, %594, %595 : vector<64x256xi32>
    %c2_i32_222 = arith.constant 2 : i32
    %597 = vector.broadcast %c2_i32_222 : i32 to vector<64x1xi32>
    %598 = arith.muli %597, %373 : vector<64x1xi32>
    %c1_i32_223 = arith.constant 1 : i32
    %599 = vector.broadcast %c1_i32_223 : i32 to vector<64x1xi32>
    %600 = arith.addi %598, %599 : vector<64x1xi32>
    %601 = vector.broadcast %578 : vector<1x256xi32> to vector<64x256xi32>
    %602 = vector.broadcast %600 : vector<64x1xi32> to vector<64x256xi32>
    %603 = arith.cmpi sle, %601, %602 : vector<64x256xi32>
    %604 = arith.andi %596, %603 : vector<64x256xi1>
    %c2_i32_224 = arith.constant 2 : i32
    %605 = vector.broadcast %c2_i32_224 : i32 to vector<64x1xi32>
    %606 = arith.muli %605, %376 : vector<64x1xi32>
    %607 = vector.broadcast %580 : vector<1x256xi32> to vector<64x256xi32>
    %608 = vector.broadcast %606 : vector<64x1xi32> to vector<64x256xi32>
    %609 = arith.cmpi sge, %607, %608 : vector<64x256xi32>
    %610 = arith.andi %604, %609 : vector<64x256xi1>
    %c2_i32_225 = arith.constant 2 : i32
    %611 = vector.broadcast %c2_i32_225 : i32 to vector<64x1xi32>
    %612 = arith.muli %611, %376 : vector<64x1xi32>
    %c1_i32_226 = arith.constant 1 : i32
    %613 = vector.broadcast %c1_i32_226 : i32 to vector<64x1xi32>
    %614 = arith.addi %612, %613 : vector<64x1xi32>
    %615 = vector.broadcast %580 : vector<1x256xi32> to vector<64x256xi32>
    %616 = vector.broadcast %614 : vector<64x1xi32> to vector<64x256xi32>
    %617 = arith.cmpi sle, %615, %616 : vector<64x256xi32>
    %618 = arith.andi %610, %617 : vector<64x256xi1>
    %619 = vector.broadcast %591 : vector<1x256xi1> to vector<64x256xi1>
    %620 = arith.andi %618, %619 : vector<64x256xi1>
    %cst_227 = arith.constant 1.000000e+00 : f32
    %cst_228 = arith.constant 0.000000e+00 : f32
    %621 = vector.broadcast %cst_227 : f32 to vector<64x256xf32>
    %622 = vector.broadcast %cst_228 : f32 to vector<64x256xf32>
    %623 = arith.select %620, %621, %622 : vector<64x256xi1>, vector<64x256xf32>
    %cst_229 = arith.constant dense<0.000000e+00> : vector<16x256xf32>
    %624 = tpu.matmul %329, %623, %cst_229 {dimension_numbers = #tpu.dot_dimension_numbers<[1], [0], [0], [1], [0, 0, 1, 1], [], []>} : vector<16x64xf32>, vector<64x256xf32>, vector<16x256xf32> -> vector<16x256xf32>
    %625 = vector.extract_strided_slice %4 {offsets = [0, 2], sizes = [16, 1], strides = [1, 1]} : vector<16x9xf32> to vector<16x1xf32>
    %626 = vector.broadcast %625 : vector<16x1xf32> to vector<16x256xf32>
    %627 = arith.mulf %624, %626 : vector<16x256xf32>
    %628 = arith.addf %576, %627 : vector<16x256xf32>
    %c0_i32_230 = arith.constant 0 : i32
    %629 = vector.broadcast %c0_i32_230 : i32 to vector<1x256xi32>
    %630 = arith.addi %468, %629 : vector<1x256xi32>
    %c-1_i32_231 = arith.constant -1 : i32
    %631 = vector.broadcast %c-1_i32_231 : i32 to vector<1x256xi32>
    %632 = arith.addi %471, %631 : vector<1x256xi32>
    %c0_i32_232 = arith.constant 0 : i32
    %633 = vector.broadcast %c0_i32_232 : i32 to vector<1x256xi32>
    %634 = arith.cmpi sge, %630, %633 : vector<1x256xi32>
    %c16_i32_233 = arith.constant 16 : i32
    %635 = vector.broadcast %c16_i32_233 : i32 to vector<1x256xi32>
    %636 = arith.cmpi slt, %630, %635 : vector<1x256xi32>
    %637 = arith.andi %634, %636 : vector<1x256xi1>
    %c0_i32_234 = arith.constant 0 : i32
    %638 = vector.broadcast %c0_i32_234 : i32 to vector<1x256xi32>
    %639 = arith.cmpi sge, %632, %638 : vector<1x256xi32>
    %640 = arith.andi %637, %639 : vector<1x256xi1>
    %c16_i32_235 = arith.constant 16 : i32
    %641 = vector.broadcast %c16_i32_235 : i32 to vector<1x256xi32>
    %642 = arith.cmpi slt, %632, %641 : vector<1x256xi32>
    %643 = arith.andi %640, %642 : vector<1x256xi1>
    %c2_i32_236 = arith.constant 2 : i32
    %644 = vector.broadcast %c2_i32_236 : i32 to vector<64x1xi32>
    %645 = arith.muli %644, %373 : vector<64x1xi32>
    %646 = vector.broadcast %630 : vector<1x256xi32> to vector<64x256xi32>
    %647 = vector.broadcast %645 : vector<64x1xi32> to vector<64x256xi32>
    %648 = arith.cmpi sge, %646, %647 : vector<64x256xi32>
    %c2_i32_237 = arith.constant 2 : i32
    %649 = vector.broadcast %c2_i32_237 : i32 to vector<64x1xi32>
    %650 = arith.muli %649, %373 : vector<64x1xi32>
    %c1_i32_238 = arith.constant 1 : i32
    %651 = vector.broadcast %c1_i32_238 : i32 to vector<64x1xi32>
    %652 = arith.addi %650, %651 : vector<64x1xi32>
    %653 = vector.broadcast %630 : vector<1x256xi32> to vector<64x256xi32>
    %654 = vector.broadcast %652 : vector<64x1xi32> to vector<64x256xi32>
    %655 = arith.cmpi sle, %653, %654 : vector<64x256xi32>
    %656 = arith.andi %648, %655 : vector<64x256xi1>
    %c2_i32_239 = arith.constant 2 : i32
    %657 = vector.broadcast %c2_i32_239 : i32 to vector<64x1xi32>
    %658 = arith.muli %657, %376 : vector<64x1xi32>
    %659 = vector.broadcast %632 : vector<1x256xi32> to vector<64x256xi32>
    %660 = vector.broadcast %658 : vector<64x1xi32> to vector<64x256xi32>
    %661 = arith.cmpi sge, %659, %660 : vector<64x256xi32>
    %662 = arith.andi %656, %661 : vector<64x256xi1>
    %c2_i32_240 = arith.constant 2 : i32
    %663 = vector.broadcast %c2_i32_240 : i32 to vector<64x1xi32>
    %664 = arith.muli %663, %376 : vector<64x1xi32>
    %c1_i32_241 = arith.constant 1 : i32
    %665 = vector.broadcast %c1_i32_241 : i32 to vector<64x1xi32>
    %666 = arith.addi %664, %665 : vector<64x1xi32>
    %667 = vector.broadcast %632 : vector<1x256xi32> to vector<64x256xi32>
    %668 = vector.broadcast %666 : vector<64x1xi32> to vector<64x256xi32>
    %669 = arith.cmpi sle, %667, %668 : vector<64x256xi32>
    %670 = arith.andi %662, %669 : vector<64x256xi1>
    %671 = vector.broadcast %643 : vector<1x256xi1> to vector<64x256xi1>
    %672 = arith.andi %670, %671 : vector<64x256xi1>
    %cst_242 = arith.constant 1.000000e+00 : f32
    %cst_243 = arith.constant 0.000000e+00 : f32
    %673 = vector.broadcast %cst_242 : f32 to vector<64x256xf32>
    %674 = vector.broadcast %cst_243 : f32 to vector<64x256xf32>
    %675 = arith.select %672, %673, %674 : vector<64x256xi1>, vector<64x256xf32>
    %cst_244 = arith.constant dense<0.000000e+00> : vector<16x256xf32>
    %676 = tpu.matmul %329, %675, %cst_244 {dimension_numbers = #tpu.dot_dimension_numbers<[1], [0], [0], [1], [0, 0, 1, 1], [], []>} : vector<16x64xf32>, vector<64x256xf32>, vector<16x256xf32> -> vector<16x256xf32>
    %677 = vector.extract_strided_slice %4 {offsets = [0, 3], sizes = [16, 1], strides = [1, 1]} : vector<16x9xf32> to vector<16x1xf32>
    %678 = vector.broadcast %677 : vector<16x1xf32> to vector<16x256xf32>
    %679 = arith.mulf %676, %678 : vector<16x256xf32>
    %680 = arith.addf %628, %679 : vector<16x256xf32>
    %c0_i32_245 = arith.constant 0 : i32
    %681 = vector.broadcast %c0_i32_245 : i32 to vector<1x256xi32>
    %682 = arith.addi %468, %681 : vector<1x256xi32>
    %c0_i32_246 = arith.constant 0 : i32
    %683 = vector.broadcast %c0_i32_246 : i32 to vector<1x256xi32>
    %684 = arith.addi %471, %683 : vector<1x256xi32>
    %c0_i32_247 = arith.constant 0 : i32
    %685 = vector.broadcast %c0_i32_247 : i32 to vector<1x256xi32>
    %686 = arith.cmpi sge, %682, %685 : vector<1x256xi32>
    %c16_i32_248 = arith.constant 16 : i32
    %687 = vector.broadcast %c16_i32_248 : i32 to vector<1x256xi32>
    %688 = arith.cmpi slt, %682, %687 : vector<1x256xi32>
    %689 = arith.andi %686, %688 : vector<1x256xi1>
    %c0_i32_249 = arith.constant 0 : i32
    %690 = vector.broadcast %c0_i32_249 : i32 to vector<1x256xi32>
    %691 = arith.cmpi sge, %684, %690 : vector<1x256xi32>
    %692 = arith.andi %689, %691 : vector<1x256xi1>
    %c16_i32_250 = arith.constant 16 : i32
    %693 = vector.broadcast %c16_i32_250 : i32 to vector<1x256xi32>
    %694 = arith.cmpi slt, %684, %693 : vector<1x256xi32>
    %695 = arith.andi %692, %694 : vector<1x256xi1>
    %c2_i32_251 = arith.constant 2 : i32
    %696 = vector.broadcast %c2_i32_251 : i32 to vector<64x1xi32>
    %697 = arith.muli %696, %373 : vector<64x1xi32>
    %698 = vector.broadcast %682 : vector<1x256xi32> to vector<64x256xi32>
    %699 = vector.broadcast %697 : vector<64x1xi32> to vector<64x256xi32>
    %700 = arith.cmpi sge, %698, %699 : vector<64x256xi32>
    %c2_i32_252 = arith.constant 2 : i32
    %701 = vector.broadcast %c2_i32_252 : i32 to vector<64x1xi32>
    %702 = arith.muli %701, %373 : vector<64x1xi32>
    %c1_i32_253 = arith.constant 1 : i32
    %703 = vector.broadcast %c1_i32_253 : i32 to vector<64x1xi32>
    %704 = arith.addi %702, %703 : vector<64x1xi32>
    %705 = vector.broadcast %682 : vector<1x256xi32> to vector<64x256xi32>
    %706 = vector.broadcast %704 : vector<64x1xi32> to vector<64x256xi32>
    %707 = arith.cmpi sle, %705, %706 : vector<64x256xi32>
    %708 = arith.andi %700, %707 : vector<64x256xi1>
    %c2_i32_254 = arith.constant 2 : i32
    %709 = vector.broadcast %c2_i32_254 : i32 to vector<64x1xi32>
    %710 = arith.muli %709, %376 : vector<64x1xi32>
    %711 = vector.broadcast %684 : vector<1x256xi32> to vector<64x256xi32>
    %712 = vector.broadcast %710 : vector<64x1xi32> to vector<64x256xi32>
    %713 = arith.cmpi sge, %711, %712 : vector<64x256xi32>
    %714 = arith.andi %708, %713 : vector<64x256xi1>
    %c2_i32_255 = arith.constant 2 : i32
    %715 = vector.broadcast %c2_i32_255 : i32 to vector<64x1xi32>
    %716 = arith.muli %715, %376 : vector<64x1xi32>
    %c1_i32_256 = arith.constant 1 : i32
    %717 = vector.broadcast %c1_i32_256 : i32 to vector<64x1xi32>
    %718 = arith.addi %716, %717 : vector<64x1xi32>
    %719 = vector.broadcast %684 : vector<1x256xi32> to vector<64x256xi32>
    %720 = vector.broadcast %718 : vector<64x1xi32> to vector<64x256xi32>
    %721 = arith.cmpi sle, %719, %720 : vector<64x256xi32>
    %722 = arith.andi %714, %721 : vector<64x256xi1>
    %723 = vector.broadcast %695 : vector<1x256xi1> to vector<64x256xi1>
    %724 = arith.andi %722, %723 : vector<64x256xi1>
    %cst_257 = arith.constant 1.000000e+00 : f32
    %cst_258 = arith.constant 0.000000e+00 : f32
    %725 = vector.broadcast %cst_257 : f32 to vector<64x256xf32>
    %726 = vector.broadcast %cst_258 : f32 to vector<64x256xf32>
    %727 = arith.select %724, %725, %726 : vector<64x256xi1>, vector<64x256xf32>
    %cst_259 = arith.constant dense<0.000000e+00> : vector<16x256xf32>
    %728 = tpu.matmul %329, %727, %cst_259 {dimension_numbers = #tpu.dot_dimension_numbers<[1], [0], [0], [1], [0, 0, 1, 1], [], []>} : vector<16x64xf32>, vector<64x256xf32>, vector<16x256xf32> -> vector<16x256xf32>
    %729 = vector.extract_strided_slice %4 {offsets = [0, 4], sizes = [16, 1], strides = [1, 1]} : vector<16x9xf32> to vector<16x1xf32>
    %730 = vector.broadcast %729 : vector<16x1xf32> to vector<16x256xf32>
    %731 = arith.mulf %728, %730 : vector<16x256xf32>
    %732 = arith.addf %680, %731 : vector<16x256xf32>
    %c0_i32_260 = arith.constant 0 : i32
    %733 = vector.broadcast %c0_i32_260 : i32 to vector<1x256xi32>
    %734 = arith.addi %468, %733 : vector<1x256xi32>
    %c1_i32_261 = arith.constant 1 : i32
    %735 = vector.broadcast %c1_i32_261 : i32 to vector<1x256xi32>
    %736 = arith.addi %471, %735 : vector<1x256xi32>
    %c0_i32_262 = arith.constant 0 : i32
    %737 = vector.broadcast %c0_i32_262 : i32 to vector<1x256xi32>
    %738 = arith.cmpi sge, %734, %737 : vector<1x256xi32>
    %c16_i32_263 = arith.constant 16 : i32
    %739 = vector.broadcast %c16_i32_263 : i32 to vector<1x256xi32>
    %740 = arith.cmpi slt, %734, %739 : vector<1x256xi32>
    %741 = arith.andi %738, %740 : vector<1x256xi1>
    %c0_i32_264 = arith.constant 0 : i32
    %742 = vector.broadcast %c0_i32_264 : i32 to vector<1x256xi32>
    %743 = arith.cmpi sge, %736, %742 : vector<1x256xi32>
    %744 = arith.andi %741, %743 : vector<1x256xi1>
    %c16_i32_265 = arith.constant 16 : i32
    %745 = vector.broadcast %c16_i32_265 : i32 to vector<1x256xi32>
    %746 = arith.cmpi slt, %736, %745 : vector<1x256xi32>
    %747 = arith.andi %744, %746 : vector<1x256xi1>
    %c2_i32_266 = arith.constant 2 : i32
    %748 = vector.broadcast %c2_i32_266 : i32 to vector<64x1xi32>
    %749 = arith.muli %748, %373 : vector<64x1xi32>
    %750 = vector.broadcast %734 : vector<1x256xi32> to vector<64x256xi32>
    %751 = vector.broadcast %749 : vector<64x1xi32> to vector<64x256xi32>
    %752 = arith.cmpi sge, %750, %751 : vector<64x256xi32>
    %c2_i32_267 = arith.constant 2 : i32
    %753 = vector.broadcast %c2_i32_267 : i32 to vector<64x1xi32>
    %754 = arith.muli %753, %373 : vector<64x1xi32>
    %c1_i32_268 = arith.constant 1 : i32
    %755 = vector.broadcast %c1_i32_268 : i32 to vector<64x1xi32>
    %756 = arith.addi %754, %755 : vector<64x1xi32>
    %757 = vector.broadcast %734 : vector<1x256xi32> to vector<64x256xi32>
    %758 = vector.broadcast %756 : vector<64x1xi32> to vector<64x256xi32>
    %759 = arith.cmpi sle, %757, %758 : vector<64x256xi32>
    %760 = arith.andi %752, %759 : vector<64x256xi1>
    %c2_i32_269 = arith.constant 2 : i32
    %761 = vector.broadcast %c2_i32_269 : i32 to vector<64x1xi32>
    %762 = arith.muli %761, %376 : vector<64x1xi32>
    %763 = vector.broadcast %736 : vector<1x256xi32> to vector<64x256xi32>
    %764 = vector.broadcast %762 : vector<64x1xi32> to vector<64x256xi32>
    %765 = arith.cmpi sge, %763, %764 : vector<64x256xi32>
    %766 = arith.andi %760, %765 : vector<64x256xi1>
    %c2_i32_270 = arith.constant 2 : i32
    %767 = vector.broadcast %c2_i32_270 : i32 to vector<64x1xi32>
    %768 = arith.muli %767, %376 : vector<64x1xi32>
    %c1_i32_271 = arith.constant 1 : i32
    %769 = vector.broadcast %c1_i32_271 : i32 to vector<64x1xi32>
    %770 = arith.addi %768, %769 : vector<64x1xi32>
    %771 = vector.broadcast %736 : vector<1x256xi32> to vector<64x256xi32>
    %772 = vector.broadcast %770 : vector<64x1xi32> to vector<64x256xi32>
    %773 = arith.cmpi sle, %771, %772 : vector<64x256xi32>
    %774 = arith.andi %766, %773 : vector<64x256xi1>
    %775 = vector.broadcast %747 : vector<1x256xi1> to vector<64x256xi1>
    %776 = arith.andi %774, %775 : vector<64x256xi1>
    %cst_272 = arith.constant 1.000000e+00 : f32
    %cst_273 = arith.constant 0.000000e+00 : f32
    %777 = vector.broadcast %cst_272 : f32 to vector<64x256xf32>
    %778 = vector.broadcast %cst_273 : f32 to vector<64x256xf32>
    %779 = arith.select %776, %777, %778 : vector<64x256xi1>, vector<64x256xf32>
    %cst_274 = arith.constant dense<0.000000e+00> : vector<16x256xf32>
    %780 = tpu.matmul %329, %779, %cst_274 {dimension_numbers = #tpu.dot_dimension_numbers<[1], [0], [0], [1], [0, 0, 1, 1], [], []>} : vector<16x64xf32>, vector<64x256xf32>, vector<16x256xf32> -> vector<16x256xf32>
    %781 = vector.extract_strided_slice %4 {offsets = [0, 5], sizes = [16, 1], strides = [1, 1]} : vector<16x9xf32> to vector<16x1xf32>
    %782 = vector.broadcast %781 : vector<16x1xf32> to vector<16x256xf32>
    %783 = arith.mulf %780, %782 : vector<16x256xf32>
    %784 = arith.addf %732, %783 : vector<16x256xf32>
    %c1_i32_275 = arith.constant 1 : i32
    %785 = vector.broadcast %c1_i32_275 : i32 to vector<1x256xi32>
    %786 = arith.addi %468, %785 : vector<1x256xi32>
    %c-1_i32_276 = arith.constant -1 : i32
    %787 = vector.broadcast %c-1_i32_276 : i32 to vector<1x256xi32>
    %788 = arith.addi %471, %787 : vector<1x256xi32>
    %c0_i32_277 = arith.constant 0 : i32
    %789 = vector.broadcast %c0_i32_277 : i32 to vector<1x256xi32>
    %790 = arith.cmpi sge, %786, %789 : vector<1x256xi32>
    %c16_i32_278 = arith.constant 16 : i32
    %791 = vector.broadcast %c16_i32_278 : i32 to vector<1x256xi32>
    %792 = arith.cmpi slt, %786, %791 : vector<1x256xi32>
    %793 = arith.andi %790, %792 : vector<1x256xi1>
    %c0_i32_279 = arith.constant 0 : i32
    %794 = vector.broadcast %c0_i32_279 : i32 to vector<1x256xi32>
    %795 = arith.cmpi sge, %788, %794 : vector<1x256xi32>
    %796 = arith.andi %793, %795 : vector<1x256xi1>
    %c16_i32_280 = arith.constant 16 : i32
    %797 = vector.broadcast %c16_i32_280 : i32 to vector<1x256xi32>
    %798 = arith.cmpi slt, %788, %797 : vector<1x256xi32>
    %799 = arith.andi %796, %798 : vector<1x256xi1>
    %c2_i32_281 = arith.constant 2 : i32
    %800 = vector.broadcast %c2_i32_281 : i32 to vector<64x1xi32>
    %801 = arith.muli %800, %373 : vector<64x1xi32>
    %802 = vector.broadcast %786 : vector<1x256xi32> to vector<64x256xi32>
    %803 = vector.broadcast %801 : vector<64x1xi32> to vector<64x256xi32>
    %804 = arith.cmpi sge, %802, %803 : vector<64x256xi32>
    %c2_i32_282 = arith.constant 2 : i32
    %805 = vector.broadcast %c2_i32_282 : i32 to vector<64x1xi32>
    %806 = arith.muli %805, %373 : vector<64x1xi32>
    %c1_i32_283 = arith.constant 1 : i32
    %807 = vector.broadcast %c1_i32_283 : i32 to vector<64x1xi32>
    %808 = arith.addi %806, %807 : vector<64x1xi32>
    %809 = vector.broadcast %786 : vector<1x256xi32> to vector<64x256xi32>
    %810 = vector.broadcast %808 : vector<64x1xi32> to vector<64x256xi32>
    %811 = arith.cmpi sle, %809, %810 : vector<64x256xi32>
    %812 = arith.andi %804, %811 : vector<64x256xi1>
    %c2_i32_284 = arith.constant 2 : i32
    %813 = vector.broadcast %c2_i32_284 : i32 to vector<64x1xi32>
    %814 = arith.muli %813, %376 : vector<64x1xi32>
    %815 = vector.broadcast %788 : vector<1x256xi32> to vector<64x256xi32>
    %816 = vector.broadcast %814 : vector<64x1xi32> to vector<64x256xi32>
    %817 = arith.cmpi sge, %815, %816 : vector<64x256xi32>
    %818 = arith.andi %812, %817 : vector<64x256xi1>
    %c2_i32_285 = arith.constant 2 : i32
    %819 = vector.broadcast %c2_i32_285 : i32 to vector<64x1xi32>
    %820 = arith.muli %819, %376 : vector<64x1xi32>
    %c1_i32_286 = arith.constant 1 : i32
    %821 = vector.broadcast %c1_i32_286 : i32 to vector<64x1xi32>
    %822 = arith.addi %820, %821 : vector<64x1xi32>
    %823 = vector.broadcast %788 : vector<1x256xi32> to vector<64x256xi32>
    %824 = vector.broadcast %822 : vector<64x1xi32> to vector<64x256xi32>
    %825 = arith.cmpi sle, %823, %824 : vector<64x256xi32>
    %826 = arith.andi %818, %825 : vector<64x256xi1>
    %827 = vector.broadcast %799 : vector<1x256xi1> to vector<64x256xi1>
    %828 = arith.andi %826, %827 : vector<64x256xi1>
    %cst_287 = arith.constant 1.000000e+00 : f32
    %cst_288 = arith.constant 0.000000e+00 : f32
    %829 = vector.broadcast %cst_287 : f32 to vector<64x256xf32>
    %830 = vector.broadcast %cst_288 : f32 to vector<64x256xf32>
    %831 = arith.select %828, %829, %830 : vector<64x256xi1>, vector<64x256xf32>
    %cst_289 = arith.constant dense<0.000000e+00> : vector<16x256xf32>
    %832 = tpu.matmul %329, %831, %cst_289 {dimension_numbers = #tpu.dot_dimension_numbers<[1], [0], [0], [1], [0, 0, 1, 1], [], []>} : vector<16x64xf32>, vector<64x256xf32>, vector<16x256xf32> -> vector<16x256xf32>
    %833 = vector.extract_strided_slice %4 {offsets = [0, 6], sizes = [16, 1], strides = [1, 1]} : vector<16x9xf32> to vector<16x1xf32>
    %834 = vector.broadcast %833 : vector<16x1xf32> to vector<16x256xf32>
    %835 = arith.mulf %832, %834 : vector<16x256xf32>
    %836 = arith.addf %784, %835 : vector<16x256xf32>
    %c1_i32_290 = arith.constant 1 : i32
    %837 = vector.broadcast %c1_i32_290 : i32 to vector<1x256xi32>
    %838 = arith.addi %468, %837 : vector<1x256xi32>
    %c0_i32_291 = arith.constant 0 : i32
    %839 = vector.broadcast %c0_i32_291 : i32 to vector<1x256xi32>
    %840 = arith.addi %471, %839 : vector<1x256xi32>
    %c0_i32_292 = arith.constant 0 : i32
    %841 = vector.broadcast %c0_i32_292 : i32 to vector<1x256xi32>
    %842 = arith.cmpi sge, %838, %841 : vector<1x256xi32>
    %c16_i32_293 = arith.constant 16 : i32
    %843 = vector.broadcast %c16_i32_293 : i32 to vector<1x256xi32>
    %844 = arith.cmpi slt, %838, %843 : vector<1x256xi32>
    %845 = arith.andi %842, %844 : vector<1x256xi1>
    %c0_i32_294 = arith.constant 0 : i32
    %846 = vector.broadcast %c0_i32_294 : i32 to vector<1x256xi32>
    %847 = arith.cmpi sge, %840, %846 : vector<1x256xi32>
    %848 = arith.andi %845, %847 : vector<1x256xi1>
    %c16_i32_295 = arith.constant 16 : i32
    %849 = vector.broadcast %c16_i32_295 : i32 to vector<1x256xi32>
    %850 = arith.cmpi slt, %840, %849 : vector<1x256xi32>
    %851 = arith.andi %848, %850 : vector<1x256xi1>
    %c2_i32_296 = arith.constant 2 : i32
    %852 = vector.broadcast %c2_i32_296 : i32 to vector<64x1xi32>
    %853 = arith.muli %852, %373 : vector<64x1xi32>
    %854 = vector.broadcast %838 : vector<1x256xi32> to vector<64x256xi32>
    %855 = vector.broadcast %853 : vector<64x1xi32> to vector<64x256xi32>
    %856 = arith.cmpi sge, %854, %855 : vector<64x256xi32>
    %c2_i32_297 = arith.constant 2 : i32
    %857 = vector.broadcast %c2_i32_297 : i32 to vector<64x1xi32>
    %858 = arith.muli %857, %373 : vector<64x1xi32>
    %c1_i32_298 = arith.constant 1 : i32
    %859 = vector.broadcast %c1_i32_298 : i32 to vector<64x1xi32>
    %860 = arith.addi %858, %859 : vector<64x1xi32>
    %861 = vector.broadcast %838 : vector<1x256xi32> to vector<64x256xi32>
    %862 = vector.broadcast %860 : vector<64x1xi32> to vector<64x256xi32>
    %863 = arith.cmpi sle, %861, %862 : vector<64x256xi32>
    %864 = arith.andi %856, %863 : vector<64x256xi1>
    %c2_i32_299 = arith.constant 2 : i32
    %865 = vector.broadcast %c2_i32_299 : i32 to vector<64x1xi32>
    %866 = arith.muli %865, %376 : vector<64x1xi32>
    %867 = vector.broadcast %840 : vector<1x256xi32> to vector<64x256xi32>
    %868 = vector.broadcast %866 : vector<64x1xi32> to vector<64x256xi32>
    %869 = arith.cmpi sge, %867, %868 : vector<64x256xi32>
    %870 = arith.andi %864, %869 : vector<64x256xi1>
    %c2_i32_300 = arith.constant 2 : i32
    %871 = vector.broadcast %c2_i32_300 : i32 to vector<64x1xi32>
    %872 = arith.muli %871, %376 : vector<64x1xi32>
    %c1_i32_301 = arith.constant 1 : i32
    %873 = vector.broadcast %c1_i32_301 : i32 to vector<64x1xi32>
    %874 = arith.addi %872, %873 : vector<64x1xi32>
    %875 = vector.broadcast %840 : vector<1x256xi32> to vector<64x256xi32>
    %876 = vector.broadcast %874 : vector<64x1xi32> to vector<64x256xi32>
    %877 = arith.cmpi sle, %875, %876 : vector<64x256xi32>
    %878 = arith.andi %870, %877 : vector<64x256xi1>
    %879 = vector.broadcast %851 : vector<1x256xi1> to vector<64x256xi1>
    %880 = arith.andi %878, %879 : vector<64x256xi1>
    %cst_302 = arith.constant 1.000000e+00 : f32
    %cst_303 = arith.constant 0.000000e+00 : f32
    %881 = vector.broadcast %cst_302 : f32 to vector<64x256xf32>
    %882 = vector.broadcast %cst_303 : f32 to vector<64x256xf32>
    %883 = arith.select %880, %881, %882 : vector<64x256xi1>, vector<64x256xf32>
    %cst_304 = arith.constant dense<0.000000e+00> : vector<16x256xf32>
    %884 = tpu.matmul %329, %883, %cst_304 {dimension_numbers = #tpu.dot_dimension_numbers<[1], [0], [0], [1], [0, 0, 1, 1], [], []>} : vector<16x64xf32>, vector<64x256xf32>, vector<16x256xf32> -> vector<16x256xf32>
    %885 = vector.extract_strided_slice %4 {offsets = [0, 7], sizes = [16, 1], strides = [1, 1]} : vector<16x9xf32> to vector<16x1xf32>
    %886 = vector.broadcast %885 : vector<16x1xf32> to vector<16x256xf32>
    %887 = arith.mulf %884, %886 : vector<16x256xf32>
    %888 = arith.addf %836, %887 : vector<16x256xf32>
    %c1_i32_305 = arith.constant 1 : i32
    %889 = vector.broadcast %c1_i32_305 : i32 to vector<1x256xi32>
    %890 = arith.addi %468, %889 : vector<1x256xi32>
    %c1_i32_306 = arith.constant 1 : i32
    %891 = vector.broadcast %c1_i32_306 : i32 to vector<1x256xi32>
    %892 = arith.addi %471, %891 : vector<1x256xi32>
    %c0_i32_307 = arith.constant 0 : i32
    %893 = vector.broadcast %c0_i32_307 : i32 to vector<1x256xi32>
    %894 = arith.cmpi sge, %890, %893 : vector<1x256xi32>
    %c16_i32_308 = arith.constant 16 : i32
    %895 = vector.broadcast %c16_i32_308 : i32 to vector<1x256xi32>
    %896 = arith.cmpi slt, %890, %895 : vector<1x256xi32>
    %897 = arith.andi %894, %896 : vector<1x256xi1>
    %c0_i32_309 = arith.constant 0 : i32
    %898 = vector.broadcast %c0_i32_309 : i32 to vector<1x256xi32>
    %899 = arith.cmpi sge, %892, %898 : vector<1x256xi32>
    %900 = arith.andi %897, %899 : vector<1x256xi1>
    %c16_i32_310 = arith.constant 16 : i32
    %901 = vector.broadcast %c16_i32_310 : i32 to vector<1x256xi32>
    %902 = arith.cmpi slt, %892, %901 : vector<1x256xi32>
    %903 = arith.andi %900, %902 : vector<1x256xi1>
    %c2_i32_311 = arith.constant 2 : i32
    %904 = vector.broadcast %c2_i32_311 : i32 to vector<64x1xi32>
    %905 = arith.muli %904, %373 : vector<64x1xi32>
    %906 = vector.broadcast %890 : vector<1x256xi32> to vector<64x256xi32>
    %907 = vector.broadcast %905 : vector<64x1xi32> to vector<64x256xi32>
    %908 = arith.cmpi sge, %906, %907 : vector<64x256xi32>
    %c2_i32_312 = arith.constant 2 : i32
    %909 = vector.broadcast %c2_i32_312 : i32 to vector<64x1xi32>
    %910 = arith.muli %909, %373 : vector<64x1xi32>
    %c1_i32_313 = arith.constant 1 : i32
    %911 = vector.broadcast %c1_i32_313 : i32 to vector<64x1xi32>
    %912 = arith.addi %910, %911 : vector<64x1xi32>
    %913 = vector.broadcast %890 : vector<1x256xi32> to vector<64x256xi32>
    %914 = vector.broadcast %912 : vector<64x1xi32> to vector<64x256xi32>
    %915 = arith.cmpi sle, %913, %914 : vector<64x256xi32>
    %916 = arith.andi %908, %915 : vector<64x256xi1>
    %c2_i32_314 = arith.constant 2 : i32
    %917 = vector.broadcast %c2_i32_314 : i32 to vector<64x1xi32>
    %918 = arith.muli %917, %376 : vector<64x1xi32>
    %919 = vector.broadcast %892 : vector<1x256xi32> to vector<64x256xi32>
    %920 = vector.broadcast %918 : vector<64x1xi32> to vector<64x256xi32>
    %921 = arith.cmpi sge, %919, %920 : vector<64x256xi32>
    %922 = arith.andi %916, %921 : vector<64x256xi1>
    %c2_i32_315 = arith.constant 2 : i32
    %923 = vector.broadcast %c2_i32_315 : i32 to vector<64x1xi32>
    %924 = arith.muli %923, %376 : vector<64x1xi32>
    %c1_i32_316 = arith.constant 1 : i32
    %925 = vector.broadcast %c1_i32_316 : i32 to vector<64x1xi32>
    %926 = arith.addi %924, %925 : vector<64x1xi32>
    %927 = vector.broadcast %892 : vector<1x256xi32> to vector<64x256xi32>
    %928 = vector.broadcast %926 : vector<64x1xi32> to vector<64x256xi32>
    %929 = arith.cmpi sle, %927, %928 : vector<64x256xi32>
    %930 = arith.andi %922, %929 : vector<64x256xi1>
    %931 = vector.broadcast %903 : vector<1x256xi1> to vector<64x256xi1>
    %932 = arith.andi %930, %931 : vector<64x256xi1>
    %cst_317 = arith.constant 1.000000e+00 : f32
    %cst_318 = arith.constant 0.000000e+00 : f32
    %933 = vector.broadcast %cst_317 : f32 to vector<64x256xf32>
    %934 = vector.broadcast %cst_318 : f32 to vector<64x256xf32>
    %935 = arith.select %932, %933, %934 : vector<64x256xi1>, vector<64x256xf32>
    %cst_319 = arith.constant dense<0.000000e+00> : vector<16x256xf32>
    %936 = tpu.matmul %329, %935, %cst_319 {dimension_numbers = #tpu.dot_dimension_numbers<[1], [0], [0], [1], [0, 0, 1, 1], [], []>} : vector<16x64xf32>, vector<64x256xf32>, vector<16x256xf32> -> vector<16x256xf32>
    %937 = vector.extract_strided_slice %4 {offsets = [0, 8], sizes = [16, 1], strides = [1, 1]} : vector<16x9xf32> to vector<16x1xf32>
    %938 = vector.broadcast %937 : vector<16x1xf32> to vector<16x256xf32>
    %939 = arith.mulf %936, %938 : vector<16x256xf32>
    %940 = arith.addf %888, %939 : vector<16x256xf32>
    %cst_320 = arith.constant dense<0.000000e+00> : vector<256xf32>
    %941 = vector.multi_reduction <add>, %940, %cst_320 [0] : vector<16x256xf32> to vector<256xf32>
    %942 = vector.shape_cast %941 : vector<256xf32> to vector<1x256xf32>
    %943 = vector.broadcast %5 : vector<1x1xf32> to vector<1x256xf32>
    %944 = arith.addf %942, %943 : vector<1x256xf32>
    %cst_321 = arith.constant 0.000000e+00 : f32
    %945 = vector.broadcast %cst_321 : f32 to vector<1x256xf32>
    %946 = arith.maximumf %944, %945 : vector<1x256xf32>
    %947 = tpu.iota {dimensions = array<i32: 0>} : vector<32x1xi32>
    %c2_i32_322 = arith.constant 2 : i32
    %948 = vector.broadcast %c2_i32_322 : i32 to vector<1x256xi32>
    %949 = arith.muli %948, %468 : vector<1x256xi32>
    %950 = vector.broadcast %947 : vector<32x1xi32> to vector<32x256xi32>
    %951 = vector.broadcast %949 : vector<1x256xi32> to vector<32x256xi32>
    %952 = arith.cmpi sge, %950, %951 : vector<32x256xi32>
    %c2_i32_323 = arith.constant 2 : i32
    %953 = vector.broadcast %c2_i32_323 : i32 to vector<1x256xi32>
    %954 = arith.muli %953, %468 : vector<1x256xi32>
    %c1_i32_324 = arith.constant 1 : i32
    %955 = vector.broadcast %c1_i32_324 : i32 to vector<1x256xi32>
    %956 = arith.addi %954, %955 : vector<1x256xi32>
    %957 = vector.broadcast %947 : vector<32x1xi32> to vector<32x256xi32>
    %958 = vector.broadcast %956 : vector<1x256xi32> to vector<32x256xi32>
    %959 = arith.cmpi sle, %957, %958 : vector<32x256xi32>
    %960 = arith.andi %952, %959 : vector<32x256xi1>
    %cst_325 = arith.constant 1.000000e+00 : f32
    %cst_326 = arith.constant 0.000000e+00 : f32
    %961 = vector.broadcast %cst_325 : f32 to vector<32x256xf32>
    %962 = vector.broadcast %cst_326 : f32 to vector<32x256xf32>
    %963 = arith.select %960, %961, %962 : vector<32x256xi1>, vector<32x256xf32>
    %964 = tpu.iota {dimensions = array<i32: 0>} : vector<256x1xi32>
    %c0_i32_327 = arith.constant 0 : i32
    %965 = vector.broadcast %c0_i32_327 : i32 to vector<256x1xi32>
    %c16_i32_328 = arith.constant 16 : i32
    %966 = vector.broadcast %c16_i32_328 : i32 to vector<256x1xi32>
    %967 = arith.cmpi sge, %964, %966 : vector<256x1xi32>
    %c1_i32_329 = arith.constant 1 : i32
    %c0_i32_330 = arith.constant 0 : i32
    %968 = vector.broadcast %c1_i32_329 : i32 to vector<256x1xi32>
    %969 = vector.broadcast %c0_i32_330 : i32 to vector<256x1xi32>
    %970 = arith.select %967, %968, %969 : vector<256x1xi1>, vector<256x1xi32>
    %971 = arith.addi %965, %970 : vector<256x1xi32>
    %c32_i32_331 = arith.constant 32 : i32
    %972 = vector.broadcast %c32_i32_331 : i32 to vector<256x1xi32>
    %973 = arith.cmpi sge, %964, %972 : vector<256x1xi32>
    %c1_i32_332 = arith.constant 1 : i32
    %c0_i32_333 = arith.constant 0 : i32
    %974 = vector.broadcast %c1_i32_332 : i32 to vector<256x1xi32>
    %975 = vector.broadcast %c0_i32_333 : i32 to vector<256x1xi32>
    %976 = arith.select %973, %974, %975 : vector<256x1xi1>, vector<256x1xi32>
    %977 = arith.addi %971, %976 : vector<256x1xi32>
    %c48_i32_334 = arith.constant 48 : i32
    %978 = vector.broadcast %c48_i32_334 : i32 to vector<256x1xi32>
    %979 = arith.cmpi sge, %964, %978 : vector<256x1xi32>
    %c1_i32_335 = arith.constant 1 : i32
    %c0_i32_336 = arith.constant 0 : i32
    %980 = vector.broadcast %c1_i32_335 : i32 to vector<256x1xi32>
    %981 = vector.broadcast %c0_i32_336 : i32 to vector<256x1xi32>
    %982 = arith.select %979, %980, %981 : vector<256x1xi1>, vector<256x1xi32>
    %983 = arith.addi %977, %982 : vector<256x1xi32>
    %c64_i32_337 = arith.constant 64 : i32
    %984 = vector.broadcast %c64_i32_337 : i32 to vector<256x1xi32>
    %985 = arith.cmpi sge, %964, %984 : vector<256x1xi32>
    %c1_i32_338 = arith.constant 1 : i32
    %c0_i32_339 = arith.constant 0 : i32
    %986 = vector.broadcast %c1_i32_338 : i32 to vector<256x1xi32>
    %987 = vector.broadcast %c0_i32_339 : i32 to vector<256x1xi32>
    %988 = arith.select %985, %986, %987 : vector<256x1xi1>, vector<256x1xi32>
    %989 = arith.addi %983, %988 : vector<256x1xi32>
    %c80_i32_340 = arith.constant 80 : i32
    %990 = vector.broadcast %c80_i32_340 : i32 to vector<256x1xi32>
    %991 = arith.cmpi sge, %964, %990 : vector<256x1xi32>
    %c1_i32_341 = arith.constant 1 : i32
    %c0_i32_342 = arith.constant 0 : i32
    %992 = vector.broadcast %c1_i32_341 : i32 to vector<256x1xi32>
    %993 = vector.broadcast %c0_i32_342 : i32 to vector<256x1xi32>
    %994 = arith.select %991, %992, %993 : vector<256x1xi1>, vector<256x1xi32>
    %995 = arith.addi %989, %994 : vector<256x1xi32>
    %c96_i32_343 = arith.constant 96 : i32
    %996 = vector.broadcast %c96_i32_343 : i32 to vector<256x1xi32>
    %997 = arith.cmpi sge, %964, %996 : vector<256x1xi32>
    %c1_i32_344 = arith.constant 1 : i32
    %c0_i32_345 = arith.constant 0 : i32
    %998 = vector.broadcast %c1_i32_344 : i32 to vector<256x1xi32>
    %999 = vector.broadcast %c0_i32_345 : i32 to vector<256x1xi32>
    %1000 = arith.select %997, %998, %999 : vector<256x1xi1>, vector<256x1xi32>
    %1001 = arith.addi %995, %1000 : vector<256x1xi32>
    %c112_i32_346 = arith.constant 112 : i32
    %1002 = vector.broadcast %c112_i32_346 : i32 to vector<256x1xi32>
    %1003 = arith.cmpi sge, %964, %1002 : vector<256x1xi32>
    %c1_i32_347 = arith.constant 1 : i32
    %c0_i32_348 = arith.constant 0 : i32
    %1004 = vector.broadcast %c1_i32_347 : i32 to vector<256x1xi32>
    %1005 = vector.broadcast %c0_i32_348 : i32 to vector<256x1xi32>
    %1006 = arith.select %1003, %1004, %1005 : vector<256x1xi1>, vector<256x1xi32>
    %1007 = arith.addi %1001, %1006 : vector<256x1xi32>
    %c128_i32_349 = arith.constant 128 : i32
    %1008 = vector.broadcast %c128_i32_349 : i32 to vector<256x1xi32>
    %1009 = arith.cmpi sge, %964, %1008 : vector<256x1xi32>
    %c1_i32_350 = arith.constant 1 : i32
    %c0_i32_351 = arith.constant 0 : i32
    %1010 = vector.broadcast %c1_i32_350 : i32 to vector<256x1xi32>
    %1011 = vector.broadcast %c0_i32_351 : i32 to vector<256x1xi32>
    %1012 = arith.select %1009, %1010, %1011 : vector<256x1xi1>, vector<256x1xi32>
    %1013 = arith.addi %1007, %1012 : vector<256x1xi32>
    %c144_i32_352 = arith.constant 144 : i32
    %1014 = vector.broadcast %c144_i32_352 : i32 to vector<256x1xi32>
    %1015 = arith.cmpi sge, %964, %1014 : vector<256x1xi32>
    %c1_i32_353 = arith.constant 1 : i32
    %c0_i32_354 = arith.constant 0 : i32
    %1016 = vector.broadcast %c1_i32_353 : i32 to vector<256x1xi32>
    %1017 = vector.broadcast %c0_i32_354 : i32 to vector<256x1xi32>
    %1018 = arith.select %1015, %1016, %1017 : vector<256x1xi1>, vector<256x1xi32>
    %1019 = arith.addi %1013, %1018 : vector<256x1xi32>
    %c160_i32_355 = arith.constant 160 : i32
    %1020 = vector.broadcast %c160_i32_355 : i32 to vector<256x1xi32>
    %1021 = arith.cmpi sge, %964, %1020 : vector<256x1xi32>
    %c1_i32_356 = arith.constant 1 : i32
    %c0_i32_357 = arith.constant 0 : i32
    %1022 = vector.broadcast %c1_i32_356 : i32 to vector<256x1xi32>
    %1023 = vector.broadcast %c0_i32_357 : i32 to vector<256x1xi32>
    %1024 = arith.select %1021, %1022, %1023 : vector<256x1xi1>, vector<256x1xi32>
    %1025 = arith.addi %1019, %1024 : vector<256x1xi32>
    %c176_i32_358 = arith.constant 176 : i32
    %1026 = vector.broadcast %c176_i32_358 : i32 to vector<256x1xi32>
    %1027 = arith.cmpi sge, %964, %1026 : vector<256x1xi32>
    %c1_i32_359 = arith.constant 1 : i32
    %c0_i32_360 = arith.constant 0 : i32
    %1028 = vector.broadcast %c1_i32_359 : i32 to vector<256x1xi32>
    %1029 = vector.broadcast %c0_i32_360 : i32 to vector<256x1xi32>
    %1030 = arith.select %1027, %1028, %1029 : vector<256x1xi1>, vector<256x1xi32>
    %1031 = arith.addi %1025, %1030 : vector<256x1xi32>
    %c192_i32_361 = arith.constant 192 : i32
    %1032 = vector.broadcast %c192_i32_361 : i32 to vector<256x1xi32>
    %1033 = arith.cmpi sge, %964, %1032 : vector<256x1xi32>
    %c1_i32_362 = arith.constant 1 : i32
    %c0_i32_363 = arith.constant 0 : i32
    %1034 = vector.broadcast %c1_i32_362 : i32 to vector<256x1xi32>
    %1035 = vector.broadcast %c0_i32_363 : i32 to vector<256x1xi32>
    %1036 = arith.select %1033, %1034, %1035 : vector<256x1xi1>, vector<256x1xi32>
    %1037 = arith.addi %1031, %1036 : vector<256x1xi32>
    %c208_i32_364 = arith.constant 208 : i32
    %1038 = vector.broadcast %c208_i32_364 : i32 to vector<256x1xi32>
    %1039 = arith.cmpi sge, %964, %1038 : vector<256x1xi32>
    %c1_i32_365 = arith.constant 1 : i32
    %c0_i32_366 = arith.constant 0 : i32
    %1040 = vector.broadcast %c1_i32_365 : i32 to vector<256x1xi32>
    %1041 = vector.broadcast %c0_i32_366 : i32 to vector<256x1xi32>
    %1042 = arith.select %1039, %1040, %1041 : vector<256x1xi1>, vector<256x1xi32>
    %1043 = arith.addi %1037, %1042 : vector<256x1xi32>
    %c224_i32_367 = arith.constant 224 : i32
    %1044 = vector.broadcast %c224_i32_367 : i32 to vector<256x1xi32>
    %1045 = arith.cmpi sge, %964, %1044 : vector<256x1xi32>
    %c1_i32_368 = arith.constant 1 : i32
    %c0_i32_369 = arith.constant 0 : i32
    %1046 = vector.broadcast %c1_i32_368 : i32 to vector<256x1xi32>
    %1047 = vector.broadcast %c0_i32_369 : i32 to vector<256x1xi32>
    %1048 = arith.select %1045, %1046, %1047 : vector<256x1xi1>, vector<256x1xi32>
    %1049 = arith.addi %1043, %1048 : vector<256x1xi32>
    %c240_i32_370 = arith.constant 240 : i32
    %1050 = vector.broadcast %c240_i32_370 : i32 to vector<256x1xi32>
    %1051 = arith.cmpi sge, %964, %1050 : vector<256x1xi32>
    %c1_i32_371 = arith.constant 1 : i32
    %c0_i32_372 = arith.constant 0 : i32
    %1052 = vector.broadcast %c1_i32_371 : i32 to vector<256x1xi32>
    %1053 = vector.broadcast %c0_i32_372 : i32 to vector<256x1xi32>
    %1054 = arith.select %1051, %1052, %1053 : vector<256x1xi1>, vector<256x1xi32>
    %1055 = arith.addi %1049, %1054 : vector<256x1xi32>
    %c16_i32_373 = arith.constant 16 : i32
    %1056 = vector.broadcast %c16_i32_373 : i32 to vector<256x1xi32>
    %1057 = arith.muli %1055, %1056 : vector<256x1xi32>
    %1058 = arith.subi %964, %1057 : vector<256x1xi32>
    %1059 = tpu.iota {dimensions = array<i32: 1>} : vector<1x32xi32>
    %c2_i32_374 = arith.constant 2 : i32
    %1060 = vector.broadcast %c2_i32_374 : i32 to vector<256x1xi32>
    %1061 = arith.muli %1060, %1058 : vector<256x1xi32>
    %1062 = vector.broadcast %1059 : vector<1x32xi32> to vector<256x32xi32>
    %1063 = vector.broadcast %1061 : vector<256x1xi32> to vector<256x32xi32>
    %1064 = arith.cmpi sge, %1062, %1063 : vector<256x32xi32>
    %c2_i32_375 = arith.constant 2 : i32
    %1065 = vector.broadcast %c2_i32_375 : i32 to vector<256x1xi32>
    %1066 = arith.muli %1065, %1058 : vector<256x1xi32>
    %c1_i32_376 = arith.constant 1 : i32
    %1067 = vector.broadcast %c1_i32_376 : i32 to vector<256x1xi32>
    %1068 = arith.addi %1066, %1067 : vector<256x1xi32>
    %1069 = vector.broadcast %1059 : vector<1x32xi32> to vector<256x32xi32>
    %1070 = vector.broadcast %1068 : vector<256x1xi32> to vector<256x32xi32>
    %1071 = arith.cmpi sle, %1069, %1070 : vector<256x32xi32>
    %1072 = arith.andi %1064, %1071 : vector<256x32xi1>
    %cst_377 = arith.constant 1.000000e+00 : f32
    %cst_378 = arith.constant 0.000000e+00 : f32
    %1073 = vector.broadcast %cst_377 : f32 to vector<256x32xf32>
    %1074 = vector.broadcast %cst_378 : f32 to vector<256x32xf32>
    %1075 = arith.select %1072, %1073, %1074 : vector<256x32xi1>, vector<256x32xf32>
    %1076 = vector.broadcast %946 : vector<1x256xf32> to vector<32x256xf32>
    %1077 = arith.mulf %963, %1076 : vector<32x256xf32>
    %cst_379 = arith.constant dense<0.000000e+00> : vector<32x32xf32>
    %1078 = tpu.matmul %1077, %1075, %cst_379 {dimension_numbers = #tpu.dot_dimension_numbers<[1], [0], [0], [1], [0, 0, 1, 1], [], []>} : vector<32x256xf32>, vector<256x32xf32>, vector<32x32xf32> -> vector<32x32xf32>
    %1079 = vector.shape_cast %1078 : vector<32x32xf32> to vector<1x32x32xf32>
    %c0_380 = arith.constant 0 : index
    %c0_381 = arith.constant 0 : index
    %c0_382 = arith.constant 0 : index
    %1080 = vector.load %arg6[%c0_380, %c0_381, %c0_382] : memref<1x32x32xf32, #tpu.memory_space<vmem>>, vector<1x32x32xf32>
    tpu.vector_store %arg6[%c0_380, %c0_381, %c0_382], %1079 {strides = array<i32>} : memref<1x32x32xf32, #tpu.memory_space<vmem>>, vector<1x32x32xf32>,
    return
  }
  func.func @transform_0(%arg0: i32) -> (i32, i32, i32) {
    %c0_i32 = arith.constant 0 : i32
    %c0_i32_0 = arith.constant 0 : i32
    %c0_i32_1 = arith.constant 0 : i32
    return %arg0, %c0_i32, %c0_i32_0 : i32, i32, i32
  }
  func.func @transform_1(%arg0: i32) -> (i32, i32) {
    %c0_i32 = arith.constant 0 : i32
    %c0_i32_0 = arith.constant 0 : i32
    %c0_i32_1 = arith.constant 0 : i32
    return %c0_i32, %c0_i32_0 : i32, i32
  }
  func.func @transform_2(%arg0: i32) -> (i32, i32) {
    %c0_i32 = arith.constant 0 : i32
    %c0_i32_0 = arith.constant 0 : i32
    %c0_i32_1 = arith.constant 0 : i32
    return %c0_i32, %c0_i32_0 : i32, i32
  }
  func.func @transform_3(%arg0: i32) -> (i32, i32) {
    %c0_i32 = arith.constant 0 : i32
    %c0_i32_0 = arith.constant 0 : i32
    %c0_i32_1 = arith.constant 0 : i32
    return %c0_i32, %c0_i32_0 : i32, i32
  }
  func.func @transform_4(%arg0: i32) -> (i32, i32) {
    %c0_i32 = arith.constant 0 : i32
    %c0_i32_0 = arith.constant 0 : i32
    %c0_i32_1 = arith.constant 0 : i32
    return %c0_i32, %c0_i32_0 : i32, i32
  }
  func.func @transform_5(%arg0: i32) -> (i32, i32, i32) {
    %c0_i32 = arith.constant 0 : i32
    %c0_i32_0 = arith.constant 0 : i32
    %c0_i32_1 = arith.constant 0 : i32
    return %arg0, %c0_i32, %c0_i32_0 : i32, i32, i32
  }
}

</mosaic_0001>

<llo_original>
// kernel: squeeze.1
$region0: #{squeeze.1}
  %s0 = inlined_call_operand.vmem [shape: f32[16,3,3], index: 0, kind: input, shape index: {}]
  %s1 = inlined_call_operand.vmem [shape: f32[16,9], index: 1, kind: output, shape index: {}]
  $region1: #{squeeze.1} parent=0
    #allocation0 [shape = 'u8[12288]{0}', space=vmem, size = 0x3000, scoped, tag = 'scoped mem for input reshape']
    %s3 = ssub.s32 16, 1
    %s4 = scalar_lea.vmem %s0, 8
    %v5 = vld [vmem:[%s4] sm:%s3]
    %s6 = scalar_lea.vmem [#allocation0], 16
    %7 = vst [vmem:[%s6] sm:%s3] %v5
    %s8 = scalar_lea.vmem %s0, 4
    %v9 = vld [vmem:[%s8] sm:%s3]
    %s10 = scalar_lea.vmem [#allocation0], 8
    %11 = vst [vmem:[%s10] sm:%s3] %v9
    %v12 = vld [vmem:[%s0] sm:%s3]
    %13 = vst [vmem:[#allocation0] sm:%s3] %v12
    %v14 = vld [vmem:[#allocation0] sm:$0x7]
    %vm15 = vcmask 130048
    %16 = vst.msk [vmem:[%s1] sm:$0x7] %vm15, %v14
    %s17 = scalar_lea.vmem [#allocation0], 8
    %v18 = vld [vmem:[%s17] sm:$0x7]
    %vm19 = vcmask 130048
    %s20 = scalar_lea.vmem %s1, 3
    %21 = vst.msk [vmem:[%s20] sm:$0x7] %vm19, %v18
    %s22 = scalar_lea.vmem [#allocation0], 16
    %v23 = vld [vmem:[%s22] sm:$0x7]
    %vm24 = vcmask 130048
    %s25 = scalar_lea.vmem %s1, 6
    %26 = vst.msk [vmem:[%s25] sm:$0x7] %vm24, %v23

// kernel: decoder_forward.1
$region0: #{decoder_forward.1}
  #allocation0 [shape = 'u32[]', space=smem, size = 0x4, offset = 0x4, fixed_abs, tag = 'smem constant byte address 0x4 - core index']
  #allocation1 [shape = 'u32[72,128]{1,0:T(1,128)}', space=vmem, size = 0x9000, scoped, tag = 'internal scratch']
  #allocation2 [shape = 'f32[1,1]{1,0:T(1,128)S(1)}', space=vmem, size = 0x200, scoped, tag = 'scoped memory for decoder_forward.1']
  %s0 = inlined_call_operand.vmem [shape: f32[2,32,64], index: 0, kind: input, shape index: {}]
  %s1 = inlined_call_operand.vmem [shape: f32[16,288], index: 1, kind: input, shape index: {}]
  %s2 = inlined_call_operand.vmem [shape: f32[16,1], index: 2, kind: input, shape index: {}]
  %s3 = inlined_call_operand.vmem [shape: f32[16,9], index: 3, kind: input, shape index: {}]
  %s4 = inlined_call_operand.<no memory space> [shape: f32[1,1], index: 4, kind: input, shape index: {}]
  %s5 = inlined_call_operand.hbm [shape: f32[2,32,32], index: 5, kind: output, shape index: {}]
  %s6 = sld [smem:[#allocation0]]
  $region53: #{decoder_forward.1} parent=0
    _
  %s8 = ssub.s32 1, %s6
  %s9 = scalar_select 0, %s8, %s6
  %v10 = vstv %s4
  %11 = vst [vmem:[#allocation2] sm:$0x1] %v10
  $region1: #{decoder_forward.1} parent=0
    #allocation3 [shape = 'u8[32768]{0}', space=vmem, size = 0x8000, scoped, tag = 'output window, operand 0']
    #allocation4 [shape = 's32[2]{0}', space=sflag, size = 0x8, scoped, tag = 'scoped memory for decoder_forward.1']
    %12 = vsyncpa [#allocation4], 0
    %s13 = scalar_lea.sflag [#allocation4], 1
    %14 = vsyncpa %s13, 0
    loop: start=0, step=1, limit=4
    $region2: #{decoder_forward.1} parent=1 // loop_pre_header
      _
    $region3: #{decoder_forward.1} parent=1 // loop_header
      %s16 = sphi 0, %s20
      %p17 = scmp.ge.s32.totalorder %s16, 4
      %s26 = sphi 0, %s28
      %s29 = sphi 0, %s26
      %s30 = sphi 0, %s29
      %s46 = sphi 0, %s30
      %s50 = sphi 0, %s50
      %s52 = sphi 0, %s50
      %s53 = sphi 0, %s52
      %s67 = sphi 0, %s53
      %s71 = sphi 0, %s71
      %s73 = sphi 0, %s71
      %s74 = sphi 0, %s73
      %s88 = sphi 0, %s74
      %s92 = sphi 0, %s92
      %s94 = sphi 0, %s92
      %s95 = sphi 0, %s94
      %s109 = sphi 0, %s95
      %s113 = sphi 0, %s113
      %s115 = sphi 0, %s113
      %s116 = sphi 0, %s115
      %s130 = sphi 0, %s116
      %s136 = sphi 0, %s138
      %s139 = sphi 0, %s136
      %s140 = sphi 0, %s139
      %s156 = sphi 0, %s140
    $region4: #{decoder_forward.1} parent=1 // loop_header_branch
      %19 = sbr.rel (%p17) target = $region8
    $region5: #{decoder_forward.1} parent=1 // loop_body
      %s21 = ssub.s32 %s16, 1
      %s22 = ssub.s32 %s16, 2
      %s23 = sadd.s32 %s16, 1
      %s24 = ssub.s32 %s16, %s23
      %p25 = scmp.eq.s32.totalorder %s24, 0
      %s27 = sadd.s32 %s26, 1
      %s28 = scalar_select %p25, %s26, %s27
      %p31 = pneg %p25
      %p32 = scmp.eq.s32.totalorder %s16, 1
      %p33 = por %p31, %p32
      %p34 = scmp.ne.s32.totalorder %s26, %s29
      %p35 = scmp.eq.s32.totalorder %s16, 0
      %p36 = por %p34, %p35
      %p37 = scmp.ne.s32.totalorder %s26, %s29
      %p38 = scmp.eq.s32.totalorder %s21, 1
      %p39 = por %p37, %p38
      %p40 = scmp.ne.s32.totalorder %s29, %s30
      %p41 = scmp.eq.s32.totalorder %s21, 0
      %p42 = por %p40, %p41
      %p43 = scmp.ne.s32.totalorder %s29, %s30
      %p44 = scmp.eq.s32.totalorder %s22, 1
      %p45 = por %p43, %p44
      %p47 = scmp.ne.s32.totalorder %s30, %s46
      %p48 = scmp.eq.s32.totalorder %s22, 0
      %p49 = por %p47, %p48
      %s51 = sadd.s32 %s50, 1
      %p54 = scmp.eq.s32.totalorder %s16, 1
      %p55 = scmp.ne.s32.totalorder %s50, %s52
      %p56 = scmp.eq.s32.totalorder %s16, 0
      %p57 = por %p55, %p56
      %p58 = scmp.ne.s32.totalorder %s50, %s52
      %p59 = scmp.eq.s32.totalorder %s21, 1
      %p60 = por %p58, %p59
      %p61 = scmp.ne.s32.totalorder %s52, %s53
      %p62 = scmp.eq.s32.totalorder %s21, 0
      %p63 = por %p61, %p62
      %p64 = scmp.ne.s32.totalorder %s52, %s53
      %p65 = scmp.eq.s32.totalorder %s22, 1
      %p66 = por %p64, %p65
      %p68 = scmp.ne.s32.totalorder %s53, %s67
      %p69 = scmp.eq.s32.totalorder %s22, 0
      %p70 = por %p68, %p69
      %s72 = sadd.s32 %s71, 1
      %p75 = scmp.eq.s32.totalorder %s16, 1
      %p76 = scmp.ne.s32.totalorder %s71, %s73
      %p77 = scmp.eq.s32.totalorder %s16, 0
      %p78 = por %p76, %p77
      %p79 = scmp.ne.s32.totalorder %s71, %s73
      %p80 = scmp.eq.s32.totalorder %s21, 1
      %p81 = por %p79, %p80
      %p82 = scmp.ne.s32.totalorder %s73, %s74
      %p83 = scmp.eq.s32.totalorder %s21, 0
      %p84 = por %p82, %p83
      %p85 = scmp.ne.s32.totalorder %s73, %s74
      %p86 = scmp.eq.s32.totalorder %s22, 1
      %p87 = por %p85, %p86
      %p89 = scmp.ne.s32.totalorder %s74, %s88
      %p90 = scmp.eq.s32.totalorder %s22, 0
      %p91 = por %p89, %p90
      %s93 = sadd.s32 %s92, 1
      %p96 = scmp.eq.s32.totalorder %s16, 1
      %p97 = scmp.ne.s32.totalorder %s92, %s94
      %p98 = scmp.eq.s32.totalorder %s16, 0
      %p99 = por %p97, %p98
      %p100 = scmp.ne.s32.totalorder %s92, %s94
      %p101 = scmp.eq.s32.totalorder %s21, 1
      %p102 = por %p100, %p101
      %p103 = scmp.ne.s32.totalorder %s94, %s95
      %p104 = scmp.eq.s32.totalorder %s21, 0
      %p105 = por %p103, %p104
      %p106 = scmp.ne.s32.totalorder %s94, %s95
      %p107 = scmp.eq.s32.totalorder %s22, 1
      %p108 = por %p106, %p107
      %p110 = scmp.ne.s32.totalorder %s95, %s109
      %p111 = scmp.eq.s32.totalorder %s22, 0
      %p112 = por %p110, %p111
      %s114 = sadd.s32 %s113, 1
      %p117 = scmp.eq.s32.totalorder %s16, 1
      %p118 = scmp.ne.s32.totalorder %s113, %s115
      %p119 = scmp.eq.s32.totalorder %s16, 0
      %p120 = por %p118, %p119
      %p121 = scmp.ne.s32.totalorder %s113, %s115
      %p122 = scmp.eq.s32.totalorder %s21, 1
      %p123 = por %p121, %p122
      %p124 = scmp.ne.s32.totalorder %s115, %s116
      %p125 = scmp.eq.s32.totalorder %s21, 0
      %p126 = por %p124, %p125
      %p127 = scmp.ne.s32.totalorder %s115, %s116
      %p128 = scmp.eq.s32.totalorder %s22, 1
      %p129 = por %p127, %p128
      %p131 = scmp.ne.s32.totalorder %s116, %s130
      %p132 = scmp.eq.s32.totalorder %s22, 0
      %p133 = por %p131, %p132
      %s134 = ssub.s32 %s16, %s23
      %p135 = scmp.eq.s32.totalorder %s134, 0
      %s137 = sadd.s32 %s136, 1
      %s138 = scalar_select %p135, %s136, %s137
      %p141 = pneg %p135
      %p142 = scmp.eq.s32.totalorder %s16, 1
      %p143 = por %p141, %p142
      %p144 = scmp.ne.s32.totalorder %s136, %s139
      %p145 = scmp.eq.s32.totalorder %s16, 0
      %p146 = por %p144, %p145
      %p147 = scmp.ne.s32.totalorder %s136, %s139
      %p148 = scmp.eq.s32.totalorder %s21, 1
      %p149 = por %p147, %p148
      %p150 = scmp.ne.s32.totalorder %s139, %s140
      %p151 = scmp.eq.s32.totalorder %s21, 0
      %p152 = por %p150, %p151
      %p153 = scmp.ne.s32.totalorder %s139, %s140
      %p154 = scmp.eq.s32.totalorder %s22, 1
      %p155 = por %p153, %p154
      %p157 = scmp.ne.s32.totalorder %s140, %s156
      %p158 = scmp.eq.s32.totalorder %s22, 0
      %p159 = por %p157, %p158
      %p160 = scmp.le.s32.totalorder 1, %s16
      %p161 = scmp.lt.s32.totalorder %s16, 3
      %p162 = pnand %p160, %p161
      %p163 = pneg %p162
      // Predicated region
      $region9: #{decoder_forward.1} parent=5 // pred_check
        _
      $region10: #{decoder_forward.1} parent=5 // pred_check_branch
        %165 = sbr.rel (%p162) target = $region12
      $region11: #{decoder_forward.1} parent=5 // pred_region
        %s166 = ssub.s32 %s16, 1
        // Predicated region
        $region13: #{decoder_forward.1} parent=11 // pred_check
          %p167 = pneg %p63
        $region14: #{decoder_forward.1} parent=11 // pred_check_branch
          %169 = sbr.rel (%p167) target = $region16
        $region15: #{decoder_forward.1} parent=11 // pred_region
          _
        $region16: #{decoder_forward.1} parent=11 // pred_fallthru
          _
        // Predicated region
        $region17: #{decoder_forward.1} parent=11 // pred_check
          %p170 = pneg %p84
        $region18: #{decoder_forward.1} parent=11 // pred_check_branch
          %172 = sbr.rel (%p170) target = $region20
        $region19: #{decoder_forward.1} parent=11 // pred_region
          _
        $region20: #{decoder_forward.1} parent=11 // pred_fallthru
          _
        // Predicated region
        $region21: #{decoder_forward.1} parent=11 // pred_check
          %p173 = pneg %p105
        $region22: #{decoder_forward.1} parent=11 // pred_check_branch
          %175 = sbr.rel (%p173) target = $region24
        $region23: #{decoder_forward.1} parent=11 // pred_region
          _
        $region24: #{decoder_forward.1} parent=11 // pred_fallthru
          _
        // Predicated region
        $region25: #{decoder_forward.1} parent=11 // pred_check
          %p176 = pneg %p126
        $region26: #{decoder_forward.1} parent=11 // pred_check_branch
          %178 = sbr.rel (%p176) target = $region28
        $region27: #{decoder_forward.1} parent=11 // pred_region
          _
        $region28: #{decoder_forward.1} parent=11 // pred_fallthru
          _
      $region12: #{decoder_forward.1} parent=5 // pred_fallthru
        _
      %p179 = scmp.lt.s32.totalorder %s16, 2
      // Predicated region
      $region29: #{decoder_forward.1} parent=5 // pred_check
        %p180 = pneg %p179
      $region30: #{decoder_forward.1} parent=5 // pred_check_branch
        %182 = sbr.rel (%p180) target = $region32
      $region31: #{decoder_forward.1} parent=5 // pred_region
        // Predicated region
        $region33: #{decoder_forward.1} parent=31 // pred_check
          %p183 = pneg %p36
        $region34: #{decoder_forward.1} parent=31 // pred_check_branch
          %185 = sbr.rel (%p183) target = $region36
        $region35: #{decoder_forward.1} parent=31 // pred_region
          %p186 = scmp.lt.s32.totalorder %s16, 1
          %s187 = scalar_select %p186, %s16, 1
          %s188 = smul.addr %s187, 4
          %s189 = smul.addr %s188, 8
          %s190 = scalar_lea.vmem %s0, %s189
        $region36: #{decoder_forward.1} parent=31 // pred_fallthru
          _
      $region32: #{decoder_forward.1} parent=5 // pred_fallthru
        _
      %p191 = scmp.le.s32.totalorder 1, %s16
      %p192 = scmp.lt.s32.totalorder %s16, 3
      %p193 = pnand %p191, %p192
      %p194 = pneg %p193
      // Predicated region
      $region37: #{decoder_forward.1} parent=5 // pred_check
        _
      $region38: #{decoder_forward.1} parent=5 // pred_check_branch
        %196 = sbr.rel (%p193) target = $region40
      $region39: #{decoder_forward.1} parent=5 // pred_region
        %s197 = ssub.s32 %s16, 1
        %p198 = scmp.lt.s32.totalorder %s21, 1
        %s199 = scalar_select %p198, %s21, 1
        %s200 = smul.addr %s199, 4
        %s201 = smul.addr %s200, 8
        %s202 = scalar_lea.vmem %s0, %s201
        %p203 = pneg %p42
        %p204 = pneg %p39
        %p205 = pneg %p63
        %p206 = pneg %p60
        %p207 = pneg %p84
        %p208 = pneg %p81
        %p209 = pneg %p105
        %p210 = pneg %p102
        %p211 = pneg %p126
        %p212 = pneg %p123
        %p213 = pneg %p152
        %p214 = pneg %p149
        %s215 = sand.u32 %s139, 1
        %s216 = scalar_lea.sflag [#allocation4], %s215
        %s217 = sand.u32 %s139, 1
        %s218 = smul.addr %s217, 32
        %s219 = scalar_lea.vmem [#allocation3], %s218
        %p220 = scmp.lt.s32.totalorder %s21, 1
        %s221 = scalar_select %p220, %s21, 1
        %s222 = smul.addr %s221, 4
        %s223 = smul.addr %s222, 8
        %s224 = scalar_lea.vmem %s0, %s223
        %v225 = vld [vmem:[%s224] sm:$0xff]
        %v226 = vld [vmem:[%s224 + $0x8] sm:$0xff]
        %v227 = vld [vmem:[%s224 + $0x10] sm:$0xff]
        %v228 = vld [vmem:[%s224 + $0x18] sm:$0xff]
        %v229 = vld [vmem:[%s1] sm:$0xff]
        %v230 = vld [vmem:[%s1 + $0x8] sm:$0xff]
        %v231 = vld [vmem:[%s1 + $0x10] sm:$0xff]
        %v232 = vld [vmem:[%s1 + $0x18] sm:$0xff]
        %v233 = vld [vmem:[%s1 + $0x20] sm:$0xff]
        %v234 = vld [vmem:[%s1 + $0x28] sm:$0xff]
        %v235 = vld [vmem:[%s2] sm:$0xff]
        %v236 = vld [vmem:[%s2 + $0x8] sm:$0xff]
        %v237 = vld [vmem:[%s3] sm:$0xff]
        %v238 = vld [vmem:[%s3 + $0x8] sm:$0xff]
        %v239 = vld [vmem:[#allocation2] sm:$0x1]
        %v240 = vlaneseq
        %v241 = vshrl.u32 %v240, 7
        %v242 = vadd.s32 %v241, 8
        %v243 = vadd.s32 %v241, 16
        %v244 = vadd.s32 %v241, 24
        %v245 = vadd.s32 %v241, 32
        %v246 = vadd.s32 %v241, 40
        %v247 = vadd.s32 %v241, 48
        %v248 = vadd.s32 %v241, 56
        %v249 = vlaneseq
        %v250 = vand.u32 %v249, 127
        %vm251 = vcmp.ge.s32.totalorder %v250, 8
        %v252 = vsel %vm251, 1, 0
        %vm253 = vcmp.ge.s32.totalorder %v250, 16
        %v254 = vsel %vm253, 1, 0
        %v255 = vadd.s32 %v252, %v254
        %vm256 = vcmp.ge.s32.totalorder %v250, 24
        %v257 = vsel %vm256, 1, 0
        %v258 = vadd.s32 %v255, %v257
        %vm259 = vcmp.ge.s32.totalorder %v250, 32
        %v260 = vsel %vm259, 1, 0
        %v261 = vadd.s32 %v258, %v260
        %vm262 = vcmp.ge.s32.totalorder %v250, 40
        %v263 = vsel %vm262, 1, 0
        %v264 = vadd.s32 %v261, %v263
        %vm265 = vcmp.ge.s32.totalorder %v250, 48
        %v266 = vsel %vm265, 1, 0
        %v267 = vadd.s32 %v264, %v266
        %vm268 = vcmp.ge.s32.totalorder %v250, 56
        %v269 = vsel %vm268, 1, 0
        %v270 = vadd.s32 %v267, %v269
        %v271 = vmul.u32 %v270, 8
        %v272 = vsub.s32 %v250, %v271
        %v273 = vadd.s32 %v270, 4294967295
        %vm274 = vcmp.ge.s32.totalorder %v273, 0
        %vm275 = vcmp.lt.s32.totalorder %v273, 8
        %vm276 = vmand %vm274, %vm275
        %v277 = vadd.s32 %v272, 4294967295
        %vm278 = vcmp.ge.s32.totalorder %v277, 0
        %vm279 = vmand %vm276, %vm278
        %vm280 = vcmp.lt.s32.totalorder %v277, 8
        %vm281 = vmand %vm279, %vm280
        %v282 = vadd.s32 %v250, 4294967287
        %vm283 = vcmp.eq.s32.totalorder %v241, %v282
        %vm284 = vcmp.eq.s32.totalorder %v242, %v282
        %vm285 = vcmp.eq.s32.totalorder %v243, %v282
        %vm286 = vcmp.eq.s32.totalorder %v244, %v282
        %vm287 = vcmp.eq.s32.totalorder %v245, %v282
        %vm288 = vcmp.eq.s32.totalorder %v246, %v282
        %vm289 = vcmp.eq.s32.totalorder %v247, %v282
        %vm290 = vcmp.eq.s32.totalorder %v248, %v282
        %v291 = vsel %vm281, 1, 0
        %vm292 = vcmp.eq.s32.totalorder %v291, 1
        %vm293 = vmand %vm283, %vm292
        %vm294 = vmand %vm284, %vm292
        %vm295 = vmand %vm285, %vm292
        %vm296 = vmand %vm286, %vm292
        %vm297 = vmand %vm287, %vm292
        %vm298 = vmand %vm288, %vm292
        %vm299 = vmand %vm289, %vm292
        %vm300 = vmand %vm290, %vm292
        %v301 = vsel %vm293, 1.0, 0.0
        %v302 = vsel %vm294, 1.0, 0.0
        %v303 = vsel %vm295, 1.0, 0.0
        %v304 = vsel %vm296, 1.0, 0.0
        %v305 = vsel %vm297, 1.0, 0.0
        %v306 = vsel %vm298, 1.0, 0.0
        %v307 = vsel %vm299, 1.0, 0.0
        %v308 = vsel %vm300, 1.0, 0.0
        %vm309 = vcmask 523264
        %v311 = vsel %vm309, %v225, 0
        %v314 = vsel %vm309, %v226, 0
        %v317 = vsel %vm309, %v227, 0
        %v320 = vsel %vm309, %v228, 0
        %322 = vmatpush.msra.mxu0 0.0
        %323 = vmatpush.msra.mxu0 0.0
        %324 = vmatpush.msra.mxu0 0.0
        %325 = vmatpush.msra.mxu0 0.0
        %326 = vmatpush.msra.mxu0 0.0
        %327 = vmatpush.msra.mxu0 0.0
        %328 = vmatpush.msra.mxu0 0.0
        %329 = vmatpush.msra.mxu0 0.0
        %330 = vmatpush.msra.mxu0 %v308
        %331 = vmatpush.msra.mxu0 %v307
        %332 = vmatpush.msra.mxu0 %v306
        %333 = vmatpush.msra.mxu0 %v305
        %334 = vmatpush.msra.mxu0 %v304
        %335 = vmatpush.msra.mxu0 %v303
        %336 = vmatpush.msra.mxu0 %v302
        %337 = vmatpush.msra.mxu0 %v301
        %338 = vmatmul.f32.gmra.mxu0 %v311
        %v339 = vpop.f32.mrf.mxu0
        %v340 = vadd.f32 0.0, %v339
        %341 = vmatmul.f32.gmra.mxu0 %v314
        %v342 = vpop.f32.mrf.mxu0
        %v343 = vadd.f32 0.0, %v342
        %344 = vmatmul.f32.gmra.mxu0 %v317
        %v345 = vpop.f32.mrf.mxu0
        %v346 = vadd.f32 0.0, %v345
        %347 = vmatmul.f32.gmra.mxu0 %v320
        %v348 = vpop.f32.mrf.mxu0
        %v349 = vadd.f32 0.0, %v348
        %350 = vdwg.mxu0
        %vm351 = vcmp.ge.s32.totalorder %v272, 0
        %vm352 = vmand %vm276, %vm351
        %vm353 = vcmp.lt.s32.totalorder %v272, 8
        %vm354 = vmand %vm352, %vm353
        %v355 = vadd.s32 %v250, 4294967288
        %vm356 = vcmp.eq.s32.totalorder %v241, %v355
        %vm357 = vcmp.eq.s32.totalorder %v242, %v355
        %vm358 = vcmp.eq.s32.totalorder %v243, %v355
        %vm359 = vcmp.eq.s32.totalorder %v244, %v355
        %vm360 = vcmp.eq.s32.totalorder %v245, %v355
        %vm361 = vcmp.eq.s32.totalorder %v246, %v355
        %vm362 = vcmp.eq.s32.totalorder %v247, %v355
        %vm363 = vcmp.eq.s32.totalorder %v248, %v355
        %v364 = vsel %vm354, 1, 0
        %vm365 = vcmp.eq.s32.totalorder %v364, 1
        %vm366 = vmand %vm356, %vm365
        %vm367 = vmand %vm357, %vm365
        %vm368 = vmand %vm358, %vm365
        %vm369 = vmand %vm359, %vm365
        %vm370 = vmand %vm360, %vm365
        %vm371 = vmand %vm361, %vm365
        %vm372 = vmand %vm362, %vm365
        %vm373 = vmand %vm363, %vm365
        %v374 = vsel %vm366, 1.0, 0.0
        %v375 = vsel %vm367, 1.0, 0.0
        %v376 = vsel %vm368, 1.0, 0.0
        %v377 = vsel %vm369, 1.0, 0.0
        %v378 = vsel %vm370, 1.0, 0.0
        %v379 = vsel %vm371, 1.0, 0.0
        %v380 = vsel %vm372, 1.0, 0.0
        %v381 = vsel %vm373, 1.0, 0.0
        %382 = vmatpush.msra.mxu0 0.0
        %383 = vmatpush.msra.mxu0 0.0
        %384 = vmatpush.msra.mxu0 0.0
        %385 = vmatpush.msra.mxu0 0.0
        %386 = vmatpush.msra.mxu0 0.0
        %387 = vmatpush.msra.mxu0 0.0
        %388 = vmatpush.msra.mxu0 0.0
        %389 = vmatpush.msra.mxu0 0.0
        %390 = vmatpush.msra.mxu0 %v381
        %391 = vmatpush.msra.mxu0 %v380
        %392 = vmatpush.msra.mxu0 %v379
        %393 = vmatpush.msra.mxu0 %v378
        %394 = vmatpush.msra.mxu0 %v377
        %395 = vmatpush.msra.mxu0 %v376
        %396 = vmatpush.msra.mxu0 %v375
        %397 = vmatpush.msra.mxu0 %v374
        %398 = vmatmul.f32.gmra.mxu0 %v311
        %v399 = vpop.f32.mrf.mxu0
        %v400 = vadd.f32 0.0, %v399
        %401 = vmatmul.f32.gmra.mxu0 %v314
        %v402 = vpop.f32.mrf.mxu0
        %v403 = vadd.f32 0.0, %v402
        %404 = vmatmul.f32.gmra.mxu0 %v317
        %v405 = vpop.f32.mrf.mxu0
        %v406 = vadd.f32 0.0, %v405
        %407 = vmatmul.f32.gmra.mxu0 %v320
        %v408 = vpop.f32.mrf.mxu0
        %v409 = vadd.f32 0.0, %v408
        %410 = vdwg.mxu0
        %v411 = vadd.s32 %v272, 1
        %vm412 = vcmp.ge.s32.totalorder %v411, 0
        %vm413 = vmand %vm276, %vm412
        %vm414 = vcmp.lt.s32.totalorder %v411, 8
        %vm415 = vmand %vm413, %vm414
        %v416 = vadd.s32 %v250, 4294967289
        %vm417 = vcmp.eq.s32.totalorder %v241, %v416
        %vm418 = vcmp.eq.s32.totalorder %v242, %v416
        %vm419 = vcmp.eq.s32.totalorder %v243, %v416
        %vm420 = vcmp.eq.s32.totalorder %v244, %v416
        %vm421 = vcmp.eq.s32.totalorder %v245, %v416
        %vm422 = vcmp.eq.s32.totalorder %v246, %v416
        %vm423 = vcmp.eq.s32.totalorder %v247, %v416
        %vm424 = vcmp.eq.s32.totalorder %v248, %v416
        %v425 = vsel %vm415, 1, 0
        %vm426 = vcmp.eq.s32.totalorder %v425, 1
        %vm427 = vmand %vm417, %vm426
        %vm428 = vmand %vm418, %vm426
        %vm429 = vmand %vm419, %vm426
        %vm430 = vmand %vm420, %vm426
        %vm431 = vmand %vm421, %vm426
        %vm432 = vmand %vm422, %vm426
        %vm433 = vmand %vm423, %vm426
        %vm434 = vmand %vm424, %vm426
        %v435 = vsel %vm427, 1.0, 0.0
        %v436 = vsel %vm428, 1.0, 0.0
        %v437 = vsel %vm429, 1.0, 0.0
        %v438 = vsel %vm430, 1.0, 0.0
        %v439 = vsel %vm431, 1.0, 0.0
        %v440 = vsel %vm432, 1.0, 0.0
        %v441 = vsel %vm433, 1.0, 0.0
        %v442 = vsel %vm434, 1.0, 0.0
        %443 = vmatpush.msra.mxu0 0.0
        %444 = vmatpush.msra.mxu0 0.0
        %445 = vmatpush.msra.mxu0 0.0
        %446 = vmatpush.msra.mxu0 0.0
        %447 = vmatpush.msra.mxu0 0.0
        %448 = vmatpush.msra.mxu0 0.0
        %449 = vmatpush.msra.mxu0 0.0
        %450 = vmatpush.msra.mxu0 0.0
        %451 = vmatpush.msra.mxu0 %v442
        %452 = vmatpush.msra.mxu0 %v441
        %453 = vmatpush.msra.mxu0 %v440
        %454 = vmatpush.msra.mxu0 %v439
        %455 = vmatpush.msra.mxu0 %v438
        %456 = vmatpush.msra.mxu0 %v437
        %457 = vmatpush.msra.mxu0 %v436
        %458 = vmatpush.msra.mxu0 %v435
        %459 = vmatmul.f32.gmra.mxu0 %v311
        %v460 = vpop.f32.mrf.mxu0
        %v461 = vadd.f32 0.0, %v460
        %462 = vmatmul.f32.gmra.mxu0 %v314
        %v463 = vpop.f32.mrf.mxu0
        %v464 = vadd.f32 0.0, %v463
        %465 = vmatmul.f32.gmra.mxu0 %v317
        %v466 = vpop.f32.mrf.mxu0
        %v467 = vadd.f32 0.0, %v466
        %468 = vmatmul.f32.gmra.mxu0 %v320
        %v469 = vpop.f32.mrf.mxu0
        %v470 = vadd.f32 0.0, %v469
        %471 = vdwg.mxu0
        %vm472 = vcmp.ge.s32.totalorder %v270, 0
        %vm473 = vcmp.lt.s32.totalorder %v270, 8
        %vm474 = vmand %vm472, %vm473
        %vm475 = vmand %vm474, %vm278
        %vm476 = vmand %vm475, %vm280
        %v477 = vadd.s32 %v250, 4294967295
        %vm478 = vcmp.eq.s32.totalorder %v241, %v477
        %vm479 = vcmp.eq.s32.totalorder %v242, %v477
        %vm480 = vcmp.eq.s32.totalorder %v243, %v477
        %vm481 = vcmp.eq.s32.totalorder %v244, %v477
        %vm482 = vcmp.eq.s32.totalorder %v245, %v477
        %vm483 = vcmp.eq.s32.totalorder %v246, %v477
        %vm484 = vcmp.eq.s32.totalorder %v247, %v477
        %vm485 = vcmp.eq.s32.totalorder %v248, %v477
        %v486 = vsel %vm476, 1, 0
        %vm487 = vcmp.eq.s32.totalorder %v486, 1
        %vm488 = vmand %vm478, %vm487
        %vm489 = vmand %vm479, %vm487
        %vm490 = vmand %vm480, %vm487
        %vm491 = vmand %vm481, %vm487
        %vm492 = vmand %vm482, %vm487
        %vm493 = vmand %vm483, %vm487
        %vm494 = vmand %vm484, %vm487
        %vm495 = vmand %vm485, %vm487
        %v496 = vsel %vm488, 1.0, 0.0
        %v497 = vsel %vm489, 1.0, 0.0
        %v498 = vsel %vm490, 1.0, 0.0
        %v499 = vsel %vm491, 1.0, 0.0
        %v500 = vsel %vm492, 1.0, 0.0
        %v501 = vsel %vm493, 1.0, 0.0
        %v502 = vsel %vm494, 1.0, 0.0
        %v503 = vsel %vm495, 1.0, 0.0
        %504 = vmatpush.msra.mxu0 0.0
        %505 = vmatpush.msra.mxu0 0.0
        %506 = vmatpush.msra.mxu0 0.0
        %507 = vmatpush.msra.mxu0 0.0
        %508 = vmatpush.msra.mxu0 0.0
        %509 = vmatpush.msra.mxu0 0.0
        %510 = vmatpush.msra.mxu0 0.0
        %511 = vmatpush.msra.mxu0 0.0
        %512 = vmatpush.msra.mxu0 %v503
        %513 = vmatpush.msra.mxu0 %v502
        %514 = vmatpush.msra.mxu0 %v501
        %515 = vmatpush.msra.mxu0 %v500
        %516 = vmatpush.msra.mxu0 %v499
        %517 = vmatpush.msra.mxu0 %v498
        %518 = vmatpush.msra.mxu0 %v497
        %519 = vmatpush.msra.mxu0 %v496
        %520 = vmatmul.f32.gmra.mxu0 %v311
        %v521 = vpop.f32.mrf.mxu0
        %v522 = vadd.f32 0.0, %v521
        %523 = vmatmul.f32.gmra.mxu0 %v314
        %v524 = vpop.f32.mrf.mxu0
        %v525 = vadd.f32 0.0, %v524
        %526 = vmatmul.f32.gmra.mxu0 %v317
        %v527 = vpop.f32.mrf.mxu0
        %v528 = vadd.f32 0.0, %v527
        %529 = vmatmul.f32.gmra.mxu0 %v320
        %v530 = vpop.f32.mrf.mxu0
        %v531 = vadd.f32 0.0, %v530
        %532 = vdwg.mxu0
        %vm533 = vmand %vm474, %vm351
        %vm534 = vmand %vm533, %vm353
        %vm535 = vcmp.eq.s32.totalorder %v241, %v250
        %vm536 = vcmp.eq.s32.totalorder %v242, %v250
        %vm537 = vcmp.eq.s32.totalorder %v243, %v250
        %vm538 = vcmp.eq.s32.totalorder %v244, %v250
        %vm539 = vcmp.eq.s32.totalorder %v245, %v250
        %vm540 = vcmp.eq.s32.totalorder %v246, %v250
        %vm541 = vcmp.eq.s32.totalorder %v247, %v250
        %vm542 = vcmp.eq.s32.totalorder %v248, %v250
        %v543 = vsel %vm534, 1, 0
        %vm544 = vcmp.eq.s32.totalorder %v543, 1
        %vm545 = vmand %vm535, %vm544
        %vm546 = vmand %vm536, %vm544
        %vm547 = vmand %vm537, %vm544
        %vm548 = vmand %vm538, %vm544
        %vm549 = vmand %vm539, %vm544
        %vm550 = vmand %vm540, %vm544
        %vm551 = vmand %vm541, %vm544
        %vm552 = vmand %vm542, %vm544
        %v553 = vsel %vm545, 1.0, 0.0
        %v554 = vsel %vm546, 1.0, 0.0
        %v555 = vsel %vm547, 1.0, 0.0
        %v556 = vsel %vm548, 1.0, 0.0
        %v557 = vsel %vm549, 1.0, 0.0
        %v558 = vsel %vm550, 1.0, 0.0
        %v559 = vsel %vm551, 1.0, 0.0
        %v560 = vsel %vm552, 1.0, 0.0
        %561 = vmatpush.msra.mxu0 0.0
        %562 = vmatpush.msra.mxu0 0.0
        %563 = vmatpush.msra.mxu0 0.0
        %564 = vmatpush.msra.mxu0 0.0
        %565 = vmatpush.msra.mxu0 0.0
        %566 = vmatpush.msra.mxu0 0.0
        %567 = vmatpush.msra.mxu0 0.0
        %568 = vmatpush.msra.mxu0 0.0
        %569 = vmatpush.msra.mxu0 %v560
        %570 = vmatpush.msra.mxu0 %v559
        %571 = vmatpush.msra.mxu0 %v558
        %572 = vmatpush.msra.mxu0 %v557
        %573 = vmatpush.msra.mxu0 %v556
        %574 = vmatpush.msra.mxu0 %v555
        %575 = vmatpush.msra.mxu0 %v554
        %576 = vmatpush.msra.mxu0 %v553
        %577 = vmatmul.f32.gmra.mxu0 %v311
        %v578 = vpop.f32.mrf.mxu0
        %v579 = vadd.f32 0.0, %v578
        %580 = vmatmul.f32.gmra.mxu0 %v314
        %v581 = vpop.f32.mrf.mxu0
        %v582 = vadd.f32 0.0, %v581
        %583 = vmatmul.f32.gmra.mxu0 %v317
        %v584 = vpop.f32.mrf.mxu0
        %v585 = vadd.f32 0.0, %v584
        %586 = vmatmul.f32.gmra.mxu0 %v320
        %v587 = vpop.f32.mrf.mxu0
        %v588 = vadd.f32 0.0, %v587
        %589 = vdwg.mxu0
        %vm590 = vmand %vm474, %vm412
        %vm591 = vmand %vm590, %vm414
        %v592 = vadd.s32 %v250, 1
        %vm593 = vcmp.eq.s32.totalorder %v241, %v592
        %vm594 = vcmp.eq.s32.totalorder %v242, %v592
        %vm595 = vcmp.eq.s32.totalorder %v243, %v592
        %vm596 = vcmp.eq.s32.totalorder %v244, %v592
        %vm597 = vcmp.eq.s32.totalorder %v245, %v592
        %vm598 = vcmp.eq.s32.totalorder %v246, %v592
        %vm599 = vcmp.eq.s32.totalorder %v247, %v592
        %vm600 = vcmp.eq.s32.totalorder %v248, %v592
        %v601 = vsel %vm591, 1, 0
        %vm602 = vcmp.eq.s32.totalorder %v601, 1
        %vm603 = vmand %vm593, %vm602
        %vm604 = vmand %vm594, %vm602
        %vm605 = vmand %vm595, %vm602
        %vm606 = vmand %vm596, %vm602
        %vm607 = vmand %vm597, %vm602
        %vm608 = vmand %vm598, %vm602
        %vm609 = vmand %vm599, %vm602
        %vm610 = vmand %vm600, %vm602
        %v611 = vsel %vm603, 1.0, 0.0
        %v612 = vsel %vm604, 1.0, 0.0
        %v613 = vsel %vm605, 1.0, 0.0
        %v614 = vsel %vm606, 1.0, 0.0
        %v615 = vsel %vm607, 1.0, 0.0
        %v616 = vsel %vm608, 1.0, 0.0
        %v617 = vsel %vm609, 1.0, 0.0
        %v618 = vsel %vm610, 1.0, 0.0
        %619 = vmatpush.msra.mxu0 0.0
        %620 = vmatpush.msra.mxu0 0.0
        %621 = vmatpush.msra.mxu0 0.0
        %622 = vmatpush.msra.mxu0 0.0
        %623 = vmatpush.msra.mxu0 0.0
        %624 = vmatpush.msra.mxu0 0.0
        %625 = vmatpush.msra.mxu0 0.0
        %626 = vmatpush.msra.mxu0 0.0
        %627 = vmatpush.msra.mxu0 %v618
        %628 = vmatpush.msra.mxu0 %v617
        %629 = vmatpush.msra.mxu0 %v616
        %630 = vmatpush.msra.mxu0 %v615
        %631 = vmatpush.msra.mxu0 %v614
        %632 = vmatpush.msra.mxu0 %v613
        %633 = vmatpush.msra.mxu0 %v612
        %634 = vmatpush.msra.mxu0 %v611
        %635 = vmatmul.f32.gmra.mxu0 %v311
        %v636 = vpop.f32.mrf.mxu0
        %v637 = vadd.f32 0.0, %v636
        %638 = vmatmul.f32.gmra.mxu0 %v314
        %v639 = vpop.f32.mrf.mxu0
        %v640 = vadd.f32 0.0, %v639
        %641 = vmatmul.f32.gmra.mxu0 %v317
        %v642 = vpop.f32.mrf.mxu0
        %v643 = vadd.f32 0.0, %v642
        %644 = vmatmul.f32.gmra.mxu0 %v320
        %v645 = vpop.f32.mrf.mxu0
        %v646 = vadd.f32 0.0, %v645
        %647 = vdwg.mxu0
        %v648 = vadd.s32 %v270, 1
        %vm649 = vcmp.ge.s32.totalorder %v648, 0
        %vm650 = vcmp.lt.s32.totalorder %v648, 8
        %vm651 = vmand %vm649, %vm650
        %vm652 = vmand %vm651, %vm278
        %vm653 = vmand %vm652, %vm280
        %v654 = vadd.s32 %v250, 7
        %vm655 = vcmp.eq.s32.totalorder %v241, %v654
        %vm656 = vcmp.eq.s32.totalorder %v242, %v654
        %vm657 = vcmp.eq.s32.totalorder %v243, %v654
        %vm658 = vcmp.eq.s32.totalorder %v244, %v654
        %vm659 = vcmp.eq.s32.totalorder %v245, %v654
        %vm660 = vcmp.eq.s32.totalorder %v246, %v654
        %vm661 = vcmp.eq.s32.totalorder %v247, %v654
        %vm662 = vcmp.eq.s32.totalorder %v248, %v654
        %v663 = vsel %vm653, 1, 0
        %vm664 = vcmp.eq.s32.totalorder %v663, 1
        %vm665 = vmand %vm655, %vm664
        %vm666 = vmand %vm656, %vm664
        %vm667 = vmand %vm657, %vm664
        %vm668 = vmand %vm658, %vm664
        %vm669 = vmand %vm659, %vm664
        %vm670 = vmand %vm660, %vm664
        %vm671 = vmand %vm661, %vm664
        %vm672 = vmand %vm662, %vm664
        %v673 = vsel %vm665, 1.0, 0.0
        %v674 = vsel %vm666, 1.0, 0.0
        %v675 = vsel %vm667, 1.0, 0.0
        %v676 = vsel %vm668, 1.0, 0.0
        %v677 = vsel %vm669, 1.0, 0.0
        %v678 = vsel %vm670, 1.0, 0.0
        %v679 = vsel %vm671, 1.0, 0.0
        %v680 = vsel %vm672, 1.0, 0.0
        %681 = vmatpush.msra.mxu0 0.0
        %682 = vmatpush.msra.mxu0 0.0
        %683 = vmatpush.msra.mxu0 0.0
        %684 = vmatpush.msra.mxu0 0.0
        %685 = vmatpush.msra.mxu0 0.0
        %686 = vmatpush.msra.mxu0 0.0
        %687 = vmatpush.msra.mxu0 0.0
        %688 = vmatpush.msra.mxu0 0.0
        %689 = vmatpush.msra.mxu0 %v680
        %690 = vmatpush.msra.mxu0 %v679
        %691 = vmatpush.msra.mxu0 %v678
        %692 = vmatpush.msra.mxu0 %v677
        %693 = vmatpush.msra.mxu0 %v676
        %694 = vmatpush.msra.mxu0 %v675
        %695 = vmatpush.msra.mxu0 %v674
        %696 = vmatpush.msra.mxu0 %v673
        %697 = vmatmul.f32.gmra.mxu0 %v311
        %v698 = vpop.f32.mrf.mxu0
        %v699 = vadd.f32 0.0, %v698
        %700 = vmatmul.f32.gmra.mxu0 %v314
        %v701 = vpop.f32.mrf.mxu0
        %v702 = vadd.f32 0.0, %v701
        %703 = vmatmul.f32.gmra.mxu0 %v317
        %v704 = vpop.f32.mrf.mxu0
        %v705 = vadd.f32 0.0, %v704
        %706 = vmatmul.f32.gmra.mxu0 %v320
        %v707 = vpop.f32.mrf.mxu0
        %v708 = vadd.f32 0.0, %v707
        %709 = vdwg.mxu0
        %vm710 = vmand %vm651, %vm351
        %vm711 = vmand %vm710, %vm353
        %v712 = vadd.s32 %v250, 8
        %vm713 = vcmp.eq.s32.totalorder %v241, %v712
        %vm714 = vcmp.eq.s32.totalorder %v242, %v712
        %vm715 = vcmp.eq.s32.totalorder %v243, %v712
        %vm716 = vcmp.eq.s32.totalorder %v244, %v712
        %vm717 = vcmp.eq.s32.totalorder %v245, %v712
        %vm718 = vcmp.eq.s32.totalorder %v246, %v712
        %vm719 = vcmp.eq.s32.totalorder %v247, %v712
        %vm720 = vcmp.eq.s32.totalorder %v248, %v712
        %v721 = vsel %vm711, 1, 0
        %vm722 = vcmp.eq.s32.totalorder %v721, 1
        %vm723 = vmand %vm713, %vm722
        %vm724 = vmand %vm714, %vm722
        %vm725 = vmand %vm715, %vm722
        %vm726 = vmand %vm716, %vm722
        %vm727 = vmand %vm717, %vm722
        %vm728 = vmand %vm718, %vm722
        %vm729 = vmand %vm719, %vm722
        %vm730 = vmand %vm720, %vm722
        %v731 = vsel %vm723, 1.0, 0.0
        %v732 = vsel %vm724, 1.0, 0.0
        %v733 = vsel %vm725, 1.0, 0.0
        %v734 = vsel %vm726, 1.0, 0.0
        %v735 = vsel %vm727, 1.0, 0.0
        %v736 = vsel %vm728, 1.0, 0.0
        %v737 = vsel %vm729, 1.0, 0.0
        %v738 = vsel %vm730, 1.0, 0.0
        %739 = vmatpush.msra.mxu0 0.0
        %740 = vmatpush.msra.mxu0 0.0
        %741 = vmatpush.msra.mxu0 0.0
        %742 = vmatpush.msra.mxu0 0.0
        %743 = vmatpush.msra.mxu0 0.0
        %744 = vmatpush.msra.mxu0 0.0
        %745 = vmatpush.msra.mxu0 0.0
        %746 = vmatpush.msra.mxu0 0.0
        %747 = vmatpush.msra.mxu0 %v738
        %748 = vmatpush.msra.mxu0 %v737
        %749 = vmatpush.msra.mxu0 %v736
        %750 = vmatpush.msra.mxu0 %v735
        %751 = vmatpush.msra.mxu0 %v734
        %752 = vmatpush.msra.mxu0 %v733
        %753 = vmatpush.msra.mxu0 %v732
        %754 = vmatpush.msra.mxu0 %v731
        %755 = vmatmul.f32.gmra.mxu0 %v311
        %v756 = vpop.f32.mrf.mxu0
        %v757 = vadd.f32 0.0, %v756
        %758 = vmatmul.f32.gmra.mxu0 %v314
        %v759 = vpop.f32.mrf.mxu0
        %v760 = vadd.f32 0.0, %v759
        %761 = vmatmul.f32.gmra.mxu0 %v317
        %v762 = vpop.f32.mrf.mxu0
        %v763 = vadd.f32 0.0, %v762
        %764 = vmatmul.f32.gmra.mxu0 %v320
        %v765 = vpop.f32.mrf.mxu0
        %v766 = vadd.f32 0.0, %v765
        %767 = vdwg.mxu0
        %vm768 = vmand %vm651, %vm412
        %vm769 = vmand %vm768, %vm414
        %v770 = vadd.s32 %v250, 9
        %vm771 = vcmp.eq.s32.totalorder %v241, %v770
        %vm772 = vcmp.eq.s32.totalorder %v242, %v770
        %vm773 = vcmp.eq.s32.totalorder %v243, %v770
        %vm774 = vcmp.eq.s32.totalorder %v244, %v770
        %vm775 = vcmp.eq.s32.totalorder %v245, %v770
        %vm776 = vcmp.eq.s32.totalorder %v246, %v770
        %vm777 = vcmp.eq.s32.totalorder %v247, %v770
        %vm778 = vcmp.eq.s32.totalorder %v248, %v770
        %v779 = vsel %vm769, 1, 0
        %vm780 = vcmp.eq.s32.totalorder %v779, 1
        %vm781 = vmand %vm771, %vm780
        %vm782 = vmand %vm772, %vm780
        %vm783 = vmand %vm773, %vm780
        %vm784 = vmand %vm774, %vm780
        %vm785 = vmand %vm775, %vm780
        %vm786 = vmand %vm776, %vm780
        %vm787 = vmand %vm777, %vm780
        %vm788 = vmand %vm778, %vm780
        %v789 = vsel %vm781, 1.0, 0.0
        %v790 = vsel %vm782, 1.0, 0.0
        %v791 = vsel %vm783, 1.0, 0.0
        %v792 = vsel %vm784, 1.0, 0.0
        %v793 = vsel %vm785, 1.0, 0.0
        %v794 = vsel %vm786, 1.0, 0.0
        %v795 = vsel %vm787, 1.0, 0.0
        %v796 = vsel %vm788, 1.0, 0.0
        %797 = vmatpush.msra.mxu0 0.0
        %798 = vmatpush.msra.mxu0 0.0
        %799 = vmatpush.msra.mxu0 0.0
        %800 = vmatpush.msra.mxu0 0.0
        %801 = vmatpush.msra.mxu0 0.0
        %802 = vmatpush.msra.mxu0 0.0
        %803 = vmatpush.msra.mxu0 0.0
        %804 = vmatpush.msra.mxu0 0.0
        %805 = vmatpush.msra.mxu0 %v796
        %806 = vmatpush.msra.mxu0 %v795
        %807 = vmatpush.msra.mxu0 %v794
        %808 = vmatpush.msra.mxu0 %v793
        %809 = vmatpush.msra.mxu0 %v792
        %810 = vmatpush.msra.mxu0 %v791
        %811 = vmatpush.msra.mxu0 %v790
        %812 = vmatpush.msra.mxu0 %v789
        %813 = vmatmul.f32.gmra.mxu0 %v311
        %v814 = vpop.f32.mrf.mxu0
        %v815 = vadd.f32 0.0, %v814
        %816 = vmatmul.f32.gmra.mxu0 %v314
        %v817 = vpop.f32.mrf.mxu0
        %v818 = vadd.f32 0.0, %v817
        %819 = vmatmul.f32.gmra.mxu0 %v317
        %v820 = vpop.f32.mrf.mxu0
        %v821 = vadd.f32 0.0, %v820
        %822 = vmatmul.f32.gmra.mxu0 %v320
        %v823 = vpop.f32.mrf.mxu0
        %v824 = vadd.f32 0.0, %v823
        %825 = vdwg.mxu0
        %827 = vset.pattern.permute.xlu0 0
        %828 = vperm.xlu0 %827, %v235
        %v829 = vpop.permute.xlu0 %828
        %832 = vset.pattern.permute.xlu0 0
        %833 = vperm.xlu0 %832, %v236
        %v834 = vpop.permute.xlu0 %833
        %vm836 = vcmask 261120
        %v838 = vsel %vm836, %v231, 0
        %v841 = vsel %vm836, %v234, 0
        %843 = vmatpush.msra.mxu0 %v531
        %844 = vmatpush.msra.mxu0 %v528
        %845 = vmatpush.msra.mxu0 %v525
        %846 = vmatpush.msra.mxu0 %v522
        %847 = vmatpush.msra.mxu0 %v470
        %848 = vmatpush.msra.mxu0 %v467
        %849 = vmatpush.msra.mxu0 %v464
        %850 = vmatpush.msra.mxu0 %v461
        %851 = vmatpush.msra.mxu0 %v409
        %852 = vmatpush.msra.mxu0 %v406
        %853 = vmatpush.msra.mxu0 %v403
        %854 = vmatpush.msra.mxu0 %v400
        %855 = vmatpush.msra.mxu0 %v349
        %856 = vmatpush.msra.mxu0 %v346
        %857 = vmatpush.msra.mxu0 %v343
        %858 = vmatpush.msra.mxu0 %v340
        %859 = vmatmul.f32.gmra.mxu0 %v229
        %v860 = vpop.f32.mrf.mxu0
        %v861 = vadd.f32 %v829, %v860
        %862 = vmatmul.f32.gmra.mxu0 %v232
        %v863 = vpop.f32.mrf.mxu0
        %v864 = vadd.f32 %v834, %v863
        %865 = vdwg.mxu0
        %866 = vmatpush.msra.mxu0 %v766
        %867 = vmatpush.msra.mxu0 %v763
        %868 = vmatpush.msra.mxu0 %v760
        %869 = vmatpush.msra.mxu0 %v757
        %870 = vmatpush.msra.mxu0 %v708
        %871 = vmatpush.msra.mxu0 %v705
        %872 = vmatpush.msra.mxu0 %v702
        %873 = vmatpush.msra.mxu0 %v699
        %874 = vmatpush.msra.mxu0 %v646
        %875 = vmatpush.msra.mxu0 %v643
        %876 = vmatpush.msra.mxu0 %v640
        %877 = vmatpush.msra.mxu0 %v637
        %878 = vmatpush.msra.mxu0 %v588
        %879 = vmatpush.msra.mxu0 %v585
        %880 = vmatpush.msra.mxu0 %v582
        %881 = vmatpush.msra.mxu0 %v579
        %882 = vmatmul.f32.gmra.mxu0 %v230
        %v883 = vpop.f32.mrf.mxu0
        %v884 = vadd.f32 %v861, %v883
        %885 = vmatmul.f32.gmra.mxu0 %v233
        %v886 = vpop.f32.mrf.mxu0
        %v887 = vadd.f32 %v864, %v886
        %888 = vdwg.mxu0
        %889 = vmatpush.msra.mxu0 0.0
        %890 = vmatpush.msra.mxu0 0.0
        %891 = vmatpush.msra.mxu0 0.0
        %892 = vmatpush.msra.mxu0 0.0
        %893 = vmatpush.msra.mxu0 0.0
        %894 = vmatpush.msra.mxu0 0.0
        %895 = vmatpush.msra.mxu0 0.0
        %896 = vmatpush.msra.mxu0 0.0
        %897 = vmatpush.msra.mxu0 0.0
        %898 = vmatpush.msra.mxu0 0.0
        %899 = vmatpush.msra.mxu0 0.0
        %900 = vmatpush.msra.mxu0 0.0
        %901 = vmatpush.msra.mxu0 %v824
        %902 = vmatpush.msra.mxu0 %v821
        %903 = vmatpush.msra.mxu0 %v818
        %904 = vmatpush.msra.mxu0 %v815
        %905 = vmatmul.f32.gmra.mxu0 %v838
        %v906 = vpop.f32.mrf.mxu0
        %v907 = vadd.f32 %v884, %v906
        %908 = vmatmul.f32.gmra.mxu0 %v841
        %v909 = vpop.f32.mrf.mxu0
        %v910 = vadd.f32 %v887, %v909
        %911 = vdwg.mxu0
        %v912 = vmax.f32 %v907, 0.0
        %v913 = vmax.f32 %v910, 0.0
        %vm914 = vcmp.ge.s32.totalorder %v241, 8
        %vm915 = vcmp.ge.s32.totalorder %v242, 8
        %vm916 = vcmp.ge.s32.totalorder %v243, 8
        %vm917 = vcmp.ge.s32.totalorder %v244, 8
        %vm918 = vcmp.ge.s32.totalorder %v245, 8
        %vm919 = vcmp.ge.s32.totalorder %v246, 8
        %vm920 = vcmp.ge.s32.totalorder %v247, 8
        %vm921 = vcmp.ge.s32.totalorder %v248, 8
        %v922 = vsel %vm914, 1, 0
        %v923 = vsel %vm915, 1, 0
        %v924 = vsel %vm916, 1, 0
        %v925 = vsel %vm917, 1, 0
        %v926 = vsel %vm918, 1, 0
        %v927 = vsel %vm919, 1, 0
        %v928 = vsel %vm920, 1, 0
        %v929 = vsel %vm921, 1, 0
        %vm930 = vcmp.ge.s32.totalorder %v241, 16
        %vm931 = vcmp.ge.s32.totalorder %v242, 16
        %vm932 = vcmp.ge.s32.totalorder %v243, 16
        %vm933 = vcmp.ge.s32.totalorder %v244, 16
        %vm934 = vcmp.ge.s32.totalorder %v245, 16
        %vm935 = vcmp.ge.s32.totalorder %v246, 16
        %vm936 = vcmp.ge.s32.totalorder %v247, 16
        %vm937 = vcmp.ge.s32.totalorder %v248, 16
        %v938 = vsel %vm930, 1, 0
        %v939 = vsel %vm931, 1, 0
        %v940 = vsel %vm932, 1, 0
        %v941 = vsel %vm933, 1, 0
        %v942 = vsel %vm934, 1, 0
        %v943 = vsel %vm935, 1, 0
        %v944 = vsel %vm936, 1, 0
        %v945 = vsel %vm937, 1, 0
        %v946 = vadd.s32 %v922, %v938
        %v947 = vadd.s32 %v923, %v939
        %v948 = vadd.s32 %v924, %v940
        %v949 = vadd.s32 %v925, %v941
        %v950 = vadd.s32 %v926, %v942
        %v951 = vadd.s32 %v927, %v943
        %v952 = vadd.s32 %v928, %v944
        %v953 = vadd.s32 %v929, %v945
        %vm954 = vcmp.ge.s32.totalorder %v241, 24
        %vm955 = vcmp.ge.s32.totalorder %v242, 24
        %vm956 = vcmp.ge.s32.totalorder %v243, 24
        %vm957 = vcmp.ge.s32.totalorder %v244, 24
        %vm958 = vcmp.ge.s32.totalorder %v245, 24
        %vm959 = vcmp.ge.s32.totalorder %v246, 24
        %vm960 = vcmp.ge.s32.totalorder %v247, 24
        %vm961 = vcmp.ge.s32.totalorder %v248, 24
        %v962 = vsel %vm954, 1, 0
        %v963 = vsel %vm955, 1, 0
        %v964 = vsel %vm956, 1, 0
        %v965 = vsel %vm957, 1, 0
        %v966 = vsel %vm958, 1, 0
        %v967 = vsel %vm959, 1, 0
        %v968 = vsel %vm960, 1, 0
        %v969 = vsel %vm961, 1, 0
        %v970 = vadd.s32 %v946, %v962
        %v971 = vadd.s32 %v947, %v963
        %v972 = vadd.s32 %v948, %v964
        %v973 = vadd.s32 %v949, %v965
        %v974 = vadd.s32 %v950, %v966
        %v975 = vadd.s32 %v951, %v967
        %v976 = vadd.s32 %v952, %v968
        %v977 = vadd.s32 %v953, %v969
        %vm978 = vcmp.ge.s32.totalorder %v241, 32
        %vm979 = vcmp.ge.s32.totalorder %v242, 32
        %vm980 = vcmp.ge.s32.totalorder %v243, 32
        %vm981 = vcmp.ge.s32.totalorder %v244, 32
        %vm982 = vcmp.ge.s32.totalorder %v245, 32
        %vm983 = vcmp.ge.s32.totalorder %v246, 32
        %vm984 = vcmp.ge.s32.totalorder %v247, 32
        %vm985 = vcmp.ge.s32.totalorder %v248, 32
        %v986 = vsel %vm978, 1, 0
        %v987 = vsel %vm979, 1, 0
        %v988 = vsel %vm980, 1, 0
        %v989 = vsel %vm981, 1, 0
        %v990 = vsel %vm982, 1, 0
        %v991 = vsel %vm983, 1, 0
        %v992 = vsel %vm984, 1, 0
        %v993 = vsel %vm985, 1, 0
        %v994 = vadd.s32 %v970, %v986
        %v995 = vadd.s32 %v971, %v987
        %v996 = vadd.s32 %v972, %v988
        %v997 = vadd.s32 %v973, %v989
        %v998 = vadd.s32 %v974, %v990
        %v999 = vadd.s32 %v975, %v991
        %v1000 = vadd.s32 %v976, %v992
        %v1001 = vadd.s32 %v977, %v993
        %vm1002 = vcmp.ge.s32.totalorder %v241, 40
        %vm1003 = vcmp.ge.s32.totalorder %v242, 40
        %vm1004 = vcmp.ge.s32.totalorder %v243, 40
        %vm1005 = vcmp.ge.s32.totalorder %v244, 40
        %vm1006 = vcmp.ge.s32.totalorder %v245, 40
        %vm1007 = vcmp.ge.s32.totalorder %v246, 40
        %vm1008 = vcmp.ge.s32.totalorder %v247, 40
        %vm1009 = vcmp.ge.s32.totalorder %v248, 40
        %v1010 = vsel %vm1002, 1, 0
        %v1011 = vsel %vm1003, 1, 0
        %v1012 = vsel %vm1004, 1, 0
        %v1013 = vsel %vm1005, 1, 0
        %v1014 = vsel %vm1006, 1, 0
        %v1015 = vsel %vm1007, 1, 0
        %v1016 = vsel %vm1008, 1, 0
        %v1017 = vsel %vm1009, 1, 0
        %v1018 = vadd.s32 %v994, %v1010
        %v1019 = vadd.s32 %v995, %v1011
        %v1020 = vadd.s32 %v996, %v1012
        %v1021 = vadd.s32 %v997, %v1013
        %v1022 = vadd.s32 %v998, %v1014
        %v1023 = vadd.s32 %v999, %v1015
        %v1024 = vadd.s32 %v1000, %v1016
        %v1025 = vadd.s32 %v1001, %v1017
        %vm1026 = vcmp.ge.s32.totalorder %v241, 48
        %vm1027 = vcmp.ge.s32.totalorder %v242, 48
        %vm1028 = vcmp.ge.s32.totalorder %v243, 48
        %vm1029 = vcmp.ge.s32.totalorder %v244, 48
        %vm1030 = vcmp.ge.s32.totalorder %v245, 48
        %vm1031 = vcmp.ge.s32.totalorder %v246, 48
        %vm1032 = vcmp.ge.s32.totalorder %v247, 48
        %vm1033 = vcmp.ge.s32.totalorder %v248, 48
        %v1034 = vsel %vm1026, 1, 0
        %v1035 = vsel %vm1027, 1, 0
        %v1036 = vsel %vm1028, 1, 0
        %v1037 = vsel %vm1029, 1, 0
        %v1038 = vsel %vm1030, 1, 0
        %v1039 = vsel %vm1031, 1, 0
        %v1040 = vsel %vm1032, 1, 0
        %v1041 = vsel %vm1033, 1, 0
        %v1042 = vadd.s32 %v1018, %v1034
        %v1043 = vadd.s32 %v1019, %v1035
        %v1044 = vadd.s32 %v1020, %v1036
        %v1045 = vadd.s32 %v1021, %v1037
        %v1046 = vadd.s32 %v1022, %v1038
        %v1047 = vadd.s32 %v1023, %v1039
        %v1048 = vadd.s32 %v1024, %v1040
        %v1049 = vadd.s32 %v1025, %v1041
        %vm1050 = vcmp.ge.s32.totalorder %v241, 56
        %vm1051 = vcmp.ge.s32.totalorder %v242, 56
        %vm1052 = vcmp.ge.s32.totalorder %v243, 56
        %vm1053 = vcmp.ge.s32.totalorder %v244, 56
        %vm1054 = vcmp.ge.s32.totalorder %v245, 56
        %vm1055 = vcmp.ge.s32.totalorder %v246, 56
        %vm1056 = vcmp.ge.s32.totalorder %v247, 56
        %vm1057 = vcmp.ge.s32.totalorder %v248, 56
        %v1058 = vsel %vm1050, 1, 0
        %v1059 = vsel %vm1051, 1, 0
        %v1060 = vsel %vm1052, 1, 0
        %v1061 = vsel %vm1053, 1, 0
        %v1062 = vsel %vm1054, 1, 0
        %v1063 = vsel %vm1055, 1, 0
        %v1064 = vsel %vm1056, 1, 0
        %v1065 = vsel %vm1057, 1, 0
        %v1066 = vadd.s32 %v1042, %v1058
        %v1067 = vadd.s32 %v1043, %v1059
        %v1068 = vadd.s32 %v1044, %v1060
        %v1069 = vadd.s32 %v1045, %v1061
        %v1070 = vadd.s32 %v1046, %v1062
        %v1071 = vadd.s32 %v1047, %v1063
        %v1072 = vadd.s32 %v1048, %v1064
        %v1073 = vadd.s32 %v1049, %v1065
        %v1074 = vmul.u32 %v1066, 8
        %v1075 = vmul.u32 %v1067, 8
        %v1076 = vmul.u32 %v1068, 8
        %v1077 = vmul.u32 %v1069, 8
        %v1078 = vmul.u32 %v1070, 8
        %v1079 = vmul.u32 %v1071, 8
        %v1080 = vmul.u32 %v1072, 8
        %v1081 = vmul.u32 %v1073, 8
        %v1082 = vsub.s32 %v241, %v1074
        %v1083 = vsub.s32 %v242, %v1075
        %v1084 = vsub.s32 %v243, %v1076
        %v1085 = vsub.s32 %v244, %v1077
        %v1086 = vsub.s32 %v245, %v1078
        %v1087 = vsub.s32 %v246, %v1079
        %v1088 = vsub.s32 %v247, %v1080
        %v1089 = vsub.s32 %v248, %v1081
        %v1090 = vadd.s32 %v250, 128
        %vm1091 = vcmp.ge.s32.totalorder %v1090, 16
        %v1092 = vsel %vm1091, 1, 0
        %vm1093 = vcmp.ge.s32.totalorder %v1090, 32
        %v1094 = vsel %vm1093, 1, 0
        %v1095 = vadd.s32 %v254, %v260
        %v1096 = vadd.s32 %v1092, %v1094
        %vm1097 = vcmp.ge.s32.totalorder %v1090, 48
        %v1098 = vsel %vm1097, 1, 0
        %v1099 = vadd.s32 %v1095, %v266
        %v1100 = vadd.s32 %v1096, %v1098
        %vm1101 = vcmp.ge.s32.totalorder %v250, 64
        %vm1102 = vcmp.ge.s32.totalorder %v1090, 64
        %v1103 = vsel %vm1101, 1, 0
        %v1104 = vsel %vm1102, 1, 0
        %v1105 = vadd.s32 %v1099, %v1103
        %v1106 = vadd.s32 %v1100, %v1104
        %vm1107 = vcmp.ge.s32.totalorder %v250, 80
        %vm1108 = vcmp.ge.s32.totalorder %v1090, 80
        %v1109 = vsel %vm1107, 1, 0
        %v1110 = vsel %vm1108, 1, 0
        %v1111 = vadd.s32 %v1105, %v1109
        %v1112 = vadd.s32 %v1106, %v1110
        %vm1113 = vcmp.ge.s32.totalorder %v250, 96
        %vm1114 = vcmp.ge.s32.totalorder %v1090, 96
        %v1115 = vsel %vm1113, 1, 0
        %v1116 = vsel %vm1114, 1, 0
        %v1117 = vadd.s32 %v1111, %v1115
        %v1118 = vadd.s32 %v1112, %v1116
        %vm1119 = vcmp.ge.s32.totalorder %v250, 112
        %vm1120 = vcmp.ge.s32.totalorder %v1090, 112
        %v1121 = vsel %vm1119, 1, 0
        %v1122 = vsel %vm1120, 1, 0
        %v1123 = vadd.s32 %v1117, %v1121
        %v1124 = vadd.s32 %v1118, %v1122
        %vm1125 = vcmp.ge.s32.totalorder %v250, 128
        %vm1126 = vcmp.ge.s32.totalorder %v1090, 128
        %v1127 = vsel %vm1125, 1, 0
        %v1128 = vsel %vm1126, 1, 0
        %v1129 = vadd.s32 %v1123, %v1127
        %v1130 = vadd.s32 %v1124, %v1128
        %vm1131 = vcmp.ge.s32.totalorder %v250, 144
        %vm1132 = vcmp.ge.s32.totalorder %v1090, 144
        %v1133 = vsel %vm1131, 1, 0
        %v1134 = vsel %vm1132, 1, 0
        %v1135 = vadd.s32 %v1129, %v1133
        %v1136 = vadd.s32 %v1130, %v1134
        %vm1137 = vcmp.ge.s32.totalorder %v250, 160
        %vm1138 = vcmp.ge.s32.totalorder %v1090, 160
        %v1139 = vsel %vm1137, 1, 0
        %v1140 = vsel %vm1138, 1, 0
        %v1141 = vadd.s32 %v1135, %v1139
        %v1142 = vadd.s32 %v1136, %v1140
        %vm1143 = vcmp.ge.s32.totalorder %v250, 176
        %vm1144 = vcmp.ge.s32.totalorder %v1090, 176
        %v1145 = vsel %vm1143, 1, 0
        %v1146 = vsel %vm1144, 1, 0
        %v1147 = vadd.s32 %v1141, %v1145
        %v1148 = vadd.s32 %v1142, %v1146
        %vm1149 = vcmp.ge.s32.totalorder %v250, 192
        %vm1150 = vcmp.ge.s32.totalorder %v1090, 192
        %v1151 = vsel %vm1149, 1, 0
        %v1152 = vsel %vm1150, 1, 0
        %v1153 = vadd.s32 %v1147, %v1151
        %v1154 = vadd.s32 %v1148, %v1152
        %vm1155 = vcmp.ge.s32.totalorder %v250, 208
        %vm1156 = vcmp.ge.s32.totalorder %v1090, 208
        %v1157 = vsel %vm1155, 1, 0
        %v1158 = vsel %vm1156, 1, 0
        %v1159 = vadd.s32 %v1153, %v1157
        %v1160 = vadd.s32 %v1154, %v1158
        %vm1161 = vcmp.ge.s32.totalorder %v250, 224
        %vm1162 = vcmp.ge.s32.totalorder %v1090, 224
        %v1163 = vsel %vm1161, 1, 0
        %v1164 = vsel %vm1162, 1, 0
        %v1165 = vadd.s32 %v1159, %v1163
        %v1166 = vadd.s32 %v1160, %v1164
        %vm1167 = vcmp.ge.s32.totalorder %v250, 240
        %vm1168 = vcmp.ge.s32.totalorder %v1090, 240
        %v1169 = vsel %vm1167, 1, 0
        %v1170 = vsel %vm1168, 1, 0
        %v1171 = vadd.s32 %v1165, %v1169
        %v1172 = vadd.s32 %v1166, %v1170
        %v1173 = vmul.u32 %v1171, 16
        %v1174 = vmul.u32 %v1172, 16
        %v1175 = vsub.s32 %v250, %v1173
        %v1176 = vsub.s32 %v1090, %v1174
        %v1177 = vadd.s32 %v1171, 4294967295
        %v1178 = vadd.s32 %v1172, 4294967295
        %v1179 = vadd.s32 %v1175, 4294967295
        %v1180 = vadd.s32 %v1176, 4294967295
        %vm1181 = vcmp.ge.s32.totalorder %v1177, 0
        %vm1182 = vcmp.ge.s32.totalorder %v1178, 0
        %vm1183 = vcmp.lt.s32.totalorder %v1177, 16
        %vm1184 = vcmp.lt.s32.totalorder %v1178, 16
        %vm1185 = vmand %vm1181, %vm1183
        %vm1186 = vmand %vm1182, %vm1184
        %vm1187 = vcmp.ge.s32.totalorder %v1179, 0
        %vm1188 = vcmp.ge.s32.totalorder %v1180, 0
        %vm1189 = vmand %vm1185, %vm1187
        %vm1190 = vmand %vm1186, %vm1188
        %vm1191 = vcmp.lt.s32.totalorder %v1179, 16
        %vm1192 = vcmp.lt.s32.totalorder %v1180, 16
        %vm1193 = vmand %vm1189, %vm1191
        %vm1194 = vmand %vm1190, %vm1192
        %v1195 = vmul.u32 %v1066, 2
        %v1196 = vmul.u32 %v1067, 2
        %v1197 = vmul.u32 %v1068, 2
        %v1198 = vmul.u32 %v1069, 2
        %v1199 = vmul.u32 %v1070, 2
        %v1200 = vmul.u32 %v1071, 2
        %v1201 = vmul.u32 %v1072, 2
        %v1202 = vmul.u32 %v1073, 2
        %vm1203 = vcmp.ge.s32.totalorder %v1177, %v1195
        %vm1204 = vcmp.ge.s32.totalorder %v1178, %v1195
        %vm1205 = vcmp.ge.s32.totalorder %v1177, %v1196
        %vm1206 = vcmp.ge.s32.totalorder %v1178, %v1196
        %vm1207 = vcmp.ge.s32.totalorder %v1177, %v1197
        %vm1208 = vcmp.ge.s32.totalorder %v1178, %v1197
        %vm1209 = vcmp.ge.s32.totalorder %v1177, %v1198
        %vm1210 = vcmp.ge.s32.totalorder %v1178, %v1198
        %vm1211 = vcmp.ge.s32.totalorder %v1177, %v1199
        %vm1212 = vcmp.ge.s32.totalorder %v1178, %v1199
        %vm1213 = vcmp.ge.s32.totalorder %v1177, %v1200
        %vm1214 = vcmp.ge.s32.totalorder %v1178, %v1200
        %vm1215 = vcmp.ge.s32.totalorder %v1177, %v1201
        %vm1216 = vcmp.ge.s32.totalorder %v1178, %v1201
        %vm1217 = vcmp.ge.s32.totalorder %v1177, %v1202
        %vm1218 = vcmp.ge.s32.totalorder %v1178, %v1202
        %v1219 = vadd.s32 %v1195, 1
        %v1220 = vadd.s32 %v1196, 1
        %v1221 = vadd.s32 %v1197, 1
        %v1222 = vadd.s32 %v1198, 1
        %v1223 = vadd.s32 %v1199, 1
        %v1224 = vadd.s32 %v1200, 1
        %v1225 = vadd.s32 %v1201, 1
        %v1226 = vadd.s32 %v1202, 1
        %vm1227 = vcmp.le.s32.totalorder %v1177, %v1219
        %vm1228 = vcmp.le.s32.totalorder %v1178, %v1219
        %vm1229 = vcmp.le.s32.totalorder %v1177, %v1220
        %vm1230 = vcmp.le.s32.totalorder %v1178, %v1220
        %vm1231 = vcmp.le.s32.totalorder %v1177, %v1221
        %vm1232 = vcmp.le.s32.totalorder %v1178, %v1221
        %vm1233 = vcmp.le.s32.totalorder %v1177, %v1222
        %vm1234 = vcmp.le.s32.totalorder %v1178, %v1222
        %vm1235 = vcmp.le.s32.totalorder %v1177, %v1223
        %vm1236 = vcmp.le.s32.totalorder %v1178, %v1223
        %vm1237 = vcmp.le.s32.totalorder %v1177, %v1224
        %vm1238 = vcmp.le.s32.totalorder %v1178, %v1224
        %vm1239 = vcmp.le.s32.totalorder %v1177, %v1225
        %vm1240 = vcmp.le.s32.totalorder %v1178, %v1225
        %vm1241 = vcmp.le.s32.totalorder %v1177, %v1226
        %vm1242 = vcmp.le.s32.totalorder %v1178, %v1226
        %vm1243 = vmand %vm1203, %vm1227
        %vm1244 = vmand %vm1204, %vm1228
        %vm1245 = vmand %vm1205, %vm1229
        %vm1246 = vmand %vm1206, %vm1230
        %vm1247 = vmand %vm1207, %vm1231
        %vm1248 = vmand %vm1208, %vm1232
        %vm1249 = vmand %vm1209, %vm1233
        %vm1250 = vmand %vm1210, %vm1234
        %vm1251 = vmand %vm1211, %vm1235
        %vm1252 = vmand %vm1212, %vm1236
        %vm1253 = vmand %vm1213, %vm1237
        %vm1254 = vmand %vm1214, %vm1238
        %vm1255 = vmand %vm1215, %vm1239
        %vm1256 = vmand %vm1216, %vm1240
        %vm1257 = vmand %vm1217, %vm1241
        %vm1258 = vmand %vm1218, %vm1242
        %v1259 = vmul.u32 %v1082, 2
        %v1260 = vmul.u32 %v1083, 2
        %v1261 = vmul.u32 %v1084, 2
        %v1262 = vmul.u32 %v1085, 2
        %v1263 = vmul.u32 %v1086, 2
        %v1264 = vmul.u32 %v1087, 2
        %v1265 = vmul.u32 %v1088, 2
        %v1266 = vmul.u32 %v1089, 2
        %vm1267 = vcmp.ge.s32.totalorder %v1179, %v1259
        %vm1268 = vcmp.ge.s32.totalorder %v1180, %v1259
        %vm1269 = vcmp.ge.s32.totalorder %v1179, %v1260
        %vm1270 = vcmp.ge.s32.totalorder %v1180, %v1260
        %vm1271 = vcmp.ge.s32.totalorder %v1179, %v1261
        %vm1272 = vcmp.ge.s32.totalorder %v1180, %v1261
        %vm1273 = vcmp.ge.s32.totalorder %v1179, %v1262
        %vm1274 = vcmp.ge.s32.totalorder %v1180, %v1262
        %vm1275 = vcmp.ge.s32.totalorder %v1179, %v1263
        %vm1276 = vcmp.ge.s32.totalorder %v1180, %v1263
        %vm1277 = vcmp.ge.s32.totalorder %v1179, %v1264
        %vm1278 = vcmp.ge.s32.totalorder %v1180, %v1264
        %vm1279 = vcmp.ge.s32.totalorder %v1179, %v1265
        %vm1280 = vcmp.ge.s32.totalorder %v1180, %v1265
        %vm1281 = vcmp.ge.s32.totalorder %v1179, %v1266
        %vm1282 = vcmp.ge.s32.totalorder %v1180, %v1266
        %vm1283 = vmand %vm1243, %vm1267
        %vm1284 = vmand %vm1244, %vm1268
        %vm1285 = vmand %vm1245, %vm1269
        %vm1286 = vmand %vm1246, %vm1270
        %vm1287 = vmand %vm1247, %vm1271
        %vm1288 = vmand %vm1248, %vm1272
        %vm1289 = vmand %vm1249, %vm1273
        %vm1290 = vmand %vm1250, %vm1274
        %vm1291 = vmand %vm1251, %vm1275
        %vm1292 = vmand %vm1252, %vm1276
        %vm1293 = vmand %vm1253, %vm1277
        %vm1294 = vmand %vm1254, %vm1278
        %vm1295 = vmand %vm1255, %vm1279
        %vm1296 = vmand %vm1256, %vm1280
        %vm1297 = vmand %vm1257, %vm1281
        %vm1298 = vmand %vm1258, %vm1282
        %v1299 = vadd.s32 %v1259, 1
        %v1300 = vadd.s32 %v1260, 1
        %v1301 = vadd.s32 %v1261, 1
        %v1302 = vadd.s32 %v1262, 1
        %v1303 = vadd.s32 %v1263, 1
        %v1304 = vadd.s32 %v1264, 1
        %v1305 = vadd.s32 %v1265, 1
        %v1306 = vadd.s32 %v1266, 1
        %vm1307 = vcmp.le.s32.totalorder %v1179, %v1299
        %vm1308 = vcmp.le.s32.totalorder %v1180, %v1299
        %vm1309 = vcmp.le.s32.totalorder %v1179, %v1300
        %vm1310 = vcmp.le.s32.totalorder %v1180, %v1300
        %vm1311 = vcmp.le.s32.totalorder %v1179, %v1301
        %vm1312 = vcmp.le.s32.totalorder %v1180, %v1301
        %vm1313 = vcmp.le.s32.totalorder %v1179, %v1302
        %vm1314 = vcmp.le.s32.totalorder %v1180, %v1302
        %vm1315 = vcmp.le.s32.totalorder %v1179, %v1303
        %vm1316 = vcmp.le.s32.totalorder %v1180, %v1303
        %vm1317 = vcmp.le.s32.totalorder %v1179, %v1304
        %vm1318 = vcmp.le.s32.totalorder %v1180, %v1304
        %vm1319 = vcmp.le.s32.totalorder %v1179, %v1305
        %vm1320 = vcmp.le.s32.totalorder %v1180, %v1305
        %vm1321 = vcmp.le.s32.totalorder %v1179, %v1306
        %vm1322 = vcmp.le.s32.totalorder %v1180, %v1306
        %vm1323 = vmand %vm1283, %vm1307
        %vm1324 = vmand %vm1284, %vm1308
        %vm1325 = vmand %vm1285, %vm1309
        %vm1326 = vmand %vm1286, %vm1310
        %vm1327 = vmand %vm1287, %vm1311
        %vm1328 = vmand %vm1288, %vm1312
        %vm1329 = vmand %vm1289, %vm1313
        %vm1330 = vmand %vm1290, %vm1314
        %vm1331 = vmand %vm1291, %vm1315
        %vm1332 = vmand %vm1292, %vm1316
        %vm1333 = vmand %vm1293, %vm1317
        %vm1334 = vmand %vm1294, %vm1318
        %vm1335 = vmand %vm1295, %vm1319
        %vm1336 = vmand %vm1296, %vm1320
        %vm1337 = vmand %vm1297, %vm1321
        %vm1338 = vmand %vm1298, %vm1322
        %v1339 = vsel %vm1193, 1, 0
        %v1340 = vsel %vm1194, 1, 0
        %vm1341 = vcmp.eq.s32.totalorder %v1339, 1
        %vm1342 = vcmp.eq.s32.totalorder %v1340, 1
        %vm1343 = vmand %vm1323, %vm1341
        %vm1344 = vmand %vm1324, %vm1342
        %vm1345 = vmand %vm1325, %vm1341
        %vm1346 = vmand %vm1326, %vm1342
        %vm1347 = vmand %vm1327, %vm1341
        %vm1348 = vmand %vm1328, %vm1342
        %vm1349 = vmand %vm1329, %vm1341
        %vm1350 = vmand %vm1330, %vm1342
        %vm1351 = vmand %vm1331, %vm1341
        %vm1352 = vmand %vm1332, %vm1342
        %vm1353 = vmand %vm1333, %vm1341
        %vm1354 = vmand %vm1334, %vm1342
        %vm1355 = vmand %vm1335, %vm1341
        %vm1356 = vmand %vm1336, %vm1342
        %vm1357 = vmand %vm1337, %vm1341
        %vm1358 = vmand %vm1338, %vm1342
        %v1359 = vsel %vm1343, 1.0, 0.0
        %v1360 = vsel %vm1344, 1.0, 0.0
        %v1361 = vsel %vm1345, 1.0, 0.0
        %v1362 = vsel %vm1346, 1.0, 0.0
        %v1363 = vsel %vm1347, 1.0, 0.0
        %v1364 = vsel %vm1348, 1.0, 0.0
        %v1365 = vsel %vm1349, 1.0, 0.0
        %v1366 = vsel %vm1350, 1.0, 0.0
        %v1367 = vsel %vm1351, 1.0, 0.0
        %v1368 = vsel %vm1352, 1.0, 0.0
        %v1369 = vsel %vm1353, 1.0, 0.0
        %v1370 = vsel %vm1354, 1.0, 0.0
        %v1371 = vsel %vm1355, 1.0, 0.0
        %v1372 = vsel %vm1356, 1.0, 0.0
        %v1373 = vsel %vm1357, 1.0, 0.0
        %v1374 = vsel %vm1358, 1.0, 0.0
        %v1376 = vsel %vm309, %v912, 0
        %v1379 = vsel %vm309, %v913, 0
        %1381 = vmatpush.msra.mxu0 0.0
        %1382 = vmatpush.msra.mxu0 0.0
        %1383 = vmatpush.msra.mxu0 0.0
        %1384 = vmatpush.msra.mxu0 0.0
        %1385 = vmatpush.msra.mxu0 0.0
        %1386 = vmatpush.msra.mxu0 0.0
        %1387 = vmatpush.msra.mxu0 0.0
        %1388 = vmatpush.msra.mxu0 0.0
        %1389 = vmatpush.msra.mxu0 %v1373
        %1390 = vmatpush.msra.mxu0 %v1371
        %1391 = vmatpush.msra.mxu0 %v1369
        %1392 = vmatpush.msra.mxu0 %v1367
        %1393 = vmatpush.msra.mxu0 %v1365
        %1394 = vmatpush.msra.mxu0 %v1363
        %1395 = vmatpush.msra.mxu0 %v1361
        %1396 = vmatpush.msra.mxu0 %v1359
        %1397 = vmatmul.f32.gmra.mxu0 %v1376
        %v1398 = vpop.f32.mrf.mxu0
        %v1399 = vadd.f32 0.0, %v1398
        %1400 = vmatmul.f32.gmra.mxu0 %v1379
        %v1401 = vpop.f32.mrf.mxu0
        %v1402 = vadd.f32 0.0, %v1401
        %1403 = vdwg.mxu0
        %1404 = vmatpush.msra.mxu0 0.0
        %1405 = vmatpush.msra.mxu0 0.0
        %1406 = vmatpush.msra.mxu0 0.0
        %1407 = vmatpush.msra.mxu0 0.0
        %1408 = vmatpush.msra.mxu0 0.0
        %1409 = vmatpush.msra.mxu0 0.0
        %1410 = vmatpush.msra.mxu0 0.0
        %1411 = vmatpush.msra.mxu0 0.0
        %1412 = vmatpush.msra.mxu0 %v1374
        %1413 = vmatpush.msra.mxu0 %v1372
        %1414 = vmatpush.msra.mxu0 %v1370
        %1415 = vmatpush.msra.mxu0 %v1368
        %1416 = vmatpush.msra.mxu0 %v1366
        %1417 = vmatpush.msra.mxu0 %v1364
        %1418 = vmatpush.msra.mxu0 %v1362
        %1419 = vmatpush.msra.mxu0 %v1360
        %1420 = vmatmul.f32.gmra.mxu0 %v1376
        %v1421 = vpop.f32.mrf.mxu0
        %v1422 = vadd.f32 0.0, %v1421
        %1423 = vmatmul.f32.gmra.mxu0 %v1379
        %v1424 = vpop.f32.mrf.mxu0
        %v1425 = vadd.f32 0.0, %v1424
        %1426 = vdwg.mxu0
        %1428 = vset.pattern.permute.xlu0 0
        %1429 = vperm.xlu0 %1428, %v237
        %v1430 = vpop.permute.xlu0 %1429
        %1433 = vset.pattern.permute.xlu0 0
        %1434 = vperm.xlu0 %1433, %v238
        %v1435 = vpop.permute.xlu0 %1434
        %v1437 = vmul.f32 %v1399, %v1430
        %v1438 = vmul.f32 %v1422, %v1430
        %v1439 = vmul.f32 %v1402, %v1435
        %v1440 = vmul.f32 %v1425, %v1435
        %v1441 = vadd.f32 %v1437, 0.0
        %v1442 = vadd.f32 %v1438, 0.0
        %v1443 = vadd.f32 %v1439, 0.0
        %v1444 = vadd.f32 %v1440, 0.0
        %vm1445 = vcmp.ge.s32.totalorder %v1175, 0
        %vm1446 = vcmp.ge.s32.totalorder %v1176, 0
        %vm1447 = vmand %vm1185, %vm1445
        %vm1448 = vmand %vm1186, %vm1446
        %vm1449 = vcmp.lt.s32.totalorder %v1175, 16
        %vm1450 = vcmp.lt.s32.totalorder %v1176, 16
        %vm1451 = vmand %vm1447, %vm1449
        %vm1452 = vmand %vm1448, %vm1450
        %vm1453 = vcmp.ge.s32.totalorder %v1175, %v1259
        %vm1454 = vcmp.ge.s32.totalorder %v1176, %v1259
        %vm1455 = vcmp.ge.s32.totalorder %v1175, %v1260
        %vm1456 = vcmp.ge.s32.totalorder %v1176, %v1260
        %vm1457 = vcmp.ge.s32.totalorder %v1175, %v1261
        %vm1458 = vcmp.ge.s32.totalorder %v1176, %v1261
        %vm1459 = vcmp.ge.s32.totalorder %v1175, %v1262
        %vm1460 = vcmp.ge.s32.totalorder %v1176, %v1262
        %vm1461 = vcmp.ge.s32.totalorder %v1175, %v1263
        %vm1462 = vcmp.ge.s32.totalorder %v1176, %v1263
        %vm1463 = vcmp.ge.s32.totalorder %v1175, %v1264
        %vm1464 = vcmp.ge.s32.totalorder %v1176, %v1264
        %vm1465 = vcmp.ge.s32.totalorder %v1175, %v1265
        %vm1466 = vcmp.ge.s32.totalorder %v1176, %v1265
        %vm1467 = vcmp.ge.s32.totalorder %v1175, %v1266
        %vm1468 = vcmp.ge.s32.totalorder %v1176, %v1266
        %vm1469 = vmand %vm1243, %vm1453
        %vm1470 = vmand %vm1244, %vm1454
        %vm1471 = vmand %vm1245, %vm1455
        %vm1472 = vmand %vm1246, %vm1456
        %vm1473 = vmand %vm1247, %vm1457
        %vm1474 = vmand %vm1248, %vm1458
        %vm1475 = vmand %vm1249, %vm1459
        %vm1476 = vmand %vm1250, %vm1460
        %vm1477 = vmand %vm1251, %vm1461
        %vm1478 = vmand %vm1252, %vm1462
        %vm1479 = vmand %vm1253, %vm1463
        %vm1480 = vmand %vm1254, %vm1464
        %vm1481 = vmand %vm1255, %vm1465
        %vm1482 = vmand %vm1256, %vm1466
        %vm1483 = vmand %vm1257, %vm1467
        %vm1484 = vmand %vm1258, %vm1468
        %vm1485 = vcmp.le.s32.totalorder %v1175, %v1299
        %vm1486 = vcmp.le.s32.totalorder %v1176, %v1299
        %vm1487 = vcmp.le.s32.totalorder %v1175, %v1300
        %vm1488 = vcmp.le.s32.totalorder %v1176, %v1300
        %vm1489 = vcmp.le.s32.totalorder %v1175, %v1301
        %vm1490 = vcmp.le.s32.totalorder %v1176, %v1301
        %vm1491 = vcmp.le.s32.totalorder %v1175, %v1302
        %vm1492 = vcmp.le.s32.totalorder %v1176, %v1302
        %vm1493 = vcmp.le.s32.totalorder %v1175, %v1303
        %vm1494 = vcmp.le.s32.totalorder %v1176, %v1303
        %vm1495 = vcmp.le.s32.totalorder %v1175, %v1304
        %vm1496 = vcmp.le.s32.totalorder %v1176, %v1304
        %vm1497 = vcmp.le.s32.totalorder %v1175, %v1305
        %vm1498 = vcmp.le.s32.totalorder %v1176, %v1305
        %vm1499 = vcmp.le.s32.totalorder %v1175, %v1306
        %vm1500 = vcmp.le.s32.totalorder %v1176, %v1306
        %vm1501 = vmand %vm1469, %vm1485
        %vm1502 = vmand %vm1470, %vm1486
        %vm1503 = vmand %vm1471, %vm1487
        %vm1504 = vmand %vm1472, %vm1488
        %vm1505 = vmand %vm1473, %vm1489
        %vm1506 = vmand %vm1474, %vm1490
        %vm1507 = vmand %vm1475, %vm1491
        %vm1508 = vmand %vm1476, %vm1492
        %vm1509 = vmand %vm1477, %vm1493
        %vm1510 = vmand %vm1478, %vm1494
        %vm1511 = vmand %vm1479, %vm1495
        %vm1512 = vmand %vm1480, %vm1496
        %vm1513 = vmand %vm1481, %vm1497
        %vm1514 = vmand %vm1482, %vm1498
        %vm1515 = vmand %vm1483, %vm1499
        %vm1516 = vmand %vm1484, %vm1500
        %v1517 = vsel %vm1451, 1, 0
        %v1518 = vsel %vm1452, 1, 0
        %vm1519 = vcmp.eq.s32.totalorder %v1517, 1
        %vm1520 = vcmp.eq.s32.totalorder %v1518, 1
        %vm1521 = vmand %vm1501, %vm1519
        %vm1522 = vmand %vm1502, %vm1520
        %vm1523 = vmand %vm1503, %vm1519
        %vm1524 = vmand %vm1504, %vm1520
        %vm1525 = vmand %vm1505, %vm1519
        %vm1526 = vmand %vm1506, %vm1520
        %vm1527 = vmand %vm1507, %vm1519
        %vm1528 = vmand %vm1508, %vm1520
        %vm1529 = vmand %vm1509, %vm1519
        %vm1530 = vmand %vm1510, %vm1520
        %vm1531 = vmand %vm1511, %vm1519
        %vm1532 = vmand %vm1512, %vm1520
        %vm1533 = vmand %vm1513, %vm1519
        %vm1534 = vmand %vm1514, %vm1520
        %vm1535 = vmand %vm1515, %vm1519
        %vm1536 = vmand %vm1516, %vm1520
        %v1537 = vsel %vm1521, 1.0, 0.0
        %v1538 = vsel %vm1522, 1.0, 0.0
        %v1539 = vsel %vm1523, 1.0, 0.0
        %v1540 = vsel %vm1524, 1.0, 0.0
        %v1541 = vsel %vm1525, 1.0, 0.0
        %v1542 = vsel %vm1526, 1.0, 0.0
        %v1543 = vsel %vm1527, 1.0, 0.0
        %v1544 = vsel %vm1528, 1.0, 0.0
        %v1545 = vsel %vm1529, 1.0, 0.0
        %v1546 = vsel %vm1530, 1.0, 0.0
        %v1547 = vsel %vm1531, 1.0, 0.0
        %v1548 = vsel %vm1532, 1.0, 0.0
        %v1549 = vsel %vm1533, 1.0, 0.0
        %v1550 = vsel %vm1534, 1.0, 0.0
        %v1551 = vsel %vm1535, 1.0, 0.0
        %v1552 = vsel %vm1536, 1.0, 0.0
        %1553 = vmatpush.msra.mxu0 0.0
        %1554 = vmatpush.msra.mxu0 0.0
        %1555 = vmatpush.msra.mxu0 0.0
        %1556 = vmatpush.msra.mxu0 0.0
        %1557 = vmatpush.msra.mxu0 0.0
        %1558 = vmatpush.msra.mxu0 0.0
        %1559 = vmatpush.msra.mxu0 0.0
        %1560 = vmatpush.msra.mxu0 0.0
        %1561 = vmatpush.msra.mxu0 %v1551
        %1562 = vmatpush.msra.mxu0 %v1549
        %1563 = vmatpush.msra.mxu0 %v1547
        %1564 = vmatpush.msra.mxu0 %v1545
        %1565 = vmatpush.msra.mxu0 %v1543
        %1566 = vmatpush.msra.mxu0 %v1541
        %1567 = vmatpush.msra.mxu0 %v1539
        %1568 = vmatpush.msra.mxu0 %v1537
        %1569 = vmatmul.f32.gmra.mxu0 %v1376
        %v1570 = vpop.f32.mrf.mxu0
        %v1571 = vadd.f32 0.0, %v1570
        %1572 = vmatmul.f32.gmra.mxu0 %v1379
        %v1573 = vpop.f32.mrf.mxu0
        %v1574 = vadd.f32 0.0, %v1573
        %1575 = vdwg.mxu0
        %1576 = vmatpush.msra.mxu0 0.0
        %1577 = vmatpush.msra.mxu0 0.0
        %1578 = vmatpush.msra.mxu0 0.0
        %1579 = vmatpush.msra.mxu0 0.0
        %1580 = vmatpush.msra.mxu0 0.0
        %1581 = vmatpush.msra.mxu0 0.0
        %1582 = vmatpush.msra.mxu0 0.0
        %1583 = vmatpush.msra.mxu0 0.0
        %1584 = vmatpush.msra.mxu0 %v1552
        %1585 = vmatpush.msra.mxu0 %v1550
        %1586 = vmatpush.msra.mxu0 %v1548
        %1587 = vmatpush.msra.mxu0 %v1546
        %1588 = vmatpush.msra.mxu0 %v1544
        %1589 = vmatpush.msra.mxu0 %v1542
        %1590 = vmatpush.msra.mxu0 %v1540
        %1591 = vmatpush.msra.mxu0 %v1538
        %1592 = vmatmul.f32.gmra.mxu0 %v1376
        %v1593 = vpop.f32.mrf.mxu0
        %v1594 = vadd.f32 0.0, %v1593
        %1595 = vmatmul.f32.gmra.mxu0 %v1379
        %v1596 = vpop.f32.mrf.mxu0
        %v1597 = vadd.f32 0.0, %v1596
        %1598 = vdwg.mxu0
        %1599 = vset.pattern.permute.xlu0 1
        %1600 = vperm.xlu0 %1599, %v237
        %v1601 = vpop.permute.xlu0 %1600
        %1603 = vset.pattern.permute.xlu0 1
        %1604 = vperm.xlu0 %1603, %v238
        %v1605 = vpop.permute.xlu0 %1604
        %v1607 = vmul.f32 %v1571, %v1601
        %v1608 = vmul.f32 %v1594, %v1601
        %v1609 = vmul.f32 %v1574, %v1605
        %v1610 = vmul.f32 %v1597, %v1605
        %v1611 = vadd.f32 %v1441, %v1607
        %v1612 = vadd.f32 %v1442, %v1608
        %v1613 = vadd.f32 %v1443, %v1609
        %v1614 = vadd.f32 %v1444, %v1610
        %v1615 = vadd.s32 %v1175, 1
        %v1616 = vadd.s32 %v1176, 1
        %vm1617 = vcmp.ge.s32.totalorder %v1615, 0
        %vm1618 = vcmp.ge.s32.totalorder %v1616, 0
        %vm1619 = vmand %vm1185, %vm1617
        %vm1620 = vmand %vm1186, %vm1618
        %vm1621 = vcmp.lt.s32.totalorder %v1615, 16
        %vm1622 = vcmp.lt.s32.totalorder %v1616, 16
        %vm1623 = vmand %vm1619, %vm1621
        %vm1624 = vmand %vm1620, %vm1622
        %vm1625 = vcmp.ge.s32.totalorder %v1615, %v1259
        %vm1626 = vcmp.ge.s32.totalorder %v1616, %v1259
        %vm1627 = vcmp.ge.s32.totalorder %v1615, %v1260
        %vm1628 = vcmp.ge.s32.totalorder %v1616, %v1260
        %vm1629 = vcmp.ge.s32.totalorder %v1615, %v1261
        %vm1630 = vcmp.ge.s32.totalorder %v1616, %v1261
        %vm1631 = vcmp.ge.s32.totalorder %v1615, %v1262
        %vm1632 = vcmp.ge.s32.totalorder %v1616, %v1262
        %vm1633 = vcmp.ge.s32.totalorder %v1615, %v1263
        %vm1634 = vcmp.ge.s32.totalorder %v1616, %v1263
        %vm1635 = vcmp.ge.s32.totalorder %v1615, %v1264
        %vm1636 = vcmp.ge.s32.totalorder %v1616, %v1264
        %vm1637 = vcmp.ge.s32.totalorder %v1615, %v1265
        %vm1638 = vcmp.ge.s32.totalorder %v1616, %v1265
        %vm1639 = vcmp.ge.s32.totalorder %v1615, %v1266
        %vm1640 = vcmp.ge.s32.totalorder %v1616, %v1266
        %vm1641 = vmand %vm1243, %vm1625
        %vm1642 = vmand %vm1244, %vm1626
        %vm1643 = vmand %vm1245, %vm1627
        %vm1644 = vmand %vm1246, %vm1628
        %vm1645 = vmand %vm1247, %vm1629
        %vm1646 = vmand %vm1248, %vm1630
        %vm1647 = vmand %vm1249, %vm1631
        %vm1648 = vmand %vm1250, %vm1632
        %vm1649 = vmand %vm1251, %vm1633
        %vm1650 = vmand %vm1252, %vm1634
        %vm1651 = vmand %vm1253, %vm1635
        %vm1652 = vmand %vm1254, %vm1636
        %vm1653 = vmand %vm1255, %vm1637
        %vm1654 = vmand %vm1256, %vm1638
        %vm1655 = vmand %vm1257, %vm1639
        %vm1656 = vmand %vm1258, %vm1640
        %vm1657 = vcmp.le.s32.totalorder %v1615, %v1299
        %vm1658 = vcmp.le.s32.totalorder %v1616, %v1299
        %vm1659 = vcmp.le.s32.totalorder %v1615, %v1300
        %vm1660 = vcmp.le.s32.totalorder %v1616, %v1300
        %vm1661 = vcmp.le.s32.totalorder %v1615, %v1301
        %vm1662 = vcmp.le.s32.totalorder %v1616, %v1301
        %vm1663 = vcmp.le.s32.totalorder %v1615, %v1302
        %vm1664 = vcmp.le.s32.totalorder %v1616, %v1302
        %vm1665 = vcmp.le.s32.totalorder %v1615, %v1303
        %vm1666 = vcmp.le.s32.totalorder %v1616, %v1303
        %vm1667 = vcmp.le.s32.totalorder %v1615, %v1304
        %vm1668 = vcmp.le.s32.totalorder %v1616, %v1304
        %vm1669 = vcmp.le.s32.totalorder %v1615, %v1305
        %vm1670 = vcmp.le.s32.totalorder %v1616, %v1305
        %vm1671 = vcmp.le.s32.totalorder %v1615, %v1306
        %vm1672 = vcmp.le.s32.totalorder %v1616, %v1306
        %vm1673 = vmand %vm1641, %vm1657
        %vm1674 = vmand %vm1642, %vm1658
        %vm1675 = vmand %vm1643, %vm1659
        %vm1676 = vmand %vm1644, %vm1660
        %vm1677 = vmand %vm1645, %vm1661
        %vm1678 = vmand %vm1646, %vm1662
        %vm1679 = vmand %vm1647, %vm1663
        %vm1680 = vmand %vm1648, %vm1664
        %vm1681 = vmand %vm1649, %vm1665
        %vm1682 = vmand %vm1650, %vm1666
        %vm1683 = vmand %vm1651, %vm1667
        %vm1684 = vmand %vm1652, %vm1668
        %vm1685 = vmand %vm1653, %vm1669
        %vm1686 = vmand %vm1654, %vm1670
        %vm1687 = vmand %vm1655, %vm1671
        %vm1688 = vmand %vm1656, %vm1672
        %v1689 = vsel %vm1623, 1, 0
        %v1690 = vsel %vm1624, 1, 0
        %vm1691 = vcmp.eq.s32.totalorder %v1689, 1
        %vm1692 = vcmp.eq.s32.totalorder %v1690, 1
        %vm1693 = vmand %vm1673, %vm1691
        %vm1694 = vmand %vm1674, %vm1692
        %vm1695 = vmand %vm1675, %vm1691
        %vm1696 = vmand %vm1676, %vm1692
        %vm1697 = vmand %vm1677, %vm1691
        %vm1698 = vmand %vm1678, %vm1692
        %vm1699 = vmand %vm1679, %vm1691
        %vm1700 = vmand %vm1680, %vm1692
        %vm1701 = vmand %vm1681, %vm1691
        %vm1702 = vmand %vm1682, %vm1692
        %vm1703 = vmand %vm1683, %vm1691
        %vm1704 = vmand %vm1684, %vm1692
        %vm1705 = vmand %vm1685, %vm1691
        %vm1706 = vmand %vm1686, %vm1692
        %vm1707 = vmand %vm1687, %vm1691
        %vm1708 = vmand %vm1688, %vm1692
        %v1709 = vsel %vm1693, 1.0, 0.0
        %v1710 = vsel %vm1694, 1.0, 0.0
        %v1711 = vsel %vm1695, 1.0, 0.0
        %v1712 = vsel %vm1696, 1.0, 0.0
        %v1713 = vsel %vm1697, 1.0, 0.0
        %v1714 = vsel %vm1698, 1.0, 0.0
        %v1715 = vsel %vm1699, 1.0, 0.0
        %v1716 = vsel %vm1700, 1.0, 0.0
        %v1717 = vsel %vm1701, 1.0, 0.0
        %v1718 = vsel %vm1702, 1.0, 0.0
        %v1719 = vsel %vm1703, 1.0, 0.0
        %v1720 = vsel %vm1704, 1.0, 0.0
        %v1721 = vsel %vm1705, 1.0, 0.0
        %v1722 = vsel %vm1706, 1.0, 0.0
        %v1723 = vsel %vm1707, 1.0, 0.0
        %v1724 = vsel %vm1708, 1.0, 0.0
        %1725 = vmatpush.msra.mxu0 0.0
        %1726 = vmatpush.msra.mxu0 0.0
        %1727 = vmatpush.msra.mxu0 0.0
        %1728 = vmatpush.msra.mxu0 0.0
        %1729 = vmatpush.msra.mxu0 0.0
        %1730 = vmatpush.msra.mxu0 0.0
        %1731 = vmatpush.msra.mxu0 0.0
        %1732 = vmatpush.msra.mxu0 0.0
        %1733 = vmatpush.msra.mxu0 %v1723
        %1734 = vmatpush.msra.mxu0 %v1721
        %1735 = vmatpush.msra.mxu0 %v1719
        %1736 = vmatpush.msra.mxu0 %v1717
        %1737 = vmatpush.msra.mxu0 %v1715
        %1738 = vmatpush.msra.mxu0 %v1713
        %1739 = vmatpush.msra.mxu0 %v1711
        %1740 = vmatpush.msra.mxu0 %v1709
        %1741 = vmatmul.f32.gmra.mxu0 %v1376
        %v1742 = vpop.f32.mrf.mxu0
        %v1743 = vadd.f32 0.0, %v1742
        %1744 = vmatmul.f32.gmra.mxu0 %v1379
        %v1745 = vpop.f32.mrf.mxu0
        %v1746 = vadd.f32 0.0, %v1745
        %1747 = vdwg.mxu0
        %1748 = vmatpush.msra.mxu0 0.0
        %1749 = vmatpush.msra.mxu0 0.0
        %1750 = vmatpush.msra.mxu0 0.0
        %1751 = vmatpush.msra.mxu0 0.0
        %1752 = vmatpush.msra.mxu0 0.0
        %1753 = vmatpush.msra.mxu0 0.0
        %1754 = vmatpush.msra.mxu0 0.0
        %1755 = vmatpush.msra.mxu0 0.0
        %1756 = vmatpush.msra.mxu0 %v1724
        %1757 = vmatpush.msra.mxu0 %v1722
        %1758 = vmatpush.msra.mxu0 %v1720
        %1759 = vmatpush.msra.mxu0 %v1718
        %1760 = vmatpush.msra.mxu0 %v1716
        %1761 = vmatpush.msra.mxu0 %v1714
        %1762 = vmatpush.msra.mxu0 %v1712
        %1763 = vmatpush.msra.mxu0 %v1710
        %1764 = vmatmul.f32.gmra.mxu0 %v1376
        %v1765 = vpop.f32.mrf.mxu0
        %v1766 = vadd.f32 0.0, %v1765
        %1767 = vmatmul.f32.gmra.mxu0 %v1379
        %v1768 = vpop.f32.mrf.mxu0
        %v1769 = vadd.f32 0.0, %v1768
        %1770 = vdwg.mxu0
        %1771 = vset.pattern.permute.xlu0 2
        %1772 = vperm.xlu0 %1771, %v237
        %v1773 = vpop.permute.xlu0 %1772
        %1775 = vset.pattern.permute.xlu0 2
        %1776 = vperm.xlu0 %1775, %v238
        %v1777 = vpop.permute.xlu0 %1776
        %v1779 = vmul.f32 %v1743, %v1773
        %v1780 = vmul.f32 %v1766, %v1773
        %v1781 = vmul.f32 %v1746, %v1777
        %v1782 = vmul.f32 %v1769, %v1777
        %v1783 = vadd.f32 %v1611, %v1779
        %v1784 = vadd.f32 %v1612, %v1780
        %v1785 = vadd.f32 %v1613, %v1781
        %v1786 = vadd.f32 %v1614, %v1782
        %vm1787 = vcmp.ge.s32.totalorder %v1171, 0
        %vm1788 = vcmp.ge.s32.totalorder %v1172, 0
        %vm1789 = vcmp.lt.s32.totalorder %v1171, 16
        %vm1790 = vcmp.lt.s32.totalorder %v1172, 16
        %vm1791 = vmand %vm1787, %vm1789
        %vm1792 = vmand %vm1788, %vm1790
        %vm1793 = vmand %vm1791, %vm1187
        %vm1794 = vmand %vm1792, %vm1188
        %vm1795 = vmand %vm1793, %vm1191
        %vm1796 = vmand %vm1794, %vm1192
        %vm1797 = vcmp.ge.s32.totalorder %v1171, %v1195
        %vm1798 = vcmp.ge.s32.totalorder %v1172, %v1195
        %vm1799 = vcmp.ge.s32.totalorder %v1171, %v1196
        %vm1800 = vcmp.ge.s32.totalorder %v1172, %v1196
        %vm1801 = vcmp.ge.s32.totalorder %v1171, %v1197
        %vm1802 = vcmp.ge.s32.totalorder %v1172, %v1197
        %vm1803 = vcmp.ge.s32.totalorder %v1171, %v1198
        %vm1804 = vcmp.ge.s32.totalorder %v1172, %v1198
        %vm1805 = vcmp.ge.s32.totalorder %v1171, %v1199
        %vm1806 = vcmp.ge.s32.totalorder %v1172, %v1199
        %vm1807 = vcmp.ge.s32.totalorder %v1171, %v1200
        %vm1808 = vcmp.ge.s32.totalorder %v1172, %v1200
        %vm1809 = vcmp.ge.s32.totalorder %v1171, %v1201
        %vm1810 = vcmp.ge.s32.totalorder %v1172, %v1201
        %vm1811 = vcmp.ge.s32.totalorder %v1171, %v1202
        %vm1812 = vcmp.ge.s32.totalorder %v1172, %v1202
        %vm1813 = vcmp.le.s32.totalorder %v1171, %v1219
        %vm1814 = vcmp.le.s32.totalorder %v1172, %v1219
        %vm1815 = vcmp.le.s32.totalorder %v1171, %v1220
        %vm1816 = vcmp.le.s32.totalorder %v1172, %v1220
        %vm1817 = vcmp.le.s32.totalorder %v1171, %v1221
        %vm1818 = vcmp.le.s32.totalorder %v1172, %v1221
        %vm1819 = vcmp.le.s32.totalorder %v1171, %v1222
        %vm1820 = vcmp.le.s32.totalorder %v1172, %v1222
        %vm1821 = vcmp.le.s32.totalorder %v1171, %v1223
        %vm1822 = vcmp.le.s32.totalorder %v1172, %v1223
        %vm1823 = vcmp.le.s32.totalorder %v1171, %v1224
        %vm1824 = vcmp.le.s32.totalorder %v1172, %v1224
        %vm1825 = vcmp.le.s32.totalorder %v1171, %v1225
        %vm1826 = vcmp.le.s32.totalorder %v1172, %v1225
        %vm1827 = vcmp.le.s32.totalorder %v1171, %v1226
        %vm1828 = vcmp.le.s32.totalorder %v1172, %v1226
        %vm1829 = vmand %vm1797, %vm1813
        %vm1830 = vmand %vm1798, %vm1814
        %vm1831 = vmand %vm1799, %vm1815
        %vm1832 = vmand %vm1800, %vm1816
        %vm1833 = vmand %vm1801, %vm1817
        %vm1834 = vmand %vm1802, %vm1818
        %vm1835 = vmand %vm1803, %vm1819
        %vm1836 = vmand %vm1804, %vm1820
        %vm1837 = vmand %vm1805, %vm1821
        %vm1838 = vmand %vm1806, %vm1822
        %vm1839 = vmand %vm1807, %vm1823
        %vm1840 = vmand %vm1808, %vm1824
        %vm1841 = vmand %vm1809, %vm1825
        %vm1842 = vmand %vm1810, %vm1826
        %vm1843 = vmand %vm1811, %vm1827
        %vm1844 = vmand %vm1812, %vm1828
        %vm1845 = vmand %vm1829, %vm1267
        %vm1846 = vmand %vm1830, %vm1268
        %vm1847 = vmand %vm1831, %vm1269
        %vm1848 = vmand %vm1832, %vm1270
        %vm1849 = vmand %vm1833, %vm1271
        %vm1850 = vmand %vm1834, %vm1272
        %vm1851 = vmand %vm1835, %vm1273
        %vm1852 = vmand %vm1836, %vm1274
        %vm1853 = vmand %vm1837, %vm1275
        %vm1854 = vmand %vm1838, %vm1276
        %vm1855 = vmand %vm1839, %vm1277
        %vm1856 = vmand %vm1840, %vm1278
        %vm1857 = vmand %vm1841, %vm1279
        %vm1858 = vmand %vm1842, %vm1280
        %vm1859 = vmand %vm1843, %vm1281
        %vm1860 = vmand %vm1844, %vm1282
        %vm1861 = vmand %vm1845, %vm1307
        %vm1862 = vmand %vm1846, %vm1308
        %vm1863 = vmand %vm1847, %vm1309
        %vm1864 = vmand %vm1848, %vm1310
        %vm1865 = vmand %vm1849, %vm1311
        %vm1866 = vmand %vm1850, %vm1312
        %vm1867 = vmand %vm1851, %vm1313
        %vm1868 = vmand %vm1852, %vm1314
        %vm1869 = vmand %vm1853, %vm1315
        %vm1870 = vmand %vm1854, %vm1316
        %vm1871 = vmand %vm1855, %vm1317
        %vm1872 = vmand %vm1856, %vm1318
        %vm1873 = vmand %vm1857, %vm1319
        %vm1874 = vmand %vm1858, %vm1320
        %vm1875 = vmand %vm1859, %vm1321
        %vm1876 = vmand %vm1860, %vm1322
        %v1877 = vsel %vm1795, 1, 0
        %v1878 = vsel %vm1796, 1, 0
        %vm1879 = vcmp.eq.s32.totalorder %v1877, 1
        %vm1880 = vcmp.eq.s32.totalorder %v1878, 1
        %vm1881 = vmand %vm1861, %vm1879
        %vm1882 = vmand %vm1862, %vm1880
        %vm1883 = vmand %vm1863, %vm1879
        %vm1884 = vmand %vm1864, %vm1880
        %vm1885 = vmand %vm1865, %vm1879
        %vm1886 = vmand %vm1866, %vm1880
        %vm1887 = vmand %vm1867, %vm1879
        %vm1888 = vmand %vm1868, %vm1880
        %vm1889 = vmand %vm1869, %vm1879
        %vm1890 = vmand %vm1870, %vm1880
        %vm1891 = vmand %vm1871, %vm1879
        %vm1892 = vmand %vm1872, %vm1880
        %vm1893 = vmand %vm1873, %vm1879
        %vm1894 = vmand %vm1874, %vm1880
        %vm1895 = vmand %vm1875, %vm1879
        %vm1896 = vmand %vm1876, %vm1880
        %v1897 = vsel %vm1881, 1.0, 0.0
        %v1898 = vsel %vm1882, 1.0, 0.0
        %v1899 = vsel %vm1883, 1.0, 0.0
        %v1900 = vsel %vm1884, 1.0, 0.0
        %v1901 = vsel %vm1885, 1.0, 0.0
        %v1902 = vsel %vm1886, 1.0, 0.0
        %v1903 = vsel %vm1887, 1.0, 0.0
        %v1904 = vsel %vm1888, 1.0, 0.0
        %v1905 = vsel %vm1889, 1.0, 0.0
        %v1906 = vsel %vm1890, 1.0, 0.0
        %v1907 = vsel %vm1891, 1.0, 0.0
        %v1908 = vsel %vm1892, 1.0, 0.0
        %v1909 = vsel %vm1893, 1.0, 0.0
        %v1910 = vsel %vm1894, 1.0, 0.0
        %v1911 = vsel %vm1895, 1.0, 0.0
        %v1912 = vsel %vm1896, 1.0, 0.0
        %1913 = vmatpush.msra.mxu0 0.0
        %1914 = vmatpush.msra.mxu0 0.0
        %1915 = vmatpush.msra.mxu0 0.0
        %1916 = vmatpush.msra.mxu0 0.0
        %1917 = vmatpush.msra.mxu0 0.0
        %1918 = vmatpush.msra.mxu0 0.0
        %1919 = vmatpush.msra.mxu0 0.0
        %1920 = vmatpush.msra.mxu0 0.0
        %1921 = vmatpush.msra.mxu0 %v1911
        %1922 = vmatpush.msra.mxu0 %v1909
        %1923 = vmatpush.msra.mxu0 %v1907
        %1924 = vmatpush.msra.mxu0 %v1905
        %1925 = vmatpush.msra.mxu0 %v1903
        %1926 = vmatpush.msra.mxu0 %v1901
        %1927 = vmatpush.msra.mxu0 %v1899
        %1928 = vmatpush.msra.mxu0 %v1897
        %1929 = vmatmul.f32.gmra.mxu0 %v1376
        %v1930 = vpop.f32.mrf.mxu0
        %v1931 = vadd.f32 0.0, %v1930
        %1932 = vmatmul.f32.gmra.mxu0 %v1379
        %v1933 = vpop.f32.mrf.mxu0
        %v1934 = vadd.f32 0.0, %v1933
        %1935 = vdwg.mxu0
        %1936 = vmatpush.msra.mxu0 0.0
        %1937 = vmatpush.msra.mxu0 0.0
        %1938 = vmatpush.msra.mxu0 0.0
        %1939 = vmatpush.msra.mxu0 0.0
        %1940 = vmatpush.msra.mxu0 0.0
        %1941 = vmatpush.msra.mxu0 0.0
        %1942 = vmatpush.msra.mxu0 0.0
        %1943 = vmatpush.msra.mxu0 0.0
        %1944 = vmatpush.msra.mxu0 %v1912
        %1945 = vmatpush.msra.mxu0 %v1910
        %1946 = vmatpush.msra.mxu0 %v1908
        %1947 = vmatpush.msra.mxu0 %v1906
        %1948 = vmatpush.msra.mxu0 %v1904
        %1949 = vmatpush.msra.mxu0 %v1902
        %1950 = vmatpush.msra.mxu0 %v1900
        %1951 = vmatpush.msra.mxu0 %v1898
        %1952 = vmatmul.f32.gmra.mxu0 %v1376
        %v1953 = vpop.f32.mrf.mxu0
        %v1954 = vadd.f32 0.0, %v1953
        %1955 = vmatmul.f32.gmra.mxu0 %v1379
        %v1956 = vpop.f32.mrf.mxu0
        %v1957 = vadd.f32 0.0, %v1956
        %1958 = vdwg.mxu0
        %1959 = vset.pattern.permute.xlu0 3
        %1960 = vperm.xlu0 %1959, %v237
        %v1961 = vpop.permute.xlu0 %1960
        %1963 = vset.pattern.permute.xlu0 3
        %1964 = vperm.xlu0 %1963, %v238
        %v1965 = vpop.permute.xlu0 %1964
        %v1967 = vmul.f32 %v1931, %v1961
        %v1968 = vmul.f32 %v1954, %v1961
        %v1969 = vmul.f32 %v1934, %v1965
        %v1970 = vmul.f32 %v1957, %v1965
        %v1971 = vadd.f32 %v1783, %v1967
        %v1972 = vadd.f32 %v1784, %v1968
        %v1973 = vadd.f32 %v1785, %v1969
        %v1974 = vadd.f32 %v1786, %v1970
        %vm1975 = vmand %vm1791, %vm1445
        %vm1976 = vmand %vm1792, %vm1446
        %vm1977 = vmand %vm1975, %vm1449
        %vm1978 = vmand %vm1976, %vm1450
        %vm1979 = vmand %vm1829, %vm1453
        %vm1980 = vmand %vm1830, %vm1454
        %vm1981 = vmand %vm1831, %vm1455
        %vm1982 = vmand %vm1832, %vm1456
        %vm1983 = vmand %vm1833, %vm1457
        %vm1984 = vmand %vm1834, %vm1458
        %vm1985 = vmand %vm1835, %vm1459
        %vm1986 = vmand %vm1836, %vm1460
        %vm1987 = vmand %vm1837, %vm1461
        %vm1988 = vmand %vm1838, %vm1462
        %vm1989 = vmand %vm1839, %vm1463
        %vm1990 = vmand %vm1840, %vm1464
        %vm1991 = vmand %vm1841, %vm1465
        %vm1992 = vmand %vm1842, %vm1466
        %vm1993 = vmand %vm1843, %vm1467
        %vm1994 = vmand %vm1844, %vm1468
        %vm1995 = vmand %vm1979, %vm1485
        %vm1996 = vmand %vm1980, %vm1486
        %vm1997 = vmand %vm1981, %vm1487
        %vm1998 = vmand %vm1982, %vm1488
        %vm1999 = vmand %vm1983, %vm1489
        %vm2000 = vmand %vm1984, %vm1490
        %vm2001 = vmand %vm1985, %vm1491
        %vm2002 = vmand %vm1986, %vm1492
        %vm2003 = vmand %vm1987, %vm1493
        %vm2004 = vmand %vm1988, %vm1494
        %vm2005 = vmand %vm1989, %vm1495
        %vm2006 = vmand %vm1990, %vm1496
        %vm2007 = vmand %vm1991, %vm1497
        %vm2008 = vmand %vm1992, %vm1498
        %vm2009 = vmand %vm1993, %vm1499
        %vm2010 = vmand %vm1994, %vm1500
        %v2011 = vsel %vm1977, 1, 0
        %v2012 = vsel %vm1978, 1, 0
        %vm2013 = vcmp.eq.s32.totalorder %v2011, 1
        %vm2014 = vcmp.eq.s32.totalorder %v2012, 1
        %vm2015 = vmand %vm1995, %vm2013
        %vm2016 = vmand %vm1996, %vm2014
        %vm2017 = vmand %vm1997, %vm2013
        %vm2018 = vmand %vm1998, %vm2014
        %vm2019 = vmand %vm1999, %vm2013
        %vm2020 = vmand %vm2000, %vm2014
        %vm2021 = vmand %vm2001, %vm2013
        %vm2022 = vmand %vm2002, %vm2014
        %vm2023 = vmand %vm2003, %vm2013
        %vm2024 = vmand %vm2004, %vm2014
        %vm2025 = vmand %vm2005, %vm2013
        %vm2026 = vmand %vm2006, %vm2014
        %vm2027 = vmand %vm2007, %vm2013
        %vm2028 = vmand %vm2008, %vm2014
        %vm2029 = vmand %vm2009, %vm2013
        %vm2030 = vmand %vm2010, %vm2014
        %v2031 = vsel %vm2015, 1.0, 0.0
        %v2032 = vsel %vm2016, 1.0, 0.0
        %v2033 = vsel %vm2017, 1.0, 0.0
        %v2034 = vsel %vm2018, 1.0, 0.0
        %v2035 = vsel %vm2019, 1.0, 0.0
        %v2036 = vsel %vm2020, 1.0, 0.0
        %v2037 = vsel %vm2021, 1.0, 0.0
        %v2038 = vsel %vm2022, 1.0, 0.0
        %v2039 = vsel %vm2023, 1.0, 0.0
        %v2040 = vsel %vm2024, 1.0, 0.0
        %v2041 = vsel %vm2025, 1.0, 0.0
        %v2042 = vsel %vm2026, 1.0, 0.0
        %v2043 = vsel %vm2027, 1.0, 0.0
        %v2044 = vsel %vm2028, 1.0, 0.0
        %v2045 = vsel %vm2029, 1.0, 0.0
        %v2046 = vsel %vm2030, 1.0, 0.0
        %2047 = vmatpush.msra.mxu0 0.0
        %2048 = vmatpush.msra.mxu0 0.0
        %2049 = vmatpush.msra.mxu0 0.0
        %2050 = vmatpush.msra.mxu0 0.0
        %2051 = vmatpush.msra.mxu0 0.0
        %2052 = vmatpush.msra.mxu0 0.0
        %2053 = vmatpush.msra.mxu0 0.0
        %2054 = vmatpush.msra.mxu0 0.0
        %2055 = vmatpush.msra.mxu0 %v2045
        %2056 = vmatpush.msra.mxu0 %v2043
        %2057 = vmatpush.msra.mxu0 %v2041
        %2058 = vmatpush.msra.mxu0 %v2039
        %2059 = vmatpush.msra.mxu0 %v2037
        %2060 = vmatpush.msra.mxu0 %v2035
        %2061 = vmatpush.msra.mxu0 %v2033
        %2062 = vmatpush.msra.mxu0 %v2031
        %2063 = vmatmul.f32.gmra.mxu0 %v1376
        %v2064 = vpop.f32.mrf.mxu0
        %v2065 = vadd.f32 0.0, %v2064
        %2066 = vmatmul.f32.gmra.mxu0 %v1379
        %v2067 = vpop.f32.mrf.mxu0
        %v2068 = vadd.f32 0.0, %v2067
        %2069 = vdwg.mxu0
        %2070 = vmatpush.msra.mxu0 0.0
        %2071 = vmatpush.msra.mxu0 0.0
        %2072 = vmatpush.msra.mxu0 0.0
        %2073 = vmatpush.msra.mxu0 0.0
        %2074 = vmatpush.msra.mxu0 0.0
        %2075 = vmatpush.msra.mxu0 0.0
        %2076 = vmatpush.msra.mxu0 0.0
        %2077 = vmatpush.msra.mxu0 0.0
        %2078 = vmatpush.msra.mxu0 %v2046
        %2079 = vmatpush.msra.mxu0 %v2044
        %2080 = vmatpush.msra.mxu0 %v2042
        %2081 = vmatpush.msra.mxu0 %v2040
        %2082 = vmatpush.msra.mxu0 %v2038
        %2083 = vmatpush.msra.mxu0 %v2036
        %2084 = vmatpush.msra.mxu0 %v2034
        %2085 = vmatpush.msra.mxu0 %v2032
        %2086 = vmatmul.f32.gmra.mxu0 %v1376
        %v2087 = vpop.f32.mrf.mxu0
        %v2088 = vadd.f32 0.0, %v2087
        %2089 = vmatmul.f32.gmra.mxu0 %v1379
        %v2090 = vpop.f32.mrf.mxu0
        %v2091 = vadd.f32 0.0, %v2090
        %2092 = vdwg.mxu0
        %2093 = vset.pattern.permute.xlu0 4
        %2094 = vperm.xlu0 %2093, %v237
        %v2095 = vpop.permute.xlu0 %2094
        %2097 = vset.pattern.permute.xlu0 4
        %2098 = vperm.xlu0 %2097, %v238
        %v2099 = vpop.permute.xlu0 %2098
        %v2101 = vmul.f32 %v2065, %v2095
        %v2102 = vmul.f32 %v2088, %v2095
        %v2103 = vmul.f32 %v2068, %v2099
        %v2104 = vmul.f32 %v2091, %v2099
        %v2105 = vadd.f32 %v1971, %v2101
        %v2106 = vadd.f32 %v1972, %v2102
        %v2107 = vadd.f32 %v1973, %v2103
        %v2108 = vadd.f32 %v1974, %v2104
        %vm2109 = vmand %vm1791, %vm1617
        %vm2110 = vmand %vm1792, %vm1618
        %vm2111 = vmand %vm2109, %vm1621
        %vm2112 = vmand %vm2110, %vm1622
        %vm2113 = vmand %vm1829, %vm1625
        %vm2114 = vmand %vm1830, %vm1626
        %vm2115 = vmand %vm1831, %vm1627
        %vm2116 = vmand %vm1832, %vm1628
        %vm2117 = vmand %vm1833, %vm1629
        %vm2118 = vmand %vm1834, %vm1630
        %vm2119 = vmand %vm1835, %vm1631
        %vm2120 = vmand %vm1836, %vm1632
        %vm2121 = vmand %vm1837, %vm1633
        %vm2122 = vmand %vm1838, %vm1634
        %vm2123 = vmand %vm1839, %vm1635
        %vm2124 = vmand %vm1840, %vm1636
        %vm2125 = vmand %vm1841, %vm1637
        %vm2126 = vmand %vm1842, %vm1638
        %vm2127 = vmand %vm1843, %vm1639
        %vm2128 = vmand %vm1844, %vm1640
        %vm2129 = vmand %vm2113, %vm1657
        %vm2130 = vmand %vm2114, %vm1658
        %vm2131 = vmand %vm2115, %vm1659
        %vm2132 = vmand %vm2116, %vm1660
        %vm2133 = vmand %vm2117, %vm1661
        %vm2134 = vmand %vm2118, %vm1662
        %vm2135 = vmand %vm2119, %vm1663
        %vm2136 = vmand %vm2120, %vm1664
        %vm2137 = vmand %vm2121, %vm1665
        %vm2138 = vmand %vm2122, %vm1666
        %vm2139 = vmand %vm2123, %vm1667
        %vm2140 = vmand %vm2124, %vm1668
        %vm2141 = vmand %vm2125, %vm1669
        %vm2142 = vmand %vm2126, %vm1670
        %vm2143 = vmand %vm2127, %vm1671
        %vm2144 = vmand %vm2128, %vm1672
        %v2145 = vsel %vm2111, 1, 0
        %v2146 = vsel %vm2112, 1, 0
        %vm2147 = vcmp.eq.s32.totalorder %v2145, 1
        %vm2148 = vcmp.eq.s32.totalorder %v2146, 1
        %vm2149 = vmand %vm2129, %vm2147
        %vm2150 = vmand %vm2130, %vm2148
        %vm2151 = vmand %vm2131, %vm2147
        %vm2152 = vmand %vm2132, %vm2148
        %vm2153 = vmand %vm2133, %vm2147
        %vm2154 = vmand %vm2134, %vm2148
        %vm2155 = vmand %vm2135, %vm2147
        %vm2156 = vmand %vm2136, %vm2148
        %vm2157 = vmand %vm2137, %vm2147
        %vm2158 = vmand %vm2138, %vm2148
        %vm2159 = vmand %vm2139, %vm2147
        %vm2160 = vmand %vm2140, %vm2148
        %vm2161 = vmand %vm2141, %vm2147
        %vm2162 = vmand %vm2142, %vm2148
        %vm2163 = vmand %vm2143, %vm2147
        %vm2164 = vmand %vm2144, %vm2148
        %v2165 = vsel %vm2149, 1.0, 0.0
        %v2166 = vsel %vm2150, 1.0, 0.0
        %v2167 = vsel %vm2151, 1.0, 0.0
        %v2168 = vsel %vm2152, 1.0, 0.0
        %v2169 = vsel %vm2153, 1.0, 0.0
        %v2170 = vsel %vm2154, 1.0, 0.0
        %v2171 = vsel %vm2155, 1.0, 0.0
        %v2172 = vsel %vm2156, 1.0, 0.0
        %v2173 = vsel %vm2157, 1.0, 0.0
        %v2174 = vsel %vm2158, 1.0, 0.0
        %v2175 = vsel %vm2159, 1.0, 0.0
        %v2176 = vsel %vm2160, 1.0, 0.0
        %v2177 = vsel %vm2161, 1.0, 0.0
        %v2178 = vsel %vm2162, 1.0, 0.0
        %v2179 = vsel %vm2163, 1.0, 0.0
        %v2180 = vsel %vm2164, 1.0, 0.0
        %2181 = vmatpush.msra.mxu0 0.0
        %2182 = vmatpush.msra.mxu0 0.0
        %2183 = vmatpush.msra.mxu0 0.0
        %2184 = vmatpush.msra.mxu0 0.0
        %2185 = vmatpush.msra.mxu0 0.0
        %2186 = vmatpush.msra.mxu0 0.0
        %2187 = vmatpush.msra.mxu0 0.0
        %2188 = vmatpush.msra.mxu0 0.0
        %2189 = vmatpush.msra.mxu0 %v2179
        %2190 = vmatpush.msra.mxu0 %v2177
        %2191 = vmatpush.msra.mxu0 %v2175
        %2192 = vmatpush.msra.mxu0 %v2173
        %2193 = vmatpush.msra.mxu0 %v2171
        %2194 = vmatpush.msra.mxu0 %v2169
        %2195 = vmatpush.msra.mxu0 %v2167
        %2196 = vmatpush.msra.mxu0 %v2165
        %2197 = vmatmul.f32.gmra.mxu0 %v1376
        %v2198 = vpop.f32.mrf.mxu0
        %v2199 = vadd.f32 0.0, %v2198
        %2200 = vmatmul.f32.gmra.mxu0 %v1379
        %v2201 = vpop.f32.mrf.mxu0
        %v2202 = vadd.f32 0.0, %v2201
        %2203 = vdwg.mxu0
        %2204 = vmatpush.msra.mxu0 0.0
        %2205 = vmatpush.msra.mxu0 0.0
        %2206 = vmatpush.msra.mxu0 0.0
        %2207 = vmatpush.msra.mxu0 0.0
        %2208 = vmatpush.msra.mxu0 0.0
        %2209 = vmatpush.msra.mxu0 0.0
        %2210 = vmatpush.msra.mxu0 0.0
        %2211 = vmatpush.msra.mxu0 0.0
        %2212 = vmatpush.msra.mxu0 %v2180
        %2213 = vmatpush.msra.mxu0 %v2178
        %2214 = vmatpush.msra.mxu0 %v2176
        %2215 = vmatpush.msra.mxu0 %v2174
        %2216 = vmatpush.msra.mxu0 %v2172
        %2217 = vmatpush.msra.mxu0 %v2170
        %2218 = vmatpush.msra.mxu0 %v2168
        %2219 = vmatpush.msra.mxu0 %v2166
        %2220 = vmatmul.f32.gmra.mxu0 %v1376
        %v2221 = vpop.f32.mrf.mxu0
        %v2222 = vadd.f32 0.0, %v2221
        %2223 = vmatmul.f32.gmra.mxu0 %v1379
        %v2224 = vpop.f32.mrf.mxu0
        %v2225 = vadd.f32 0.0, %v2224
        %2226 = vdwg.mxu0
        %2227 = vset.pattern.permute.xlu0 5
        %2228 = vperm.xlu0 %2227, %v237
        %v2229 = vpop.permute.xlu0 %2228
        %2231 = vset.pattern.permute.xlu0 5
        %2232 = vperm.xlu0 %2231, %v238
        %v2233 = vpop.permute.xlu0 %2232
        %v2235 = vmul.f32 %v2199, %v2229
        %v2236 = vmul.f32 %v2222, %v2229
        %v2237 = vmul.f32 %v2202, %v2233
        %v2238 = vmul.f32 %v2225, %v2233
        %v2239 = vadd.f32 %v2105, %v2235
        %v2240 = vadd.f32 %v2106, %v2236
        %v2241 = vadd.f32 %v2107, %v2237
        %v2242 = vadd.f32 %v2108, %v2238
        %v2243 = vadd.s32 %v1171, 1
        %v2244 = vadd.s32 %v1172, 1
        %vm2245 = vcmp.ge.s32.totalorder %v2243, 0
        %vm2246 = vcmp.ge.s32.totalorder %v2244, 0
        %vm2247 = vcmp.lt.s32.totalorder %v2243, 16
        %vm2248 = vcmp.lt.s32.totalorder %v2244, 16
        %vm2249 = vmand %vm2245, %vm2247
        %vm2250 = vmand %vm2246, %vm2248
        %vm2251 = vmand %vm2249, %vm1187
        %vm2252 = vmand %vm2250, %vm1188
        %vm2253 = vmand %vm2251, %vm1191
        %vm2254 = vmand %vm2252, %vm1192
        %vm2255 = vcmp.ge.s32.totalorder %v2243, %v1195
        %vm2256 = vcmp.ge.s32.totalorder %v2244, %v1195
        %vm2257 = vcmp.ge.s32.totalorder %v2243, %v1196
        %vm2258 = vcmp.ge.s32.totalorder %v2244, %v1196
        %vm2259 = vcmp.ge.s32.totalorder %v2243, %v1197
        %vm2260 = vcmp.ge.s32.totalorder %v2244, %v1197
        %vm2261 = vcmp.ge.s32.totalorder %v2243, %v1198
        %vm2262 = vcmp.ge.s32.totalorder %v2244, %v1198
        %vm2263 = vcmp.ge.s32.totalorder %v2243, %v1199
        %vm2264 = vcmp.ge.s32.totalorder %v2244, %v1199
        %vm2265 = vcmp.ge.s32.totalorder %v2243, %v1200
        %vm2266 = vcmp.ge.s32.totalorder %v2244, %v1200
        %vm2267 = vcmp.ge.s32.totalorder %v2243, %v1201
        %vm2268 = vcmp.ge.s32.totalorder %v2244, %v1201
        %vm2269 = vcmp.ge.s32.totalorder %v2243, %v1202
        %vm2270 = vcmp.ge.s32.totalorder %v2244, %v1202
        %vm2271 = vcmp.le.s32.totalorder %v2243, %v1219
        %vm2272 = vcmp.le.s32.totalorder %v2244, %v1219
        %vm2273 = vcmp.le.s32.totalorder %v2243, %v1220
        %vm2274 = vcmp.le.s32.totalorder %v2244, %v1220
        %vm2275 = vcmp.le.s32.totalorder %v2243, %v1221
        %vm2276 = vcmp.le.s32.totalorder %v2244, %v1221
        %vm2277 = vcmp.le.s32.totalorder %v2243, %v1222
        %vm2278 = vcmp.le.s32.totalorder %v2244, %v1222
        %vm2279 = vcmp.le.s32.totalorder %v2243, %v1223
        %vm2280 = vcmp.le.s32.totalorder %v2244, %v1223
        %vm2281 = vcmp.le.s32.totalorder %v2243, %v1224
        %vm2282 = vcmp.le.s32.totalorder %v2244, %v1224
        %vm2283 = vcmp.le.s32.totalorder %v2243, %v1225
        %vm2284 = vcmp.le.s32.totalorder %v2244, %v1225
        %vm2285 = vcmp.le.s32.totalorder %v2243, %v1226
        %vm2286 = vcmp.le.s32.totalorder %v2244, %v1226
        %vm2287 = vmand %vm2255, %vm2271
        %vm2288 = vmand %vm2256, %vm2272
        %vm2289 = vmand %vm2257, %vm2273
        %vm2290 = vmand %vm2258, %vm2274
        %vm2291 = vmand %vm2259, %vm2275
        %vm2292 = vmand %vm2260, %vm2276
        %vm2293 = vmand %vm2261, %vm2277
        %vm2294 = vmand %vm2262, %vm2278
        %vm2295 = vmand %vm2263, %vm2279
        %vm2296 = vmand %vm2264, %vm2280
        %vm2297 = vmand %vm2265, %vm2281
        %vm2298 = vmand %vm2266, %vm2282
        %vm2299 = vmand %vm2267, %vm2283
        %vm2300 = vmand %vm2268, %vm2284
        %vm2301 = vmand %vm2269, %vm2285
        %vm2302 = vmand %vm2270, %vm2286
        %vm2303 = vmand %vm2287, %vm1267
        %vm2304 = vmand %vm2288, %vm1268
        %vm2305 = vmand %vm2289, %vm1269
        %vm2306 = vmand %vm2290, %vm1270
        %vm2307 = vmand %vm2291, %vm1271
        %vm2308 = vmand %vm2292, %vm1272
        %vm2309 = vmand %vm2293, %vm1273
        %vm2310 = vmand %vm2294, %vm1274
        %vm2311 = vmand %vm2295, %vm1275
        %vm2312 = vmand %vm2296, %vm1276
        %vm2313 = vmand %vm2297, %vm1277
        %vm2314 = vmand %vm2298, %vm1278
        %vm2315 = vmand %vm2299, %vm1279
        %vm2316 = vmand %vm2300, %vm1280
        %vm2317 = vmand %vm2301, %vm1281
        %vm2318 = vmand %vm2302, %vm1282
        %vm2319 = vmand %vm2303, %vm1307
        %vm2320 = vmand %vm2304, %vm1308
        %vm2321 = vmand %vm2305, %vm1309
        %vm2322 = vmand %vm2306, %vm1310
        %vm2323 = vmand %vm2307, %vm1311
        %vm2324 = vmand %vm2308, %vm1312
        %vm2325 = vmand %vm2309, %vm1313
        %vm2326 = vmand %vm2310, %vm1314
        %vm2327 = vmand %vm2311, %vm1315
        %vm2328 = vmand %vm2312, %vm1316
        %vm2329 = vmand %vm2313, %vm1317
        %vm2330 = vmand %vm2314, %vm1318
        %vm2331 = vmand %vm2315, %vm1319
        %vm2332 = vmand %vm2316, %vm1320
        %vm2333 = vmand %vm2317, %vm1321
        %vm2334 = vmand %vm2318, %vm1322
        %v2335 = vsel %vm2253, 1, 0
        %v2336 = vsel %vm2254, 1, 0
        %vm2337 = vcmp.eq.s32.totalorder %v2335, 1
        %vm2338 = vcmp.eq.s32.totalorder %v2336, 1
        %vm2339 = vmand %vm2319, %vm2337
        %vm2340 = vmand %vm2320, %vm2338
        %vm2341 = vmand %vm2321, %vm2337
        %vm2342 = vmand %vm2322, %vm2338
        %vm2343 = vmand %vm2323, %vm2337
        %vm2344 = vmand %vm2324, %vm2338
        %vm2345 = vmand %vm2325, %vm2337
        %vm2346 = vmand %vm2326, %vm2338
        %vm2347 = vmand %vm2327, %vm2337
        %vm2348 = vmand %vm2328, %vm2338
        %vm2349 = vmand %vm2329, %vm2337
        %vm2350 = vmand %vm2330, %vm2338
        %vm2351 = vmand %vm2331, %vm2337
        %vm2352 = vmand %vm2332, %vm2338
        %vm2353 = vmand %vm2333, %vm2337
        %vm2354 = vmand %vm2334, %vm2338
        %v2355 = vsel %vm2339, 1.0, 0.0
        %v2356 = vsel %vm2340, 1.0, 0.0
        %v2357 = vsel %vm2341, 1.0, 0.0
        %v2358 = vsel %vm2342, 1.0, 0.0
        %v2359 = vsel %vm2343, 1.0, 0.0
        %v2360 = vsel %vm2344, 1.0, 0.0
        %v2361 = vsel %vm2345, 1.0, 0.0
        %v2362 = vsel %vm2346, 1.0, 0.0
        %v2363 = vsel %vm2347, 1.0, 0.0
        %v2364 = vsel %vm2348, 1.0, 0.0
        %v2365 = vsel %vm2349, 1.0, 0.0
        %v2366 = vsel %vm2350, 1.0, 0.0
        %v2367 = vsel %vm2351, 1.0, 0.0
        %v2368 = vsel %vm2352, 1.0, 0.0
        %v2369 = vsel %vm2353, 1.0, 0.0
        %v2370 = vsel %vm2354, 1.0, 0.0
        %2371 = vmatpush.msra.mxu0 0.0
        %2372 = vmatpush.msra.mxu0 0.0
        %2373 = vmatpush.msra.mxu0 0.0
        %2374 = vmatpush.msra.mxu0 0.0
        %2375 = vmatpush.msra.mxu0 0.0
        %2376 = vmatpush.msra.mxu0 0.0
        %2377 = vmatpush.msra.mxu0 0.0
        %2378 = vmatpush.msra.mxu0 0.0
        %2379 = vmatpush.msra.mxu0 %v2369
        %2380 = vmatpush.msra.mxu0 %v2367
        %2381 = vmatpush.msra.mxu0 %v2365
        %2382 = vmatpush.msra.mxu0 %v2363
        %2383 = vmatpush.msra.mxu0 %v2361
        %2384 = vmatpush.msra.mxu0 %v2359
        %2385 = vmatpush.msra.mxu0 %v2357
        %2386 = vmatpush.msra.mxu0 %v2355
        %2387 = vmatmul.f32.gmra.mxu0 %v1376
        %v2388 = vpop.f32.mrf.mxu0
        %v2389 = vadd.f32 0.0, %v2388
        %2390 = vmatmul.f32.gmra.mxu0 %v1379
        %v2391 = vpop.f32.mrf.mxu0
        %v2392 = vadd.f32 0.0, %v2391
        %2393 = vdwg.mxu0
        %2394 = vmatpush.msra.mxu0 0.0
        %2395 = vmatpush.msra.mxu0 0.0
        %2396 = vmatpush.msra.mxu0 0.0
        %2397 = vmatpush.msra.mxu0 0.0
        %2398 = vmatpush.msra.mxu0 0.0
        %2399 = vmatpush.msra.mxu0 0.0
        %2400 = vmatpush.msra.mxu0 0.0
        %2401 = vmatpush.msra.mxu0 0.0
        %2402 = vmatpush.msra.mxu0 %v2370
        %2403 = vmatpush.msra.mxu0 %v2368
        %2404 = vmatpush.msra.mxu0 %v2366
        %2405 = vmatpush.msra.mxu0 %v2364
        %2406 = vmatpush.msra.mxu0 %v2362
        %2407 = vmatpush.msra.mxu0 %v2360
        %2408 = vmatpush.msra.mxu0 %v2358
        %2409 = vmatpush.msra.mxu0 %v2356
        %2410 = vmatmul.f32.gmra.mxu0 %v1376
        %v2411 = vpop.f32.mrf.mxu0
        %v2412 = vadd.f32 0.0, %v2411
        %2413 = vmatmul.f32.gmra.mxu0 %v1379
        %v2414 = vpop.f32.mrf.mxu0
        %v2415 = vadd.f32 0.0, %v2414
        %2416 = vdwg.mxu0
        %2417 = vset.pattern.permute.xlu0 6
        %2418 = vperm.xlu0 %2417, %v237
        %v2419 = vpop.permute.xlu0 %2418
        %2421 = vset.pattern.permute.xlu0 6
        %2422 = vperm.xlu0 %2421, %v238
        %v2423 = vpop.permute.xlu0 %2422
        %v2425 = vmul.f32 %v2389, %v2419
        %v2426 = vmul.f32 %v2412, %v2419
        %v2427 = vmul.f32 %v2392, %v2423
        %v2428 = vmul.f32 %v2415, %v2423
        %v2429 = vadd.f32 %v2239, %v2425
        %v2430 = vadd.f32 %v2240, %v2426
        %v2431 = vadd.f32 %v2241, %v2427
        %v2432 = vadd.f32 %v2242, %v2428
        %vm2433 = vmand %vm2249, %vm1445
        %vm2434 = vmand %vm2250, %vm1446
        %vm2435 = vmand %vm2433, %vm1449
        %vm2436 = vmand %vm2434, %vm1450
        %vm2437 = vmand %vm2287, %vm1453
        %vm2438 = vmand %vm2288, %vm1454
        %vm2439 = vmand %vm2289, %vm1455
        %vm2440 = vmand %vm2290, %vm1456
        %vm2441 = vmand %vm2291, %vm1457
        %vm2442 = vmand %vm2292, %vm1458
        %vm2443 = vmand %vm2293, %vm1459
        %vm2444 = vmand %vm2294, %vm1460
        %vm2445 = vmand %vm2295, %vm1461
        %vm2446 = vmand %vm2296, %vm1462
        %vm2447 = vmand %vm2297, %vm1463
        %vm2448 = vmand %vm2298, %vm1464
        %vm2449 = vmand %vm2299, %vm1465
        %vm2450 = vmand %vm2300, %vm1466
        %vm2451 = vmand %vm2301, %vm1467
        %vm2452 = vmand %vm2302, %vm1468
        %vm2453 = vmand %vm2437, %vm1485
        %vm2454 = vmand %vm2438, %vm1486
        %vm2455 = vmand %vm2439, %vm1487
        %vm2456 = vmand %vm2440, %vm1488
        %vm2457 = vmand %vm2441, %vm1489
        %vm2458 = vmand %vm2442, %vm1490
        %vm2459 = vmand %vm2443, %vm1491
        %vm2460 = vmand %vm2444, %vm1492
        %vm2461 = vmand %vm2445, %vm1493
        %vm2462 = vmand %vm2446, %vm1494
        %vm2463 = vmand %vm2447, %vm1495
        %vm2464 = vmand %vm2448, %vm1496
        %vm2465 = vmand %vm2449, %vm1497
        %vm2466 = vmand %vm2450, %vm1498
        %vm2467 = vmand %vm2451, %vm1499
        %vm2468 = vmand %vm2452, %vm1500
        %v2469 = vsel %vm2435, 1, 0
        %v2470 = vsel %vm2436, 1, 0
        %vm2471 = vcmp.eq.s32.totalorder %v2469, 1
        %vm2472 = vcmp.eq.s32.totalorder %v2470, 1
        %vm2473 = vmand %vm2453, %vm2471
        %vm2474 = vmand %vm2454, %vm2472
        %vm2475 = vmand %vm2455, %vm2471
        %vm2476 = vmand %vm2456, %vm2472
        %vm2477 = vmand %vm2457, %vm2471
        %vm2478 = vmand %vm2458, %vm2472
        %vm2479 = vmand %vm2459, %vm2471
        %vm2480 = vmand %vm2460, %vm2472
        %vm2481 = vmand %vm2461, %vm2471
        %vm2482 = vmand %vm2462, %vm2472
        %vm2483 = vmand %vm2463, %vm2471
        %vm2484 = vmand %vm2464, %vm2472
        %vm2485 = vmand %vm2465, %vm2471
        %vm2486 = vmand %vm2466, %vm2472
        %vm2487 = vmand %vm2467, %vm2471
        %vm2488 = vmand %vm2468, %vm2472
        %v2489 = vsel %vm2473, 1.0, 0.0
        %v2490 = vsel %vm2474, 1.0, 0.0
        %v2491 = vsel %vm2475, 1.0, 0.0
        %v2492 = vsel %vm2476, 1.0, 0.0
        %v2493 = vsel %vm2477, 1.0, 0.0
        %v2494 = vsel %vm2478, 1.0, 0.0
        %v2495 = vsel %vm2479, 1.0, 0.0
        %v2496 = vsel %vm2480, 1.0, 0.0
        %v2497 = vsel %vm2481, 1.0, 0.0
        %v2498 = vsel %vm2482, 1.0, 0.0
        %v2499 = vsel %vm2483, 1.0, 0.0
        %v2500 = vsel %vm2484, 1.0, 0.0
        %v2501 = vsel %vm2485, 1.0, 0.0
        %v2502 = vsel %vm2486, 1.0, 0.0
        %v2503 = vsel %vm2487, 1.0, 0.0
        %v2504 = vsel %vm2488, 1.0, 0.0
        %2505 = vmatpush.msra.mxu0 0.0
        %2506 = vmatpush.msra.mxu0 0.0
        %2507 = vmatpush.msra.mxu0 0.0
        %2508 = vmatpush.msra.mxu0 0.0
        %2509 = vmatpush.msra.mxu0 0.0
        %2510 = vmatpush.msra.mxu0 0.0
        %2511 = vmatpush.msra.mxu0 0.0
        %2512 = vmatpush.msra.mxu0 0.0
        %2513 = vmatpush.msra.mxu0 %v2503
        %2514 = vmatpush.msra.mxu0 %v2501
        %2515 = vmatpush.msra.mxu0 %v2499
        %2516 = vmatpush.msra.mxu0 %v2497
        %2517 = vmatpush.msra.mxu0 %v2495
        %2518 = vmatpush.msra.mxu0 %v2493
        %2519 = vmatpush.msra.mxu0 %v2491
        %2520 = vmatpush.msra.mxu0 %v2489
        %2521 = vmatmul.f32.gmra.mxu0 %v1376
        %v2522 = vpop.f32.mrf.mxu0
        %v2523 = vadd.f32 0.0, %v2522
        %2524 = vmatmul.f32.gmra.mxu0 %v1379
        %v2525 = vpop.f32.mrf.mxu0
        %v2526 = vadd.f32 0.0, %v2525
        %2527 = vdwg.mxu0
        %2528 = vmatpush.msra.mxu0 0.0
        %2529 = vmatpush.msra.mxu0 0.0
        %2530 = vmatpush.msra.mxu0 0.0
        %2531 = vmatpush.msra.mxu0 0.0
        %2532 = vmatpush.msra.mxu0 0.0
        %2533 = vmatpush.msra.mxu0 0.0
        %2534 = vmatpush.msra.mxu0 0.0
        %2535 = vmatpush.msra.mxu0 0.0
        %2536 = vmatpush.msra.mxu0 %v2504
        %2537 = vmatpush.msra.mxu0 %v2502
        %2538 = vmatpush.msra.mxu0 %v2500
        %2539 = vmatpush.msra.mxu0 %v2498
        %2540 = vmatpush.msra.mxu0 %v2496
        %2541 = vmatpush.msra.mxu0 %v2494
        %2542 = vmatpush.msra.mxu0 %v2492
        %2543 = vmatpush.msra.mxu0 %v2490
        %2544 = vmatmul.f32.gmra.mxu0 %v1376
        %v2545 = vpop.f32.mrf.mxu0
        %v2546 = vadd.f32 0.0, %v2545
        %2547 = vmatmul.f32.gmra.mxu0 %v1379
        %v2548 = vpop.f32.mrf.mxu0
        %v2549 = vadd.f32 0.0, %v2548
        %2550 = vdwg.mxu0
        %2551 = vset.pattern.permute.xlu0 7
        %2552 = vperm.xlu0 %2551, %v237
        %v2553 = vpop.permute.xlu0 %2552
        %2555 = vset.pattern.permute.xlu0 7
        %2556 = vperm.xlu0 %2555, %v238
        %v2557 = vpop.permute.xlu0 %2556
        %v2559 = vmul.f32 %v2523, %v2553
        %v2560 = vmul.f32 %v2546, %v2553
        %v2561 = vmul.f32 %v2526, %v2557
        %v2562 = vmul.f32 %v2549, %v2557
        %v2563 = vadd.f32 %v2429, %v2559
        %v2564 = vadd.f32 %v2430, %v2560
        %v2565 = vadd.f32 %v2431, %v2561
        %v2566 = vadd.f32 %v2432, %v2562
        %vm2567 = vmand %vm2249, %vm1617
        %vm2568 = vmand %vm2250, %vm1618
        %vm2569 = vmand %vm2567, %vm1621
        %vm2570 = vmand %vm2568, %vm1622
        %vm2571 = vmand %vm2287, %vm1625
        %vm2572 = vmand %vm2288, %vm1626
        %vm2573 = vmand %vm2289, %vm1627
        %vm2574 = vmand %vm2290, %vm1628
        %vm2575 = vmand %vm2291, %vm1629
        %vm2576 = vmand %vm2292, %vm1630
        %vm2577 = vmand %vm2293, %vm1631
        %vm2578 = vmand %vm2294, %vm1632
        %vm2579 = vmand %vm2295, %vm1633
        %vm2580 = vmand %vm2296, %vm1634
        %vm2581 = vmand %vm2297, %vm1635
        %vm2582 = vmand %vm2298, %vm1636
        %vm2583 = vmand %vm2299, %vm1637
        %vm2584 = vmand %vm2300, %vm1638
        %vm2585 = vmand %vm2301, %vm1639
        %vm2586 = vmand %vm2302, %vm1640
        %vm2587 = vmand %vm2571, %vm1657
        %vm2588 = vmand %vm2572, %vm1658
        %vm2589 = vmand %vm2573, %vm1659
        %vm2590 = vmand %vm2574, %vm1660
        %vm2591 = vmand %vm2575, %vm1661
        %vm2592 = vmand %vm2576, %vm1662
        %vm2593 = vmand %vm2577, %vm1663
        %vm2594 = vmand %vm2578, %vm1664
        %vm2595 = vmand %vm2579, %vm1665
        %vm2596 = vmand %vm2580, %vm1666
        %vm2597 = vmand %vm2581, %vm1667
        %vm2598 = vmand %vm2582, %vm1668
        %vm2599 = vmand %vm2583, %vm1669
        %vm2600 = vmand %vm2584, %vm1670
        %vm2601 = vmand %vm2585, %vm1671
        %vm2602 = vmand %vm2586, %vm1672
        %v2603 = vsel %vm2569, 1, 0
        %v2604 = vsel %vm2570, 1, 0
        %vm2605 = vcmp.eq.s32.totalorder %v2603, 1
        %vm2606 = vcmp.eq.s32.totalorder %v2604, 1
        %vm2607 = vmand %vm2587, %vm2605
        %vm2608 = vmand %vm2588, %vm2606
        %vm2609 = vmand %vm2589, %vm2605
        %vm2610 = vmand %vm2590, %vm2606
        %vm2611 = vmand %vm2591, %vm2605
        %vm2612 = vmand %vm2592, %vm2606
        %vm2613 = vmand %vm2593, %vm2605
        %vm2614 = vmand %vm2594, %vm2606
        %vm2615 = vmand %vm2595, %vm2605
        %vm2616 = vmand %vm2596, %vm2606
        %vm2617 = vmand %vm2597, %vm2605
        %vm2618 = vmand %vm2598, %vm2606
        %vm2619 = vmand %vm2599, %vm2605
        %vm2620 = vmand %vm2600, %vm2606
        %vm2621 = vmand %vm2601, %vm2605
        %vm2622 = vmand %vm2602, %vm2606
        %v2623 = vsel %vm2607, 1.0, 0.0
        %v2624 = vsel %vm2608, 1.0, 0.0
        %v2625 = vsel %vm2609, 1.0, 0.0
        %v2626 = vsel %vm2610, 1.0, 0.0
        %v2627 = vsel %vm2611, 1.0, 0.0
        %v2628 = vsel %vm2612, 1.0, 0.0
        %v2629 = vsel %vm2613, 1.0, 0.0
        %v2630 = vsel %vm2614, 1.0, 0.0
        %v2631 = vsel %vm2615, 1.0, 0.0
        %v2632 = vsel %vm2616, 1.0, 0.0
        %v2633 = vsel %vm2617, 1.0, 0.0
        %v2634 = vsel %vm2618, 1.0, 0.0
        %v2635 = vsel %vm2619, 1.0, 0.0
        %v2636 = vsel %vm2620, 1.0, 0.0
        %v2637 = vsel %vm2621, 1.0, 0.0
        %v2638 = vsel %vm2622, 1.0, 0.0
        %2639 = vmatpush.msra.mxu0 0.0
        %2640 = vmatpush.msra.mxu0 0.0
        %2641 = vmatpush.msra.mxu0 0.0
        %2642 = vmatpush.msra.mxu0 0.0
        %2643 = vmatpush.msra.mxu0 0.0
        %2644 = vmatpush.msra.mxu0 0.0
        %2645 = vmatpush.msra.mxu0 0.0
        %2646 = vmatpush.msra.mxu0 0.0
        %2647 = vmatpush.msra.mxu0 %v2637
        %2648 = vmatpush.msra.mxu0 %v2635
        %2649 = vmatpush.msra.mxu0 %v2633
        %2650 = vmatpush.msra.mxu0 %v2631
        %2651 = vmatpush.msra.mxu0 %v2629
        %2652 = vmatpush.msra.mxu0 %v2627
        %2653 = vmatpush.msra.mxu0 %v2625
        %2654 = vmatpush.msra.mxu0 %v2623
        %2655 = vmatmul.f32.gmra.mxu0 %v1376
        %v2656 = vpop.f32.mrf.mxu0
        %v2657 = vadd.f32 0.0, %v2656
        %2658 = vmatmul.f32.gmra.mxu0 %v1379
        %v2659 = vpop.f32.mrf.mxu0
        %v2660 = vadd.f32 0.0, %v2659
        %2661 = vdwg.mxu0
        %2662 = vmatpush.msra.mxu0 0.0
        %2663 = vmatpush.msra.mxu0 0.0
        %2664 = vmatpush.msra.mxu0 0.0
        %2665 = vmatpush.msra.mxu0 0.0
        %2666 = vmatpush.msra.mxu0 0.0
        %2667 = vmatpush.msra.mxu0 0.0
        %2668 = vmatpush.msra.mxu0 0.0
        %2669 = vmatpush.msra.mxu0 0.0
        %2670 = vmatpush.msra.mxu0 %v2638
        %2671 = vmatpush.msra.mxu0 %v2636
        %2672 = vmatpush.msra.mxu0 %v2634
        %2673 = vmatpush.msra.mxu0 %v2632
        %2674 = vmatpush.msra.mxu0 %v2630
        %2675 = vmatpush.msra.mxu0 %v2628
        %2676 = vmatpush.msra.mxu0 %v2626
        %2677 = vmatpush.msra.mxu0 %v2624
        %2678 = vmatmul.f32.gmra.mxu0 %v1376
        %v2679 = vpop.f32.mrf.mxu0
        %v2680 = vadd.f32 0.0, %v2679
        %2681 = vmatmul.f32.gmra.mxu0 %v1379
        %v2682 = vpop.f32.mrf.mxu0
        %v2683 = vadd.f32 0.0, %v2682
        %2684 = vdwg.mxu0
        %2685 = vset.pattern.permute.xlu0 8
        %2686 = vperm.xlu0 %2685, %v237
        %v2687 = vpop.permute.xlu0 %2686
        %2689 = vset.pattern.permute.xlu0 8
        %2690 = vperm.xlu0 %2689, %v238
        %v2691 = vpop.permute.xlu0 %2690
        %v2693 = vmul.f32 %v2657, %v2687
        %v2694 = vmul.f32 %v2680, %v2687
        %v2695 = vmul.f32 %v2660, %v2691
        %v2696 = vmul.f32 %v2683, %v2691
        %v2697 = vadd.f32 %v2563, %v2693
        %v2698 = vadd.f32 %v2564, %v2694
        %v2699 = vadd.f32 %v2565, %v2695
        %v2700 = vadd.f32 %v2566, %v2696
        %v2701 = vadd.f32 %v2697, %v2699
        %v2702 = vrot.slane %v2701, 4
        %v2703 = vadd.f32 %v2701, %v2702
        %v2704 = vrot.slane %v2703, 2
        %v2705 = vadd.f32 %v2703, %v2704
        %v2706 = vrot.slane %v2705, 1
        %v2707 = vadd.f32 %v2705, %v2706
        %v2708 = vadd.f32 %v2698, %v2700
        %v2709 = vrot.slane %v2708, 4
        %v2710 = vadd.f32 %v2708, %v2709
        %v2711 = vrot.slane %v2710, 2
        %v2712 = vadd.f32 %v2710, %v2711
        %v2713 = vrot.slane %v2712, 1
        %v2714 = vadd.f32 %v2712, %v2713
        %2716 = vset.pattern.permute.xlu0 0
        %2717 = vperm.xlu0 %2716, %v239
        %v2718 = vpop.permute.xlu0 %2717
        %v2720 = vperm.slane %v2718, 0
        %v2721 = vadd.f32 %v2707, %v2720
        %v2722 = vadd.f32 %v2714, %v2720
        %v2723 = vmax.f32 %v2721, 0.0
        %v2724 = vmax.f32 %v2722, 0.0
        %v2725 = vmul.u32 %v1171, 2
        %v2726 = vmul.u32 %v1172, 2
        %vm2727 = vcmp.ge.s32.totalorder %v241, %v2725
        %vm2728 = vcmp.ge.s32.totalorder %v241, %v2726
        %vm2729 = vcmp.ge.s32.totalorder %v242, %v2725
        %vm2730 = vcmp.ge.s32.totalorder %v242, %v2726
        %vm2731 = vcmp.ge.s32.totalorder %v243, %v2725
        %vm2732 = vcmp.ge.s32.totalorder %v243, %v2726
        %vm2733 = vcmp.ge.s32.totalorder %v244, %v2725
        %vm2734 = vcmp.ge.s32.totalorder %v244, %v2726
        %v2735 = vadd.s32 %v2725, 1
        %v2736 = vadd.s32 %v2726, 1
        %vm2737 = vcmp.le.s32.totalorder %v241, %v2735
        %vm2738 = vcmp.le.s32.totalorder %v241, %v2736
        %vm2739 = vcmp.le.s32.totalorder %v242, %v2735
        %vm2740 = vcmp.le.s32.totalorder %v242, %v2736
        %vm2741 = vcmp.le.s32.totalorder %v243, %v2735
        %vm2742 = vcmp.le.s32.totalorder %v243, %v2736
        %vm2743 = vcmp.le.s32.totalorder %v244, %v2735
        %vm2744 = vcmp.le.s32.totalorder %v244, %v2736
        %vm2745 = vmand %vm2727, %vm2737
        %vm2746 = vmand %vm2728, %vm2738
        %vm2747 = vmand %vm2729, %vm2739
        %vm2748 = vmand %vm2730, %vm2740
        %vm2749 = vmand %vm2731, %vm2741
        %vm2750 = vmand %vm2732, %vm2742
        %vm2751 = vmand %vm2733, %vm2743
        %vm2752 = vmand %vm2734, %vm2744
        %v2753 = vsel %vm2745, 1.0, 0.0
        %v2754 = vsel %vm2746, 1.0, 0.0
        %v2755 = vsel %vm2747, 1.0, 0.0
        %v2756 = vsel %vm2748, 1.0, 0.0
        %v2757 = vsel %vm2749, 1.0, 0.0
        %v2758 = vsel %vm2750, 1.0, 0.0
        %v2759 = vsel %vm2751, 1.0, 0.0
        %v2760 = vsel %vm2752, 1.0, 0.0
        %v2761 = vadd.s32 %v241, 64
        %v2762 = vadd.s32 %v241, 72
        %v2763 = vadd.s32 %v241, 80
        %v2764 = vadd.s32 %v241, 88
        %v2765 = vadd.s32 %v241, 96
        %v2766 = vadd.s32 %v241, 104
        %v2767 = vadd.s32 %v241, 112
        %v2768 = vadd.s32 %v241, 120
        %v2769 = vadd.s32 %v241, 128
        %v2770 = vadd.s32 %v241, 136
        %v2771 = vadd.s32 %v241, 144
        %v2772 = vadd.s32 %v241, 152
        %v2773 = vadd.s32 %v241, 160
        %v2774 = vadd.s32 %v241, 168
        %v2775 = vadd.s32 %v241, 176
        %v2776 = vadd.s32 %v241, 184
        %v2777 = vadd.s32 %v241, 192
        %v2778 = vadd.s32 %v241, 200
        %v2779 = vadd.s32 %v241, 208
        %v2780 = vadd.s32 %v241, 216
        %v2781 = vadd.s32 %v241, 224
        %v2782 = vadd.s32 %v241, 232
        %v2783 = vadd.s32 %v241, 240
        %v2784 = vadd.s32 %v241, 248
        %vm2785 = vcmp.ge.s32.totalorder %v2761, 16
        %vm2786 = vcmp.ge.s32.totalorder %v2762, 16
        %vm2787 = vcmp.ge.s32.totalorder %v2763, 16
        %vm2788 = vcmp.ge.s32.totalorder %v2764, 16
        %vm2789 = vcmp.ge.s32.totalorder %v2765, 16
        %vm2790 = vcmp.ge.s32.totalorder %v2766, 16
        %vm2791 = vcmp.ge.s32.totalorder %v2767, 16
        %vm2792 = vcmp.ge.s32.totalorder %v2768, 16
        %vm2793 = vcmp.ge.s32.totalorder %v2769, 16
        %vm2794 = vcmp.ge.s32.totalorder %v2770, 16
        %vm2795 = vcmp.ge.s32.totalorder %v2771, 16
        %vm2796 = vcmp.ge.s32.totalorder %v2772, 16
        %vm2797 = vcmp.ge.s32.totalorder %v2773, 16
        %vm2798 = vcmp.ge.s32.totalorder %v2774, 16
        %vm2799 = vcmp.ge.s32.totalorder %v2775, 16
        %vm2800 = vcmp.ge.s32.totalorder %v2776, 16
        %vm2801 = vcmp.ge.s32.totalorder %v2777, 16
        %vm2802 = vcmp.ge.s32.totalorder %v2778, 16
        %vm2803 = vcmp.ge.s32.totalorder %v2779, 16
        %vm2804 = vcmp.ge.s32.totalorder %v2780, 16
        %vm2805 = vcmp.ge.s32.totalorder %v2781, 16
        %vm2806 = vcmp.ge.s32.totalorder %v2782, 16
        %vm2807 = vcmp.ge.s32.totalorder %v2783, 16
        %vm2808 = vcmp.ge.s32.totalorder %v2784, 16
        %v2809 = vsel %vm2785, 1, 0
        %v2810 = vsel %vm2786, 1, 0
        %v2811 = vsel %vm2787, 1, 0
        %v2812 = vsel %vm2788, 1, 0
        %v2813 = vsel %vm2789, 1, 0
        %v2814 = vsel %vm2790, 1, 0
        %v2815 = vsel %vm2791, 1, 0
        %v2816 = vsel %vm2792, 1, 0
        %v2817 = vsel %vm2793, 1, 0
        %v2818 = vsel %vm2794, 1, 0
        %v2819 = vsel %vm2795, 1, 0
        %v2820 = vsel %vm2796, 1, 0
        %v2821 = vsel %vm2797, 1, 0
        %v2822 = vsel %vm2798, 1, 0
        %v2823 = vsel %vm2799, 1, 0
        %v2824 = vsel %vm2800, 1, 0
        %v2825 = vsel %vm2801, 1, 0
        %v2826 = vsel %vm2802, 1, 0
        %v2827 = vsel %vm2803, 1, 0
        %v2828 = vsel %vm2804, 1, 0
        %v2829 = vsel %vm2805, 1, 0
        %v2830 = vsel %vm2806, 1, 0
        %v2831 = vsel %vm2807, 1, 0
        %v2832 = vsel %vm2808, 1, 0
        %vm2833 = vcmp.ge.s32.totalorder %v2761, 32
        %vm2834 = vcmp.ge.s32.totalorder %v2762, 32
        %vm2835 = vcmp.ge.s32.totalorder %v2763, 32
        %vm2836 = vcmp.ge.s32.totalorder %v2764, 32
        %vm2837 = vcmp.ge.s32.totalorder %v2765, 32
        %vm2838 = vcmp.ge.s32.totalorder %v2766, 32
        %vm2839 = vcmp.ge.s32.totalorder %v2767, 32
        %vm2840 = vcmp.ge.s32.totalorder %v2768, 32
        %vm2841 = vcmp.ge.s32.totalorder %v2769, 32
        %vm2842 = vcmp.ge.s32.totalorder %v2770, 32
        %vm2843 = vcmp.ge.s32.totalorder %v2771, 32
        %vm2844 = vcmp.ge.s32.totalorder %v2772, 32
        %vm2845 = vcmp.ge.s32.totalorder %v2773, 32
        %vm2846 = vcmp.ge.s32.totalorder %v2774, 32
        %vm2847 = vcmp.ge.s32.totalorder %v2775, 32
        %vm2848 = vcmp.ge.s32.totalorder %v2776, 32
        %vm2849 = vcmp.ge.s32.totalorder %v2777, 32
        %vm2850 = vcmp.ge.s32.totalorder %v2778, 32
        %vm2851 = vcmp.ge.s32.totalorder %v2779, 32
        %vm2852 = vcmp.ge.s32.totalorder %v2780, 32
        %vm2853 = vcmp.ge.s32.totalorder %v2781, 32
        %vm2854 = vcmp.ge.s32.totalorder %v2782, 32
        %vm2855 = vcmp.ge.s32.totalorder %v2783, 32
        %vm2856 = vcmp.ge.s32.totalorder %v2784, 32
        %v2857 = vsel %vm2833, 1, 0
        %v2858 = vsel %vm2834, 1, 0
        %v2859 = vsel %vm2835, 1, 0
        %v2860 = vsel %vm2836, 1, 0
        %v2861 = vsel %vm2837, 1, 0
        %v2862 = vsel %vm2838, 1, 0
        %v2863 = vsel %vm2839, 1, 0
        %v2864 = vsel %vm2840, 1, 0
        %v2865 = vsel %vm2841, 1, 0
        %v2866 = vsel %vm2842, 1, 0
        %v2867 = vsel %vm2843, 1, 0
        %v2868 = vsel %vm2844, 1, 0
        %v2869 = vsel %vm2845, 1, 0
        %v2870 = vsel %vm2846, 1, 0
        %v2871 = vsel %vm2847, 1, 0
        %v2872 = vsel %vm2848, 1, 0
        %v2873 = vsel %vm2849, 1, 0
        %v2874 = vsel %vm2850, 1, 0
        %v2875 = vsel %vm2851, 1, 0
        %v2876 = vsel %vm2852, 1, 0
        %v2877 = vsel %vm2853, 1, 0
        %v2878 = vsel %vm2854, 1, 0
        %v2879 = vsel %vm2855, 1, 0
        %v2880 = vsel %vm2856, 1, 0
        %v2881 = vadd.s32 %v938, %v986
        %v2882 = vadd.s32 %v939, %v987
        %v2883 = vadd.s32 %v940, %v988
        %v2884 = vadd.s32 %v941, %v989
        %v2885 = vadd.s32 %v942, %v990
        %v2886 = vadd.s32 %v943, %v991
        %v2887 = vadd.s32 %v944, %v992
        %v2888 = vadd.s32 %v945, %v993
        %v2889 = vadd.s32 %v2809, %v2857
        %v2890 = vadd.s32 %v2810, %v2858
        %v2891 = vadd.s32 %v2811, %v2859
        %v2892 = vadd.s32 %v2812, %v2860
        %v2893 = vadd.s32 %v2813, %v2861
        %v2894 = vadd.s32 %v2814, %v2862
        %v2895 = vadd.s32 %v2815, %v2863
        %v2896 = vadd.s32 %v2816, %v2864
        %v2897 = vadd.s32 %v2817, %v2865
        %v2898 = vadd.s32 %v2818, %v2866
        %v2899 = vadd.s32 %v2819, %v2867
        %v2900 = vadd.s32 %v2820, %v2868
        %v2901 = vadd.s32 %v2821, %v2869
        %v2902 = vadd.s32 %v2822, %v2870
        %v2903 = vadd.s32 %v2823, %v2871
        %v2904 = vadd.s32 %v2824, %v2872
        %v2905 = vadd.s32 %v2825, %v2873
        %v2906 = vadd.s32 %v2826, %v2874
        %v2907 = vadd.s32 %v2827, %v2875
        %v2908 = vadd.s32 %v2828, %v2876
        %v2909 = vadd.s32 %v2829, %v2877
        %v2910 = vadd.s32 %v2830, %v2878
        %v2911 = vadd.s32 %v2831, %v2879
        %v2912 = vadd.s32 %v2832, %v2880
        %vm2913 = vcmp.ge.s32.totalorder %v2761, 48
        %vm2914 = vcmp.ge.s32.totalorder %v2762, 48
        %vm2915 = vcmp.ge.s32.totalorder %v2763, 48
        %vm2916 = vcmp.ge.s32.totalorder %v2764, 48
        %vm2917 = vcmp.ge.s32.totalorder %v2765, 48
        %vm2918 = vcmp.ge.s32.totalorder %v2766, 48
        %vm2919 = vcmp.ge.s32.totalorder %v2767, 48
        %vm2920 = vcmp.ge.s32.totalorder %v2768, 48
        %vm2921 = vcmp.ge.s32.totalorder %v2769, 48
        %vm2922 = vcmp.ge.s32.totalorder %v2770, 48
        %vm2923 = vcmp.ge.s32.totalorder %v2771, 48
        %vm2924 = vcmp.ge.s32.totalorder %v2772, 48
        %vm2925 = vcmp.ge.s32.totalorder %v2773, 48
        %vm2926 = vcmp.ge.s32.totalorder %v2774, 48
        %vm2927 = vcmp.ge.s32.totalorder %v2775, 48
        %vm2928 = vcmp.ge.s32.totalorder %v2776, 48
        %vm2929 = vcmp.ge.s32.totalorder %v2777, 48
        %vm2930 = vcmp.ge.s32.totalorder %v2778, 48
        %vm2931 = vcmp.ge.s32.totalorder %v2779, 48
        %vm2932 = vcmp.ge.s32.totalorder %v2780, 48
        %vm2933 = vcmp.ge.s32.totalorder %v2781, 48
        %vm2934 = vcmp.ge.s32.totalorder %v2782, 48
        %vm2935 = vcmp.ge.s32.totalorder %v2783, 48
        %vm2936 = vcmp.ge.s32.totalorder %v2784, 48
        %v2937 = vsel %vm2913, 1, 0
        %v2938 = vsel %vm2914, 1, 0
        %v2939 = vsel %vm2915, 1, 0
        %v2940 = vsel %vm2916, 1, 0
        %v2941 = vsel %vm2917, 1, 0
        %v2942 = vsel %vm2918, 1, 0
        %v2943 = vsel %vm2919, 1, 0
        %v2944 = vsel %vm2920, 1, 0
        %v2945 = vsel %vm2921, 1, 0
        %v2946 = vsel %vm2922, 1, 0
        %v2947 = vsel %vm2923, 1, 0
        %v2948 = vsel %vm2924, 1, 0
        %v2949 = vsel %vm2925, 1, 0
        %v2950 = vsel %vm2926, 1, 0
        %v2951 = vsel %vm2927, 1, 0
        %v2952 = vsel %vm2928, 1, 0
        %v2953 = vsel %vm2929, 1, 0
        %v2954 = vsel %vm2930, 1, 0
        %v2955 = vsel %vm2931, 1, 0
        %v2956 = vsel %vm2932, 1, 0
        %v2957 = vsel %vm2933, 1, 0
        %v2958 = vsel %vm2934, 1, 0
        %v2959 = vsel %vm2935, 1, 0
        %v2960 = vsel %vm2936, 1, 0
        %v2961 = vadd.s32 %v2881, %v1034
        %v2962 = vadd.s32 %v2882, %v1035
        %v2963 = vadd.s32 %v2883, %v1036
        %v2964 = vadd.s32 %v2884, %v1037
        %v2965 = vadd.s32 %v2885, %v1038
        %v2966 = vadd.s32 %v2886, %v1039
        %v2967 = vadd.s32 %v2887, %v1040
        %v2968 = vadd.s32 %v2888, %v1041
        %v2969 = vadd.s32 %v2889, %v2937
        %v2970 = vadd.s32 %v2890, %v2938
        %v2971 = vadd.s32 %v2891, %v2939
        %v2972 = vadd.s32 %v2892, %v2940
        %v2973 = vadd.s32 %v2893, %v2941
        %v2974 = vadd.s32 %v2894, %v2942
        %v2975 = vadd.s32 %v2895, %v2943
        %v2976 = vadd.s32 %v2896, %v2944
        %v2977 = vadd.s32 %v2897, %v2945
        %v2978 = vadd.s32 %v2898, %v2946
        %v2979 = vadd.s32 %v2899, %v2947
        %v2980 = vadd.s32 %v2900, %v2948
        %v2981 = vadd.s32 %v2901, %v2949
        %v2982 = vadd.s32 %v2902, %v2950
        %v2983 = vadd.s32 %v2903, %v2951
        %v2984 = vadd.s32 %v2904, %v2952
        %v2985 = vadd.s32 %v2905, %v2953
        %v2986 = vadd.s32 %v2906, %v2954
        %v2987 = vadd.s32 %v2907, %v2955
        %v2988 = vadd.s32 %v2908, %v2956
        %v2989 = vadd.s32 %v2909, %v2957
        %v2990 = vadd.s32 %v2910, %v2958
        %v2991 = vadd.s32 %v2911, %v2959
        %v2992 = vadd.s32 %v2912, %v2960
        %vm2993 = vcmp.ge.s32.totalorder %v241, 64
        %vm2994 = vcmp.ge.s32.totalorder %v242, 64
        %vm2995 = vcmp.ge.s32.totalorder %v243, 64
        %vm2996 = vcmp.ge.s32.totalorder %v244, 64
        %vm2997 = vcmp.ge.s32.totalorder %v245, 64
        %vm2998 = vcmp.ge.s32.totalorder %v246, 64
        %vm2999 = vcmp.ge.s32.totalorder %v247, 64
        %vm3000 = vcmp.ge.s32.totalorder %v248, 64
        %vm3001 = vcmp.ge.s32.totalorder %v2761, 64
        %vm3002 = vcmp.ge.s32.totalorder %v2762, 64
        %vm3003 = vcmp.ge.s32.totalorder %v2763, 64
        %vm3004 = vcmp.ge.s32.totalorder %v2764, 64
        %vm3005 = vcmp.ge.s32.totalorder %v2765, 64
        %vm3006 = vcmp.ge.s32.totalorder %v2766, 64
        %vm3007 = vcmp.ge.s32.totalorder %v2767, 64
        %vm3008 = vcmp.ge.s32.totalorder %v2768, 64
        %vm3009 = vcmp.ge.s32.totalorder %v2769, 64
        %vm3010 = vcmp.ge.s32.totalorder %v2770, 64
        %vm3011 = vcmp.ge.s32.totalorder %v2771, 64
        %vm3012 = vcmp.ge.s32.totalorder %v2772, 64
        %vm3013 = vcmp.ge.s32.totalorder %v2773, 64
        %vm3014 = vcmp.ge.s32.totalorder %v2774, 64
        %vm3015 = vcmp.ge.s32.totalorder %v2775, 64
        %vm3016 = vcmp.ge.s32.totalorder %v2776, 64
        %vm3017 = vcmp.ge.s32.totalorder %v2777, 64
        %vm3018 = vcmp.ge.s32.totalorder %v2778, 64
        %vm3019 = vcmp.ge.s32.totalorder %v2779, 64
        %vm3020 = vcmp.ge.s32.totalorder %v2780, 64
        %vm3021 = vcmp.ge.s32.totalorder %v2781, 64
        %vm3022 = vcmp.ge.s32.totalorder %v2782, 64
        %vm3023 = vcmp.ge.s32.totalorder %v2783, 64
        %vm3024 = vcmp.ge.s32.totalorder %v2784, 64
        %v3025 = vsel %vm2993, 1, 0
        %v3026 = vsel %vm2994, 1, 0
        %v3027 = vsel %vm2995, 1, 0
        %v3028 = vsel %vm2996, 1, 0
        %v3029 = vsel %vm2997, 1, 0
        %v3030 = vsel %vm2998, 1, 0
        %v3031 = vsel %vm2999, 1, 0
        %v3032 = vsel %vm3000, 1, 0
        %v3033 = vsel %vm3001, 1, 0
        %v3034 = vsel %vm3002, 1, 0
        %v3035 = vsel %vm3003, 1, 0
        %v3036 = vsel %vm3004, 1, 0
        %v3037 = vsel %vm3005, 1, 0
        %v3038 = vsel %vm3006, 1, 0
        %v3039 = vsel %vm3007, 1, 0
        %v3040 = vsel %vm3008, 1, 0
        %v3041 = vsel %vm3009, 1, 0
        %v3042 = vsel %vm3010, 1, 0
        %v3043 = vsel %vm3011, 1, 0
        %v3044 = vsel %vm3012, 1, 0
        %v3045 = vsel %vm3013, 1, 0
        %v3046 = vsel %vm3014, 1, 0
        %v3047 = vsel %vm3015, 1, 0
        %v3048 = vsel %vm3016, 1, 0
        %v3049 = vsel %vm3017, 1, 0
        %v3050 = vsel %vm3018, 1, 0
        %v3051 = vsel %vm3019, 1, 0
        %v3052 = vsel %vm3020, 1, 0
        %v3053 = vsel %vm3021, 1, 0
        %v3054 = vsel %vm3022, 1, 0
        %v3055 = vsel %vm3023, 1, 0
        %v3056 = vsel %vm3024, 1, 0
        %v3057 = vadd.s32 %v2961, %v3025
        %v3058 = vadd.s32 %v2962, %v3026
        %v3059 = vadd.s32 %v2963, %v3027
        %v3060 = vadd.s32 %v2964, %v3028
        %v3061 = vadd.s32 %v2965, %v3029
        %v3062 = vadd.s32 %v2966, %v3030
        %v3063 = vadd.s32 %v2967, %v3031
        %v3064 = vadd.s32 %v2968, %v3032
        %v3065 = vadd.s32 %v2969, %v3033
        %v3066 = vadd.s32 %v2970, %v3034
        %v3067 = vadd.s32 %v2971, %v3035
        %v3068 = vadd.s32 %v2972, %v3036
        %v3069 = vadd.s32 %v2973, %v3037
        %v3070 = vadd.s32 %v2974, %v3038
        %v3071 = vadd.s32 %v2975, %v3039
        %v3072 = vadd.s32 %v2976, %v3040
        %v3073 = vadd.s32 %v2977, %v3041
        %v3074 = vadd.s32 %v2978, %v3042
        %v3075 = vadd.s32 %v2979, %v3043
        %v3076 = vadd.s32 %v2980, %v3044
        %v3077 = vadd.s32 %v2981, %v3045
        %v3078 = vadd.s32 %v2982, %v3046
        %v3079 = vadd.s32 %v2983, %v3047
        %v3080 = vadd.s32 %v2984, %v3048
        %v3081 = vadd.s32 %v2985, %v3049
        %v3082 = vadd.s32 %v2986, %v3050
        %v3083 = vadd.s32 %v2987, %v3051
        %v3084 = vadd.s32 %v2988, %v3052
        %v3085 = vadd.s32 %v2989, %v3053
        %v3086 = vadd.s32 %v2990, %v3054
        %v3087 = vadd.s32 %v2991, %v3055
        %v3088 = vadd.s32 %v2992, %v3056
        %vm3089 = vcmp.ge.s32.totalorder %v241, 80
        %vm3090 = vcmp.ge.s32.totalorder %v242, 80
        %vm3091 = vcmp.ge.s32.totalorder %v243, 80
        %vm3092 = vcmp.ge.s32.totalorder %v244, 80
        %vm3093 = vcmp.ge.s32.totalorder %v245, 80
        %vm3094 = vcmp.ge.s32.totalorder %v246, 80
        %vm3095 = vcmp.ge.s32.totalorder %v247, 80
        %vm3096 = vcmp.ge.s32.totalorder %v248, 80
        %vm3097 = vcmp.ge.s32.totalorder %v2761, 80
        %vm3098 = vcmp.ge.s32.totalorder %v2762, 80
        %vm3099 = vcmp.ge.s32.totalorder %v2763, 80
        %vm3100 = vcmp.ge.s32.totalorder %v2764, 80
        %vm3101 = vcmp.ge.s32.totalorder %v2765, 80
        %vm3102 = vcmp.ge.s32.totalorder %v2766, 80
        %vm3103 = vcmp.ge.s32.totalorder %v2767, 80
        %vm3104 = vcmp.ge.s32.totalorder %v2768, 80
        %vm3105 = vcmp.ge.s32.totalorder %v2769, 80
        %vm3106 = vcmp.ge.s32.totalorder %v2770, 80
        %vm3107 = vcmp.ge.s32.totalorder %v2771, 80
        %vm3108 = vcmp.ge.s32.totalorder %v2772, 80
        %vm3109 = vcmp.ge.s32.totalorder %v2773, 80
        %vm3110 = vcmp.ge.s32.totalorder %v2774, 80
        %vm3111 = vcmp.ge.s32.totalorder %v2775, 80
        %vm3112 = vcmp.ge.s32.totalorder %v2776, 80
        %vm3113 = vcmp.ge.s32.totalorder %v2777, 80
        %vm3114 = vcmp.ge.s32.totalorder %v2778, 80
        %vm3115 = vcmp.ge.s32.totalorder %v2779, 80
        %vm3116 = vcmp.ge.s32.totalorder %v2780, 80
        %vm3117 = vcmp.ge.s32.totalorder %v2781, 80
        %vm3118 = vcmp.ge.s32.totalorder %v2782, 80
        %vm3119 = vcmp.ge.s32.totalorder %v2783, 80
        %vm3120 = vcmp.ge.s32.totalorder %v2784, 80
        %v3121 = vsel %vm3089, 1, 0
        %v3122 = vsel %vm3090, 1, 0
        %v3123 = vsel %vm3091, 1, 0
        %v3124 = vsel %vm3092, 1, 0
        %v3125 = vsel %vm3093, 1, 0
        %v3126 = vsel %vm3094, 1, 0
        %v3127 = vsel %vm3095, 1, 0
        %v3128 = vsel %vm3096, 1, 0
        %v3129 = vsel %vm3097, 1, 0
        %v3130 = vsel %vm3098, 1, 0
        %v3131 = vsel %vm3099, 1, 0
        %v3132 = vsel %vm3100, 1, 0
        %v3133 = vsel %vm3101, 1, 0
        %v3134 = vsel %vm3102, 1, 0
        %v3135 = vsel %vm3103, 1, 0
        %v3136 = vsel %vm3104, 1, 0
        %v3137 = vsel %vm3105, 1, 0
        %v3138 = vsel %vm3106, 1, 0
        %v3139 = vsel %vm3107, 1, 0
        %v3140 = vsel %vm3108, 1, 0
        %v3141 = vsel %vm3109, 1, 0
        %v3142 = vsel %vm3110, 1, 0
        %v3143 = vsel %vm3111, 1, 0
        %v3144 = vsel %vm3112, 1, 0
        %v3145 = vsel %vm3113, 1, 0
        %v3146 = vsel %vm3114, 1, 0
        %v3147 = vsel %vm3115, 1, 0
        %v3148 = vsel %vm3116, 1, 0
        %v3149 = vsel %vm3117, 1, 0
        %v3150 = vsel %vm3118, 1, 0
        %v3151 = vsel %vm3119, 1, 0
        %v3152 = vsel %vm3120, 1, 0
        %v3153 = vadd.s32 %v3057, %v3121
        %v3154 = vadd.s32 %v3058, %v3122
        %v3155 = vadd.s32 %v3059, %v3123
        %v3156 = vadd.s32 %v3060, %v3124
        %v3157 = vadd.s32 %v3061, %v3125
        %v3158 = vadd.s32 %v3062, %v3126
        %v3159 = vadd.s32 %v3063, %v3127
        %v3160 = vadd.s32 %v3064, %v3128
        %v3161 = vadd.s32 %v3065, %v3129
        %v3162 = vadd.s32 %v3066, %v3130
        %v3163 = vadd.s32 %v3067, %v3131
        %v3164 = vadd.s32 %v3068, %v3132
        %v3165 = vadd.s32 %v3069, %v3133
        %v3166 = vadd.s32 %v3070, %v3134
        %v3167 = vadd.s32 %v3071, %v3135
        %v3168 = vadd.s32 %v3072, %v3136
        %v3169 = vadd.s32 %v3073, %v3137
        %v3170 = vadd.s32 %v3074, %v3138
        %v3171 = vadd.s32 %v3075, %v3139
        %v3172 = vadd.s32 %v3076, %v3140
        %v3173 = vadd.s32 %v3077, %v3141
        %v3174 = vadd.s32 %v3078, %v3142
        %v3175 = vadd.s32 %v3079, %v3143
        %v3176 = vadd.s32 %v3080, %v3144
        %v3177 = vadd.s32 %v3081, %v3145
        %v3178 = vadd.s32 %v3082, %v3146
        %v3179 = vadd.s32 %v3083, %v3147
        %v3180 = vadd.s32 %v3084, %v3148
        %v3181 = vadd.s32 %v3085, %v3149
        %v3182 = vadd.s32 %v3086, %v3150
        %v3183 = vadd.s32 %v3087, %v3151
        %v3184 = vadd.s32 %v3088, %v3152
        %vm3185 = vcmp.ge.s32.totalorder %v241, 96
        %vm3186 = vcmp.ge.s32.totalorder %v242, 96
        %vm3187 = vcmp.ge.s32.totalorder %v243, 96
        %vm3188 = vcmp.ge.s32.totalorder %v244, 96
        %vm3189 = vcmp.ge.s32.totalorder %v245, 96
        %vm3190 = vcmp.ge.s32.totalorder %v246, 96
        %vm3191 = vcmp.ge.s32.totalorder %v247, 96
        %vm3192 = vcmp.ge.s32.totalorder %v248, 96
        %vm3193 = vcmp.ge.s32.totalorder %v2761, 96
        %vm3194 = vcmp.ge.s32.totalorder %v2762, 96
        %vm3195 = vcmp.ge.s32.totalorder %v2763, 96
        %vm3196 = vcmp.ge.s32.totalorder %v2764, 96
        %vm3197 = vcmp.ge.s32.totalorder %v2765, 96
        %vm3198 = vcmp.ge.s32.totalorder %v2766, 96
        %vm3199 = vcmp.ge.s32.totalorder %v2767, 96
        %vm3200 = vcmp.ge.s32.totalorder %v2768, 96
        %vm3201 = vcmp.ge.s32.totalorder %v2769, 96
        %vm3202 = vcmp.ge.s32.totalorder %v2770, 96
        %vm3203 = vcmp.ge.s32.totalorder %v2771, 96
        %vm3204 = vcmp.ge.s32.totalorder %v2772, 96
        %vm3205 = vcmp.ge.s32.totalorder %v2773, 96
        %vm3206 = vcmp.ge.s32.totalorder %v2774, 96
        %vm3207 = vcmp.ge.s32.totalorder %v2775, 96
        %vm3208 = vcmp.ge.s32.totalorder %v2776, 96
        %vm3209 = vcmp.ge.s32.totalorder %v2777, 96
        %vm3210 = vcmp.ge.s32.totalorder %v2778, 96
        %vm3211 = vcmp.ge.s32.totalorder %v2779, 96
        %vm3212 = vcmp.ge.s32.totalorder %v2780, 96
        %vm3213 = vcmp.ge.s32.totalorder %v2781, 96
        %vm3214 = vcmp.ge.s32.totalorder %v2782, 96
        %vm3215 = vcmp.ge.s32.totalorder %v2783, 96
        %vm3216 = vcmp.ge.s32.totalorder %v2784, 96
        %v3217 = vsel %vm3185, 1, 0
        %v3218 = vsel %vm3186, 1, 0
        %v3219 = vsel %vm3187, 1, 0
        %v3220 = vsel %vm3188, 1, 0
        %v3221 = vsel %vm3189, 1, 0
        %v3222 = vsel %vm3190, 1, 0
        %v3223 = vsel %vm3191, 1, 0
        %v3224 = vsel %vm3192, 1, 0
        %v3225 = vsel %vm3193, 1, 0
        %v3226 = vsel %vm3194, 1, 0
        %v3227 = vsel %vm3195, 1, 0
        %v3228 = vsel %vm3196, 1, 0
        %v3229 = vsel %vm3197, 1, 0
        %v3230 = vsel %vm3198, 1, 0
        %v3231 = vsel %vm3199, 1, 0
        %v3232 = vsel %vm3200, 1, 0
        %v3233 = vsel %vm3201, 1, 0
        %v3234 = vsel %vm3202, 1, 0
        %v3235 = vsel %vm3203, 1, 0
        %v3236 = vsel %vm3204, 1, 0
        %v3237 = vsel %vm3205, 1, 0
        %v3238 = vsel %vm3206, 1, 0
        %v3239 = vsel %vm3207, 1, 0
        %v3240 = vsel %vm3208, 1, 0
        %v3241 = vsel %vm3209, 1, 0
        %v3242 = vsel %vm3210, 1, 0
        %v3243 = vsel %vm3211, 1, 0
        %v3244 = vsel %vm3212, 1, 0
        %v3245 = vsel %vm3213, 1, 0
        %v3246 = vsel %vm3214, 1, 0
        %v3247 = vsel %vm3215, 1, 0
        %v3248 = vsel %vm3216, 1, 0
        %v3249 = vadd.s32 %v3153, %v3217
        %v3250 = vadd.s32 %v3154, %v3218
        %v3251 = vadd.s32 %v3155, %v3219
        %v3252 = vadd.s32 %v3156, %v3220
        %v3253 = vadd.s32 %v3157, %v3221
        %v3254 = vadd.s32 %v3158, %v3222
        %v3255 = vadd.s32 %v3159, %v3223
        %v3256 = vadd.s32 %v3160, %v3224
        %v3257 = vadd.s32 %v3161, %v3225
        %v3258 = vadd.s32 %v3162, %v3226
        %v3259 = vadd.s32 %v3163, %v3227
        %v3260 = vadd.s32 %v3164, %v3228
        %v3261 = vadd.s32 %v3165, %v3229
        %v3262 = vadd.s32 %v3166, %v3230
        %v3263 = vadd.s32 %v3167, %v3231
        %v3264 = vadd.s32 %v3168, %v3232
        %v3265 = vadd.s32 %v3169, %v3233
        %v3266 = vadd.s32 %v3170, %v3234
        %v3267 = vadd.s32 %v3171, %v3235
        %v3268 = vadd.s32 %v3172, %v3236
        %v3269 = vadd.s32 %v3173, %v3237
        %v3270 = vadd.s32 %v3174, %v3238
        %v3271 = vadd.s32 %v3175, %v3239
        %v3272 = vadd.s32 %v3176, %v3240
        %v3273 = vadd.s32 %v3177, %v3241
        %v3274 = vadd.s32 %v3178, %v3242
        %v3275 = vadd.s32 %v3179, %v3243
        %v3276 = vadd.s32 %v3180, %v3244
        %v3277 = vadd.s32 %v3181, %v3245
        %v3278 = vadd.s32 %v3182, %v3246
        %v3279 = vadd.s32 %v3183, %v3247
        %v3280 = vadd.s32 %v3184, %v3248
        %vm3281 = vcmp.ge.s32.totalorder %v241, 112
        %vm3282 = vcmp.ge.s32.totalorder %v242, 112
        %vm3283 = vcmp.ge.s32.totalorder %v243, 112
        %vm3284 = vcmp.ge.s32.totalorder %v244, 112
        %vm3285 = vcmp.ge.s32.totalorder %v245, 112
        %vm3286 = vcmp.ge.s32.totalorder %v246, 112
        %vm3287 = vcmp.ge.s32.totalorder %v247, 112
        %vm3288 = vcmp.ge.s32.totalorder %v248, 112
        %vm3289 = vcmp.ge.s32.totalorder %v2761, 112
        %vm3290 = vcmp.ge.s32.totalorder %v2762, 112
        %vm3291 = vcmp.ge.s32.totalorder %v2763, 112
        %vm3292 = vcmp.ge.s32.totalorder %v2764, 112
        %vm3293 = vcmp.ge.s32.totalorder %v2765, 112
        %vm3294 = vcmp.ge.s32.totalorder %v2766, 112
        %vm3295 = vcmp.ge.s32.totalorder %v2767, 112
        %vm3296 = vcmp.ge.s32.totalorder %v2768, 112
        %vm3297 = vcmp.ge.s32.totalorder %v2769, 112
        %vm3298 = vcmp.ge.s32.totalorder %v2770, 112
        %vm3299 = vcmp.ge.s32.totalorder %v2771, 112
        %vm3300 = vcmp.ge.s32.totalorder %v2772, 112
        %vm3301 = vcmp.ge.s32.totalorder %v2773, 112
        %vm3302 = vcmp.ge.s32.totalorder %v2774, 112
        %vm3303 = vcmp.ge.s32.totalorder %v2775, 112
        %vm3304 = vcmp.ge.s32.totalorder %v2776, 112
        %vm3305 = vcmp.ge.s32.totalorder %v2777, 112
        %vm3306 = vcmp.ge.s32.totalorder %v2778, 112
        %vm3307 = vcmp.ge.s32.totalorder %v2779, 112
        %vm3308 = vcmp.ge.s32.totalorder %v2780, 112
        %vm3309 = vcmp.ge.s32.totalorder %v2781, 112
        %vm3310 = vcmp.ge.s32.totalorder %v2782, 112
        %vm3311 = vcmp.ge.s32.totalorder %v2783, 112
        %vm3312 = vcmp.ge.s32.totalorder %v2784, 112
        %v3313 = vsel %vm3281, 1, 0
        %v3314 = vsel %vm3282, 1, 0
        %v3315 = vsel %vm3283, 1, 0
        %v3316 = vsel %vm3284, 1, 0
        %v3317 = vsel %vm3285, 1, 0
        %v3318 = vsel %vm3286, 1, 0
        %v3319 = vsel %vm3287, 1, 0
        %v3320 = vsel %vm3288, 1, 0
        %v3321 = vsel %vm3289, 1, 0
        %v3322 = vsel %vm3290, 1, 0
        %v3323 = vsel %vm3291, 1, 0
        %v3324 = vsel %vm3292, 1, 0
        %v3325 = vsel %vm3293, 1, 0
        %v3326 = vsel %vm3294, 1, 0
        %v3327 = vsel %vm3295, 1, 0
        %v3328 = vsel %vm3296, 1, 0
        %v3329 = vsel %vm3297, 1, 0
        %v3330 = vsel %vm3298, 1, 0
        %v3331 = vsel %vm3299, 1, 0
        %v3332 = vsel %vm3300, 1, 0
        %v3333 = vsel %vm3301, 1, 0
        %v3334 = vsel %vm3302, 1, 0
        %v3335 = vsel %vm3303, 1, 0
        %v3336 = vsel %vm3304, 1, 0
        %v3337 = vsel %vm3305, 1, 0
        %v3338 = vsel %vm3306, 1, 0
        %v3339 = vsel %vm3307, 1, 0
        %v3340 = vsel %vm3308, 1, 0
        %v3341 = vsel %vm3309, 1, 0
        %v3342 = vsel %vm3310, 1, 0
        %v3343 = vsel %vm3311, 1, 0
        %v3344 = vsel %vm3312, 1, 0
        %v3345 = vadd.s32 %v3249, %v3313
        %v3346 = vadd.s32 %v3250, %v3314
        %v3347 = vadd.s32 %v3251, %v3315
        %v3348 = vadd.s32 %v3252, %v3316
        %v3349 = vadd.s32 %v3253, %v3317
        %v3350 = vadd.s32 %v3254, %v3318
        %v3351 = vadd.s32 %v3255, %v3319
        %v3352 = vadd.s32 %v3256, %v3320
        %v3353 = vadd.s32 %v3257, %v3321
        %v3354 = vadd.s32 %v3258, %v3322
        %v3355 = vadd.s32 %v3259, %v3323
        %v3356 = vadd.s32 %v3260, %v3324
        %v3357 = vadd.s32 %v3261, %v3325
        %v3358 = vadd.s32 %v3262, %v3326
        %v3359 = vadd.s32 %v3263, %v3327
        %v3360 = vadd.s32 %v3264, %v3328
        %v3361 = vadd.s32 %v3265, %v3329
        %v3362 = vadd.s32 %v3266, %v3330
        %v3363 = vadd.s32 %v3267, %v3331
        %v3364 = vadd.s32 %v3268, %v3332
        %v3365 = vadd.s32 %v3269, %v3333
        %v3366 = vadd.s32 %v3270, %v3334
        %v3367 = vadd.s32 %v3271, %v3335
        %v3368 = vadd.s32 %v3272, %v3336
        %v3369 = vadd.s32 %v3273, %v3337
        %v3370 = vadd.s32 %v3274, %v3338
        %v3371 = vadd.s32 %v3275, %v3339
        %v3372 = vadd.s32 %v3276, %v3340
        %v3373 = vadd.s32 %v3277, %v3341
        %v3374 = vadd.s32 %v3278, %v3342
        %v3375 = vadd.s32 %v3279, %v3343
        %v3376 = vadd.s32 %v3280, %v3344
        %vm3377 = vcmp.ge.s32.totalorder %v241, 128
        %vm3378 = vcmp.ge.s32.totalorder %v242, 128
        %vm3379 = vcmp.ge.s32.totalorder %v243, 128
        %vm3380 = vcmp.ge.s32.totalorder %v244, 128
        %vm3381 = vcmp.ge.s32.totalorder %v245, 128
        %vm3382 = vcmp.ge.s32.totalorder %v246, 128
        %vm3383 = vcmp.ge.s32.totalorder %v247, 128
        %vm3384 = vcmp.ge.s32.totalorder %v248, 128
        %vm3385 = vcmp.ge.s32.totalorder %v2761, 128
        %vm3386 = vcmp.ge.s32.totalorder %v2762, 128
        %vm3387 = vcmp.ge.s32.totalorder %v2763, 128
        %vm3388 = vcmp.ge.s32.totalorder %v2764, 128
        %vm3389 = vcmp.ge.s32.totalorder %v2765, 128
        %vm3390 = vcmp.ge.s32.totalorder %v2766, 128
        %vm3391 = vcmp.ge.s32.totalorder %v2767, 128
        %vm3392 = vcmp.ge.s32.totalorder %v2768, 128
        %vm3393 = vcmp.ge.s32.totalorder %v2769, 128
        %vm3394 = vcmp.ge.s32.totalorder %v2770, 128
        %vm3395 = vcmp.ge.s32.totalorder %v2771, 128
        %vm3396 = vcmp.ge.s32.totalorder %v2772, 128
        %vm3397 = vcmp.ge.s32.totalorder %v2773, 128
        %vm3398 = vcmp.ge.s32.totalorder %v2774, 128
        %vm3399 = vcmp.ge.s32.totalorder %v2775, 128
        %vm3400 = vcmp.ge.s32.totalorder %v2776, 128
        %vm3401 = vcmp.ge.s32.totalorder %v2777, 128
        %vm3402 = vcmp.ge.s32.totalorder %v2778, 128
        %vm3403 = vcmp.ge.s32.totalorder %v2779, 128
        %vm3404 = vcmp.ge.s32.totalorder %v2780, 128
        %vm3405 = vcmp.ge.s32.totalorder %v2781, 128
        %vm3406 = vcmp.ge.s32.totalorder %v2782, 128
        %vm3407 = vcmp.ge.s32.totalorder %v2783, 128
        %vm3408 = vcmp.ge.s32.totalorder %v2784, 128
        %v3409 = vsel %vm3377, 1, 0
        %v3410 = vsel %vm3378, 1, 0
        %v3411 = vsel %vm3379, 1, 0
        %v3412 = vsel %vm3380, 1, 0
        %v3413 = vsel %vm3381, 1, 0
        %v3414 = vsel %vm3382, 1, 0
        %v3415 = vsel %vm3383, 1, 0
        %v3416 = vsel %vm3384, 1, 0
        %v3417 = vsel %vm3385, 1, 0
        %v3418 = vsel %vm3386, 1, 0
        %v3419 = vsel %vm3387, 1, 0
        %v3420 = vsel %vm3388, 1, 0
        %v3421 = vsel %vm3389, 1, 0
        %v3422 = vsel %vm3390, 1, 0
        %v3423 = vsel %vm3391, 1, 0
        %v3424 = vsel %vm3392, 1, 0
        %v3425 = vsel %vm3393, 1, 0
        %v3426 = vsel %vm3394, 1, 0
        %v3427 = vsel %vm3395, 1, 0
        %v3428 = vsel %vm3396, 1, 0
        %v3429 = vsel %vm3397, 1, 0
        %v3430 = vsel %vm3398, 1, 0
        %v3431 = vsel %vm3399, 1, 0
        %v3432 = vsel %vm3400, 1, 0
        %v3433 = vsel %vm3401, 1, 0
        %v3434 = vsel %vm3402, 1, 0
        %v3435 = vsel %vm3403, 1, 0
        %v3436 = vsel %vm3404, 1, 0
        %v3437 = vsel %vm3405, 1, 0
        %v3438 = vsel %vm3406, 1, 0
        %v3439 = vsel %vm3407, 1, 0
        %v3440 = vsel %vm3408, 1, 0
        %v3441 = vadd.s32 %v3345, %v3409
        %v3442 = vadd.s32 %v3346, %v3410
        %v3443 = vadd.s32 %v3347, %v3411
        %v3444 = vadd.s32 %v3348, %v3412
        %v3445 = vadd.s32 %v3349, %v3413
        %v3446 = vadd.s32 %v3350, %v3414
        %v3447 = vadd.s32 %v3351, %v3415
        %v3448 = vadd.s32 %v3352, %v3416
        %v3449 = vadd.s32 %v3353, %v3417
        %v3450 = vadd.s32 %v3354, %v3418
        %v3451 = vadd.s32 %v3355, %v3419
        %v3452 = vadd.s32 %v3356, %v3420
        %v3453 = vadd.s32 %v3357, %v3421
        %v3454 = vadd.s32 %v3358, %v3422
        %v3455 = vadd.s32 %v3359, %v3423
        %v3456 = vadd.s32 %v3360, %v3424
        %v3457 = vadd.s32 %v3361, %v3425
        %v3458 = vadd.s32 %v3362, %v3426
        %v3459 = vadd.s32 %v3363, %v3427
        %v3460 = vadd.s32 %v3364, %v3428
        %v3461 = vadd.s32 %v3365, %v3429
        %v3462 = vadd.s32 %v3366, %v3430
        %v3463 = vadd.s32 %v3367, %v3431
        %v3464 = vadd.s32 %v3368, %v3432
        %v3465 = vadd.s32 %v3369, %v3433
        %v3466 = vadd.s32 %v3370, %v3434
        %v3467 = vadd.s32 %v3371, %v3435
        %v3468 = vadd.s32 %v3372, %v3436
        %v3469 = vadd.s32 %v3373, %v3437
        %v3470 = vadd.s32 %v3374, %v3438
        %v3471 = vadd.s32 %v3375, %v3439
        %v3472 = vadd.s32 %v3376, %v3440
        %vm3473 = vcmp.ge.s32.totalorder %v241, 144
        %vm3474 = vcmp.ge.s32.totalorder %v242, 144
        %vm3475 = vcmp.ge.s32.totalorder %v243, 144
        %vm3476 = vcmp.ge.s32.totalorder %v244, 144
        %vm3477 = vcmp.ge.s32.totalorder %v245, 144
        %vm3478 = vcmp.ge.s32.totalorder %v246, 144
        %vm3479 = vcmp.ge.s32.totalorder %v247, 144
        %vm3480 = vcmp.ge.s32.totalorder %v248, 144
        %vm3481 = vcmp.ge.s32.totalorder %v2761, 144
        %vm3482 = vcmp.ge.s32.totalorder %v2762, 144
        %vm3483 = vcmp.ge.s32.totalorder %v2763, 144
        %vm3484 = vcmp.ge.s32.totalorder %v2764, 144
        %vm3485 = vcmp.ge.s32.totalorder %v2765, 144
        %vm3486 = vcmp.ge.s32.totalorder %v2766, 144
        %vm3487 = vcmp.ge.s32.totalorder %v2767, 144
        %vm3488 = vcmp.ge.s32.totalorder %v2768, 144
        %vm3489 = vcmp.ge.s32.totalorder %v2769, 144
        %vm3490 = vcmp.ge.s32.totalorder %v2770, 144
        %vm3491 = vcmp.ge.s32.totalorder %v2771, 144
        %vm3492 = vcmp.ge.s32.totalorder %v2772, 144
        %vm3493 = vcmp.ge.s32.totalorder %v2773, 144
        %vm3494 = vcmp.ge.s32.totalorder %v2774, 144
        %vm3495 = vcmp.ge.s32.totalorder %v2775, 144
        %vm3496 = vcmp.ge.s32.totalorder %v2776, 144
        %vm3497 = vcmp.ge.s32.totalorder %v2777, 144
        %vm3498 = vcmp.ge.s32.totalorder %v2778, 144
        %vm3499 = vcmp.ge.s32.totalorder %v2779, 144
        %vm3500 = vcmp.ge.s32.totalorder %v2780, 144
        %vm3501 = vcmp.ge.s32.totalorder %v2781, 144
        %vm3502 = vcmp.ge.s32.totalorder %v2782, 144
        %vm3503 = vcmp.ge.s32.totalorder %v2783, 144
        %vm3504 = vcmp.ge.s32.totalorder %v2784, 144
        %v3505 = vsel %vm3473, 1, 0
        %v3506 = vsel %vm3474, 1, 0
        %v3507 = vsel %vm3475, 1, 0
        %v3508 = vsel %vm3476, 1, 0
        %v3509 = vsel %vm3477, 1, 0
        %v3510 = vsel %vm3478, 1, 0
        %v3511 = vsel %vm3479, 1, 0
        %v3512 = vsel %vm3480, 1, 0
        %v3513 = vsel %vm3481, 1, 0
        %v3514 = vsel %vm3482, 1, 0
        %v3515 = vsel %vm3483, 1, 0
        %v3516 = vsel %vm3484, 1, 0
        %v3517 = vsel %vm3485, 1, 0
        %v3518 = vsel %vm3486, 1, 0
        %v3519 = vsel %vm3487, 1, 0
        %v3520 = vsel %vm3488, 1, 0
        %v3521 = vsel %vm3489, 1, 0
        %v3522 = vsel %vm3490, 1, 0
        %v3523 = vsel %vm3491, 1, 0
        %v3524 = vsel %vm3492, 1, 0
        %v3525 = vsel %vm3493, 1, 0
        %v3526 = vsel %vm3494, 1, 0
        %v3527 = vsel %vm3495, 1, 0
        %v3528 = vsel %vm3496, 1, 0
        %v3529 = vsel %vm3497, 1, 0
        %v3530 = vsel %vm3498, 1, 0
        %v3531 = vsel %vm3499, 1, 0
        %v3532 = vsel %vm3500, 1, 0
        %v3533 = vsel %vm3501, 1, 0
        %v3534 = vsel %vm3502, 1, 0
        %v3535 = vsel %vm3503, 1, 0
        %v3536 = vsel %vm3504, 1, 0
        %v3537 = vadd.s32 %v3441, %v3505
        %v3538 = vadd.s32 %v3442, %v3506
        %v3539 = vadd.s32 %v3443, %v3507
        %v3540 = vadd.s32 %v3444, %v3508
        %v3541 = vadd.s32 %v3445, %v3509
        %v3542 = vadd.s32 %v3446, %v3510
        %v3543 = vadd.s32 %v3447, %v3511
        %v3544 = vadd.s32 %v3448, %v3512
        %v3545 = vadd.s32 %v3449, %v3513
        %v3546 = vadd.s32 %v3450, %v3514
        %v3547 = vadd.s32 %v3451, %v3515
        %v3548 = vadd.s32 %v3452, %v3516
        %v3549 = vadd.s32 %v3453, %v3517
        %v3550 = vadd.s32 %v3454, %v3518
        %v3551 = vadd.s32 %v3455, %v3519
        %v3552 = vadd.s32 %v3456, %v3520
        %v3553 = vadd.s32 %v3457, %v3521
        %v3554 = vadd.s32 %v3458, %v3522
        %v3555 = vadd.s32 %v3459, %v3523
        %v3556 = vadd.s32 %v3460, %v3524
        %v3557 = vadd.s32 %v3461, %v3525
        %v3558 = vadd.s32 %v3462, %v3526
        %v3559 = vadd.s32 %v3463, %v3527
        %v3560 = vadd.s32 %v3464, %v3528
        %v3561 = vadd.s32 %v3465, %v3529
        %v3562 = vadd.s32 %v3466, %v3530
        %v3563 = vadd.s32 %v3467, %v3531
        %v3564 = vadd.s32 %v3468, %v3532
        %v3565 = vadd.s32 %v3469, %v3533
        %v3566 = vadd.s32 %v3470, %v3534
        %v3567 = vadd.s32 %v3471, %v3535
        %v3568 = vadd.s32 %v3472, %v3536
        %vm3569 = vcmp.ge.s32.totalorder %v241, 160
        %vm3570 = vcmp.ge.s32.totalorder %v242, 160
        %vm3571 = vcmp.ge.s32.totalorder %v243, 160
        %vm3572 = vcmp.ge.s32.totalorder %v244, 160
        %vm3573 = vcmp.ge.s32.totalorder %v245, 160
        %vm3574 = vcmp.ge.s32.totalorder %v246, 160
        %vm3575 = vcmp.ge.s32.totalorder %v247, 160
        %vm3576 = vcmp.ge.s32.totalorder %v248, 160
        %vm3577 = vcmp.ge.s32.totalorder %v2761, 160
        %vm3578 = vcmp.ge.s32.totalorder %v2762, 160
        %vm3579 = vcmp.ge.s32.totalorder %v2763, 160
        %vm3580 = vcmp.ge.s32.totalorder %v2764, 160
        %vm3581 = vcmp.ge.s32.totalorder %v2765, 160
        %vm3582 = vcmp.ge.s32.totalorder %v2766, 160
        %vm3583 = vcmp.ge.s32.totalorder %v2767, 160
        %vm3584 = vcmp.ge.s32.totalorder %v2768, 160
        %vm3585 = vcmp.ge.s32.totalorder %v2769, 160
        %vm3586 = vcmp.ge.s32.totalorder %v2770, 160
        %vm3587 = vcmp.ge.s32.totalorder %v2771, 160
        %vm3588 = vcmp.ge.s32.totalorder %v2772, 160
        %vm3589 = vcmp.ge.s32.totalorder %v2773, 160
        %vm3590 = vcmp.ge.s32.totalorder %v2774, 160
        %vm3591 = vcmp.ge.s32.totalorder %v2775, 160
        %vm3592 = vcmp.ge.s32.totalorder %v2776, 160
        %vm3593 = vcmp.ge.s32.totalorder %v2777, 160
        %vm3594 = vcmp.ge.s32.totalorder %v2778, 160
        %vm3595 = vcmp.ge.s32.totalorder %v2779, 160
        %vm3596 = vcmp.ge.s32.totalorder %v2780, 160
        %vm3597 = vcmp.ge.s32.totalorder %v2781, 160
        %vm3598 = vcmp.ge.s32.totalorder %v2782, 160
        %vm3599 = vcmp.ge.s32.totalorder %v2783, 160
        %vm3600 = vcmp.ge.s32.totalorder %v2784, 160
        %v3601 = vsel %vm3569, 1, 0
        %v3602 = vsel %vm3570, 1, 0
        %v3603 = vsel %vm3571, 1, 0
        %v3604 = vsel %vm3572, 1, 0
        %v3605 = vsel %vm3573, 1, 0
        %v3606 = vsel %vm3574, 1, 0
        %v3607 = vsel %vm3575, 1, 0
        %v3608 = vsel %vm3576, 1, 0
        %v3609 = vsel %vm3577, 1, 0
        %v3610 = vsel %vm3578, 1, 0
        %v3611 = vsel %vm3579, 1, 0
        %v3612 = vsel %vm3580, 1, 0
        %v3613 = vsel %vm3581, 1, 0
        %v3614 = vsel %vm3582, 1, 0
        %v3615 = vsel %vm3583, 1, 0
        %v3616 = vsel %vm3584, 1, 0
        %v3617 = vsel %vm3585, 1, 0
        %v3618 = vsel %vm3586, 1, 0
        %v3619 = vsel %vm3587, 1, 0
        %v3620 = vsel %vm3588, 1, 0
        %v3621 = vsel %vm3589, 1, 0
        %v3622 = vsel %vm3590, 1, 0
        %v3623 = vsel %vm3591, 1, 0
        %v3624 = vsel %vm3592, 1, 0
        %v3625 = vsel %vm3593, 1, 0
        %v3626 = vsel %vm3594, 1, 0
        %v3627 = vsel %vm3595, 1, 0
        %v3628 = vsel %vm3596, 1, 0
        %v3629 = vsel %vm3597, 1, 0
        %v3630 = vsel %vm3598, 1, 0
        %v3631 = vsel %vm3599, 1, 0
        %v3632 = vsel %vm3600, 1, 0
        %v3633 = vadd.s32 %v3537, %v3601
        %v3634 = vadd.s32 %v3538, %v3602
        %v3635 = vadd.s32 %v3539, %v3603
        %v3636 = vadd.s32 %v3540, %v3604
        %v3637 = vadd.s32 %v3541, %v3605
        %v3638 = vadd.s32 %v3542, %v3606
        %v3639 = vadd.s32 %v3543, %v3607
        %v3640 = vadd.s32 %v3544, %v3608
        %v3641 = vadd.s32 %v3545, %v3609
        %v3642 = vadd.s32 %v3546, %v3610
        %v3643 = vadd.s32 %v3547, %v3611
        %v3644 = vadd.s32 %v3548, %v3612
        %v3645 = vadd.s32 %v3549, %v3613
        %v3646 = vadd.s32 %v3550, %v3614
        %v3647 = vadd.s32 %v3551, %v3615
        %v3648 = vadd.s32 %v3552, %v3616
        %v3649 = vadd.s32 %v3553, %v3617
        %v3650 = vadd.s32 %v3554, %v3618
        %v3651 = vadd.s32 %v3555, %v3619
        %v3652 = vadd.s32 %v3556, %v3620
        %v3653 = vadd.s32 %v3557, %v3621
        %v3654 = vadd.s32 %v3558, %v3622
        %v3655 = vadd.s32 %v3559, %v3623
        %v3656 = vadd.s32 %v3560, %v3624
        %v3657 = vadd.s32 %v3561, %v3625
        %v3658 = vadd.s32 %v3562, %v3626
        %v3659 = vadd.s32 %v3563, %v3627
        %v3660 = vadd.s32 %v3564, %v3628
        %v3661 = vadd.s32 %v3565, %v3629
        %v3662 = vadd.s32 %v3566, %v3630
        %v3663 = vadd.s32 %v3567, %v3631
        %v3664 = vadd.s32 %v3568, %v3632
        %vm3665 = vcmp.ge.s32.totalorder %v241, 176
        %vm3666 = vcmp.ge.s32.totalorder %v242, 176
        %vm3667 = vcmp.ge.s32.totalorder %v243, 176
        %vm3668 = vcmp.ge.s32.totalorder %v244, 176
        %vm3669 = vcmp.ge.s32.totalorder %v245, 176
        %vm3670 = vcmp.ge.s32.totalorder %v246, 176
        %vm3671 = vcmp.ge.s32.totalorder %v247, 176
        %vm3672 = vcmp.ge.s32.totalorder %v248, 176
        %vm3673 = vcmp.ge.s32.totalorder %v2761, 176
        %vm3674 = vcmp.ge.s32.totalorder %v2762, 176
        %vm3675 = vcmp.ge.s32.totalorder %v2763, 176
        %vm3676 = vcmp.ge.s32.totalorder %v2764, 176
        %vm3677 = vcmp.ge.s32.totalorder %v2765, 176
        %vm3678 = vcmp.ge.s32.totalorder %v2766, 176
        %vm3679 = vcmp.ge.s32.totalorder %v2767, 176
        %vm3680 = vcmp.ge.s32.totalorder %v2768, 176
        %vm3681 = vcmp.ge.s32.totalorder %v2769, 176
        %vm3682 = vcmp.ge.s32.totalorder %v2770, 176
        %vm3683 = vcmp.ge.s32.totalorder %v2771, 176
        %vm3684 = vcmp.ge.s32.totalorder %v2772, 176
        %vm3685 = vcmp.ge.s32.totalorder %v2773, 176
        %vm3686 = vcmp.ge.s32.totalorder %v2774, 176
        %vm3687 = vcmp.ge.s32.totalorder %v2775, 176
        %vm3688 = vcmp.ge.s32.totalorder %v2776, 176
        %vm3689 = vcmp.ge.s32.totalorder %v2777, 176
        %vm3690 = vcmp.ge.s32.totalorder %v2778, 176
        %vm3691 = vcmp.ge.s32.totalorder %v2779, 176
        %vm3692 = vcmp.ge.s32.totalorder %v2780, 176
        %vm3693 = vcmp.ge.s32.totalorder %v2781, 176
        %vm3694 = vcmp.ge.s32.totalorder %v2782, 176
        %vm3695 = vcmp.ge.s32.totalorder %v2783, 176
        %vm3696 = vcmp.ge.s32.totalorder %v2784, 176
        %v3697 = vsel %vm3665, 1, 0
        %v3698 = vsel %vm3666, 1, 0
        %v3699 = vsel %vm3667, 1, 0
        %v3700 = vsel %vm3668, 1, 0
        %v3701 = vsel %vm3669, 1, 0
        %v3702 = vsel %vm3670, 1, 0
        %v3703 = vsel %vm3671, 1, 0
        %v3704 = vsel %vm3672, 1, 0
        %v3705 = vsel %vm3673, 1, 0
        %v3706 = vsel %vm3674, 1, 0
        %v3707 = vsel %vm3675, 1, 0
        %v3708 = vsel %vm3676, 1, 0
        %v3709 = vsel %vm3677, 1, 0
        %v3710 = vsel %vm3678, 1, 0
        %v3711 = vsel %vm3679, 1, 0
        %v3712 = vsel %vm3680, 1, 0
        %v3713 = vsel %vm3681, 1, 0
        %v3714 = vsel %vm3682, 1, 0
        %v3715 = vsel %vm3683, 1, 0
        %v3716 = vsel %vm3684, 1, 0
        %v3717 = vsel %vm3685, 1, 0
        %v3718 = vsel %vm3686, 1, 0
        %v3719 = vsel %vm3687, 1, 0
        %v3720 = vsel %vm3688, 1, 0
        %v3721 = vsel %vm3689, 1, 0
        %v3722 = vsel %vm3690, 1, 0
        %v3723 = vsel %vm3691, 1, 0
        %v3724 = vsel %vm3692, 1, 0
        %v3725 = vsel %vm3693, 1, 0
        %v3726 = vsel %vm3694, 1, 0
        %v3727 = vsel %vm3695, 1, 0
        %v3728 = vsel %vm3696, 1, 0
        %v3729 = vadd.s32 %v3633, %v3697
        %v3730 = vadd.s32 %v3634, %v3698
        %v3731 = vadd.s32 %v3635, %v3699
        %v3732 = vadd.s32 %v3636, %v3700
        %v3733 = vadd.s32 %v3637, %v3701
        %v3734 = vadd.s32 %v3638, %v3702
        %v3735 = vadd.s32 %v3639, %v3703
        %v3736 = vadd.s32 %v3640, %v3704
        %v3737 = vadd.s32 %v3641, %v3705
        %v3738 = vadd.s32 %v3642, %v3706
        %v3739 = vadd.s32 %v3643, %v3707
        %v3740 = vadd.s32 %v3644, %v3708
        %v3741 = vadd.s32 %v3645, %v3709
        %v3742 = vadd.s32 %v3646, %v3710
        %v3743 = vadd.s32 %v3647, %v3711
        %v3744 = vadd.s32 %v3648, %v3712
        %v3745 = vadd.s32 %v3649, %v3713
        %v3746 = vadd.s32 %v3650, %v3714
        %v3747 = vadd.s32 %v3651, %v3715
        %v3748 = vadd.s32 %v3652, %v3716
        %v3749 = vadd.s32 %v3653, %v3717
        %v3750 = vadd.s32 %v3654, %v3718
        %v3751 = vadd.s32 %v3655, %v3719
        %v3752 = vadd.s32 %v3656, %v3720
        %v3753 = vadd.s32 %v3657, %v3721
        %v3754 = vadd.s32 %v3658, %v3722
        %v3755 = vadd.s32 %v3659, %v3723
        %v3756 = vadd.s32 %v3660, %v3724
        %v3757 = vadd.s32 %v3661, %v3725
        %v3758 = vadd.s32 %v3662, %v3726
        %v3759 = vadd.s32 %v3663, %v3727
        %v3760 = vadd.s32 %v3664, %v3728
        %vm3761 = vcmp.ge.s32.totalorder %v241, 192
        %vm3762 = vcmp.ge.s32.totalorder %v242, 192
        %vm3763 = vcmp.ge.s32.totalorder %v243, 192
        %vm3764 = vcmp.ge.s32.totalorder %v244, 192
        %vm3765 = vcmp.ge.s32.totalorder %v245, 192
        %vm3766 = vcmp.ge.s32.totalorder %v246, 192
        %vm3767 = vcmp.ge.s32.totalorder %v247, 192
        %vm3768 = vcmp.ge.s32.totalorder %v248, 192
        %vm3769 = vcmp.ge.s32.totalorder %v2761, 192
        %vm3770 = vcmp.ge.s32.totalorder %v2762, 192
        %vm3771 = vcmp.ge.s32.totalorder %v2763, 192
        %vm3772 = vcmp.ge.s32.totalorder %v2764, 192
        %vm3773 = vcmp.ge.s32.totalorder %v2765, 192
        %vm3774 = vcmp.ge.s32.totalorder %v2766, 192
        %vm3775 = vcmp.ge.s32.totalorder %v2767, 192
        %vm3776 = vcmp.ge.s32.totalorder %v2768, 192
        %vm3777 = vcmp.ge.s32.totalorder %v2769, 192
        %vm3778 = vcmp.ge.s32.totalorder %v2770, 192
        %vm3779 = vcmp.ge.s32.totalorder %v2771, 192
        %vm3780 = vcmp.ge.s32.totalorder %v2772, 192
        %vm3781 = vcmp.ge.s32.totalorder %v2773, 192
        %vm3782 = vcmp.ge.s32.totalorder %v2774, 192
        %vm3783 = vcmp.ge.s32.totalorder %v2775, 192
        %vm3784 = vcmp.ge.s32.totalorder %v2776, 192
        %vm3785 = vcmp.ge.s32.totalorder %v2777, 192
        %vm3786 = vcmp.ge.s32.totalorder %v2778, 192
        %vm3787 = vcmp.ge.s32.totalorder %v2779, 192
        %vm3788 = vcmp.ge.s32.totalorder %v2780, 192
        %vm3789 = vcmp.ge.s32.totalorder %v2781, 192
        %vm3790 = vcmp.ge.s32.totalorder %v2782, 192
        %vm3791 = vcmp.ge.s32.totalorder %v2783, 192
        %vm3792 = vcmp.ge.s32.totalorder %v2784, 192
        %v3793 = vsel %vm3761, 1, 0
        %v3794 = vsel %vm3762, 1, 0
        %v3795 = vsel %vm3763, 1, 0
        %v3796 = vsel %vm3764, 1, 0
        %v3797 = vsel %vm3765, 1, 0
        %v3798 = vsel %vm3766, 1, 0
        %v3799 = vsel %vm3767, 1, 0
        %v3800 = vsel %vm3768, 1, 0
        %v3801 = vsel %vm3769, 1, 0
        %v3802 = vsel %vm3770, 1, 0
        %v3803 = vsel %vm3771, 1, 0
        %v3804 = vsel %vm3772, 1, 0
        %v3805 = vsel %vm3773, 1, 0
        %v3806 = vsel %vm3774, 1, 0
        %v3807 = vsel %vm3775, 1, 0
        %v3808 = vsel %vm3776, 1, 0
        %v3809 = vsel %vm3777, 1, 0
        %v3810 = vsel %vm3778, 1, 0
        %v3811 = vsel %vm3779, 1, 0
        %v3812 = vsel %vm3780, 1, 0
        %v3813 = vsel %vm3781, 1, 0
        %v3814 = vsel %vm3782, 1, 0
        %v3815 = vsel %vm3783, 1, 0
        %v3816 = vsel %vm3784, 1, 0
        %v3817 = vsel %vm3785, 1, 0
        %v3818 = vsel %vm3786, 1, 0
        %v3819 = vsel %vm3787, 1, 0
        %v3820 = vsel %vm3788, 1, 0
        %v3821 = vsel %vm3789, 1, 0
        %v3822 = vsel %vm3790, 1, 0
        %v3823 = vsel %vm3791, 1, 0
        %v3824 = vsel %vm3792, 1, 0
        %v3825 = vadd.s32 %v3729, %v3793
        %v3826 = vadd.s32 %v3730, %v3794
        %v3827 = vadd.s32 %v3731, %v3795
        %v3828 = vadd.s32 %v3732, %v3796
        %v3829 = vadd.s32 %v3733, %v3797
        %v3830 = vadd.s32 %v3734, %v3798
        %v3831 = vadd.s32 %v3735, %v3799
        %v3832 = vadd.s32 %v3736, %v3800
        %v3833 = vadd.s32 %v3737, %v3801
        %v3834 = vadd.s32 %v3738, %v3802
        %v3835 = vadd.s32 %v3739, %v3803
        %v3836 = vadd.s32 %v3740, %v3804
        %v3837 = vadd.s32 %v3741, %v3805
        %v3838 = vadd.s32 %v3742, %v3806
        %v3839 = vadd.s32 %v3743, %v3807
        %v3840 = vadd.s32 %v3744, %v3808
        %v3841 = vadd.s32 %v3745, %v3809
        %v3842 = vadd.s32 %v3746, %v3810
        %v3843 = vadd.s32 %v3747, %v3811
        %v3844 = vadd.s32 %v3748, %v3812
        %v3845 = vadd.s32 %v3749, %v3813
        %v3846 = vadd.s32 %v3750, %v3814
        %v3847 = vadd.s32 %v3751, %v3815
        %v3848 = vadd.s32 %v3752, %v3816
        %v3849 = vadd.s32 %v3753, %v3817
        %v3850 = vadd.s32 %v3754, %v3818
        %v3851 = vadd.s32 %v3755, %v3819
        %v3852 = vadd.s32 %v3756, %v3820
        %v3853 = vadd.s32 %v3757, %v3821
        %v3854 = vadd.s32 %v3758, %v3822
        %v3855 = vadd.s32 %v3759, %v3823
        %v3856 = vadd.s32 %v3760, %v3824
        %vm3857 = vcmp.ge.s32.totalorder %v241, 208
        %vm3858 = vcmp.ge.s32.totalorder %v242, 208
        %vm3859 = vcmp.ge.s32.totalorder %v243, 208
        %vm3860 = vcmp.ge.s32.totalorder %v244, 208
        %vm3861 = vcmp.ge.s32.totalorder %v245, 208
        %vm3862 = vcmp.ge.s32.totalorder %v246, 208
        %vm3863 = vcmp.ge.s32.totalorder %v247, 208
        %vm3864 = vcmp.ge.s32.totalorder %v248, 208
        %vm3865 = vcmp.ge.s32.totalorder %v2761, 208
        %vm3866 = vcmp.ge.s32.totalorder %v2762, 208
        %vm3867 = vcmp.ge.s32.totalorder %v2763, 208
        %vm3868 = vcmp.ge.s32.totalorder %v2764, 208
        %vm3869 = vcmp.ge.s32.totalorder %v2765, 208
        %vm3870 = vcmp.ge.s32.totalorder %v2766, 208
        %vm3871 = vcmp.ge.s32.totalorder %v2767, 208
        %vm3872 = vcmp.ge.s32.totalorder %v2768, 208
        %vm3873 = vcmp.ge.s32.totalorder %v2769, 208
        %vm3874 = vcmp.ge.s32.totalorder %v2770, 208
        %vm3875 = vcmp.ge.s32.totalorder %v2771, 208
        %vm3876 = vcmp.ge.s32.totalorder %v2772, 208
        %vm3877 = vcmp.ge.s32.totalorder %v2773, 208
        %vm3878 = vcmp.ge.s32.totalorder %v2774, 208
        %vm3879 = vcmp.ge.s32.totalorder %v2775, 208
        %vm3880 = vcmp.ge.s32.totalorder %v2776, 208
        %vm3881 = vcmp.ge.s32.totalorder %v2777, 208
        %vm3882 = vcmp.ge.s32.totalorder %v2778, 208
        %vm3883 = vcmp.ge.s32.totalorder %v2779, 208
        %vm3884 = vcmp.ge.s32.totalorder %v2780, 208
        %vm3885 = vcmp.ge.s32.totalorder %v2781, 208
        %vm3886 = vcmp.ge.s32.totalorder %v2782, 208
        %vm3887 = vcmp.ge.s32.totalorder %v2783, 208
        %vm3888 = vcmp.ge.s32.totalorder %v2784, 208
        %v3889 = vsel %vm3857, 1, 0
        %v3890 = vsel %vm3858, 1, 0
        %v3891 = vsel %vm3859, 1, 0
        %v3892 = vsel %vm3860, 1, 0
        %v3893 = vsel %vm3861, 1, 0
        %v3894 = vsel %vm3862, 1, 0
        %v3895 = vsel %vm3863, 1, 0
        %v3896 = vsel %vm3864, 1, 0
        %v3897 = vsel %vm3865, 1, 0
        %v3898 = vsel %vm3866, 1, 0
        %v3899 = vsel %vm3867, 1, 0
        %v3900 = vsel %vm3868, 1, 0
        %v3901 = vsel %vm3869, 1, 0
        %v3902 = vsel %vm3870, 1, 0
        %v3903 = vsel %vm3871, 1, 0
        %v3904 = vsel %vm3872, 1, 0
        %v3905 = vsel %vm3873, 1, 0
        %v3906 = vsel %vm3874, 1, 0
        %v3907 = vsel %vm3875, 1, 0
        %v3908 = vsel %vm3876, 1, 0
        %v3909 = vsel %vm3877, 1, 0
        %v3910 = vsel %vm3878, 1, 0
        %v3911 = vsel %vm3879, 1, 0
        %v3912 = vsel %vm3880, 1, 0
        %v3913 = vsel %vm3881, 1, 0
        %v3914 = vsel %vm3882, 1, 0
        %v3915 = vsel %vm3883, 1, 0
        %v3916 = vsel %vm3884, 1, 0
        %v3917 = vsel %vm3885, 1, 0
        %v3918 = vsel %vm3886, 1, 0
        %v3919 = vsel %vm3887, 1, 0
        %v3920 = vsel %vm3888, 1, 0
        %v3921 = vadd.s32 %v3825, %v3889
        %v3922 = vadd.s32 %v3826, %v3890
        %v3923 = vadd.s32 %v3827, %v3891
        %v3924 = vadd.s32 %v3828, %v3892
        %v3925 = vadd.s32 %v3829, %v3893
        %v3926 = vadd.s32 %v3830, %v3894
        %v3927 = vadd.s32 %v3831, %v3895
        %v3928 = vadd.s32 %v3832, %v3896
        %v3929 = vadd.s32 %v3833, %v3897
        %v3930 = vadd.s32 %v3834, %v3898
        %v3931 = vadd.s32 %v3835, %v3899
        %v3932 = vadd.s32 %v3836, %v3900
        %v3933 = vadd.s32 %v3837, %v3901
        %v3934 = vadd.s32 %v3838, %v3902
        %v3935 = vadd.s32 %v3839, %v3903
        %v3936 = vadd.s32 %v3840, %v3904
        %v3937 = vadd.s32 %v3841, %v3905
        %v3938 = vadd.s32 %v3842, %v3906
        %v3939 = vadd.s32 %v3843, %v3907
        %v3940 = vadd.s32 %v3844, %v3908
        %v3941 = vadd.s32 %v3845, %v3909
        %v3942 = vadd.s32 %v3846, %v3910
        %v3943 = vadd.s32 %v3847, %v3911
        %v3944 = vadd.s32 %v3848, %v3912
        %v3945 = vadd.s32 %v3849, %v3913
        %v3946 = vadd.s32 %v3850, %v3914
        %v3947 = vadd.s32 %v3851, %v3915
        %v3948 = vadd.s32 %v3852, %v3916
        %v3949 = vadd.s32 %v3853, %v3917
        %v3950 = vadd.s32 %v3854, %v3918
        %v3951 = vadd.s32 %v3855, %v3919
        %v3952 = vadd.s32 %v3856, %v3920
        %vm3953 = vcmp.ge.s32.totalorder %v241, 224
        %vm3954 = vcmp.ge.s32.totalorder %v242, 224
        %vm3955 = vcmp.ge.s32.totalorder %v243, 224
        %vm3956 = vcmp.ge.s32.totalorder %v244, 224
        %vm3957 = vcmp.ge.s32.totalorder %v245, 224
        %vm3958 = vcmp.ge.s32.totalorder %v246, 224
        %vm3959 = vcmp.ge.s32.totalorder %v247, 224
        %vm3960 = vcmp.ge.s32.totalorder %v248, 224
        %vm3961 = vcmp.ge.s32.totalorder %v2761, 224
        %vm3962 = vcmp.ge.s32.totalorder %v2762, 224
        %vm3963 = vcmp.ge.s32.totalorder %v2763, 224
        %vm3964 = vcmp.ge.s32.totalorder %v2764, 224
        %vm3965 = vcmp.ge.s32.totalorder %v2765, 224
        %vm3966 = vcmp.ge.s32.totalorder %v2766, 224
        %vm3967 = vcmp.ge.s32.totalorder %v2767, 224
        %vm3968 = vcmp.ge.s32.totalorder %v2768, 224
        %vm3969 = vcmp.ge.s32.totalorder %v2769, 224
        %vm3970 = vcmp.ge.s32.totalorder %v2770, 224
        %vm3971 = vcmp.ge.s32.totalorder %v2771, 224
        %vm3972 = vcmp.ge.s32.totalorder %v2772, 224
        %vm3973 = vcmp.ge.s32.totalorder %v2773, 224
        %vm3974 = vcmp.ge.s32.totalorder %v2774, 224
        %vm3975 = vcmp.ge.s32.totalorder %v2775, 224
        %vm3976 = vcmp.ge.s32.totalorder %v2776, 224
        %vm3977 = vcmp.ge.s32.totalorder %v2777, 224
        %vm3978 = vcmp.ge.s32.totalorder %v2778, 224
        %vm3979 = vcmp.ge.s32.totalorder %v2779, 224
        %vm3980 = vcmp.ge.s32.totalorder %v2780, 224
        %vm3981 = vcmp.ge.s32.totalorder %v2781, 224
        %vm3982 = vcmp.ge.s32.totalorder %v2782, 224
        %vm3983 = vcmp.ge.s32.totalorder %v2783, 224
        %vm3984 = vcmp.ge.s32.totalorder %v2784, 224
        %v3985 = vsel %vm3953, 1, 0
        %v3986 = vsel %vm3954, 1, 0
        %v3987 = vsel %vm3955, 1, 0
        %v3988 = vsel %vm3956, 1, 0
        %v3989 = vsel %vm3957, 1, 0
        %v3990 = vsel %vm3958, 1, 0
        %v3991 = vsel %vm3959, 1, 0
        %v3992 = vsel %vm3960, 1, 0
        %v3993 = vsel %vm3961, 1, 0
        %v3994 = vsel %vm3962, 1, 0
        %v3995 = vsel %vm3963, 1, 0
        %v3996 = vsel %vm3964, 1, 0
        %v3997 = vsel %vm3965, 1, 0
        %v3998 = vsel %vm3966, 1, 0
        %v3999 = vsel %vm3967, 1, 0
        %v4000 = vsel %vm3968, 1, 0
        %v4001 = vsel %vm3969, 1, 0
        %v4002 = vsel %vm3970, 1, 0
        %v4003 = vsel %vm3971, 1, 0
        %v4004 = vsel %vm3972, 1, 0
        %v4005 = vsel %vm3973, 1, 0
        %v4006 = vsel %vm3974, 1, 0
        %v4007 = vsel %vm3975, 1, 0
        %v4008 = vsel %vm3976, 1, 0
        %v4009 = vsel %vm3977, 1, 0
        %v4010 = vsel %vm3978, 1, 0
        %v4011 = vsel %vm3979, 1, 0
        %v4012 = vsel %vm3980, 1, 0
        %v4013 = vsel %vm3981, 1, 0
        %v4014 = vsel %vm3982, 1, 0
        %v4015 = vsel %vm3983, 1, 0
        %v4016 = vsel %vm3984, 1, 0
        %v4017 = vadd.s32 %v3921, %v3985
        %v4018 = vadd.s32 %v3922, %v3986
        %v4019 = vadd.s32 %v3923, %v3987
        %v4020 = vadd.s32 %v3924, %v3988
        %v4021 = vadd.s32 %v3925, %v3989
        %v4022 = vadd.s32 %v3926, %v3990
        %v4023 = vadd.s32 %v3927, %v3991
        %v4024 = vadd.s32 %v3928, %v3992
        %v4025 = vadd.s32 %v3929, %v3993
        %v4026 = vadd.s32 %v3930, %v3994
        %v4027 = vadd.s32 %v3931, %v3995
        %v4028 = vadd.s32 %v3932, %v3996
        %v4029 = vadd.s32 %v3933, %v3997
        %v4030 = vadd.s32 %v3934, %v3998
        %v4031 = vadd.s32 %v3935, %v3999
        %v4032 = vadd.s32 %v3936, %v4000
        %v4033 = vadd.s32 %v3937, %v4001
        %v4034 = vadd.s32 %v3938, %v4002
        %v4035 = vadd.s32 %v3939, %v4003
        %v4036 = vadd.s32 %v3940, %v4004
        %v4037 = vadd.s32 %v3941, %v4005
        %v4038 = vadd.s32 %v3942, %v4006
        %v4039 = vadd.s32 %v3943, %v4007
        %v4040 = vadd.s32 %v3944, %v4008
        %v4041 = vadd.s32 %v3945, %v4009
        %v4042 = vadd.s32 %v3946, %v4010
        %v4043 = vadd.s32 %v3947, %v4011
        %v4044 = vadd.s32 %v3948, %v4012
        %v4045 = vadd.s32 %v3949, %v4013
        %v4046 = vadd.s32 %v3950, %v4014
        %v4047 = vadd.s32 %v3951, %v4015
        %v4048 = vadd.s32 %v3952, %v4016
        %vm4049 = vcmp.ge.s32.totalorder %v241, 240
        %vm4050 = vcmp.ge.s32.totalorder %v242, 240
        %vm4051 = vcmp.ge.s32.totalorder %v243, 240
        %vm4052 = vcmp.ge.s32.totalorder %v244, 240
        %vm4053 = vcmp.ge.s32.totalorder %v245, 240
        %vm4054 = vcmp.ge.s32.totalorder %v246, 240
        %vm4055 = vcmp.ge.s32.totalorder %v247, 240
        %vm4056 = vcmp.ge.s32.totalorder %v248, 240
        %vm4057 = vcmp.ge.s32.totalorder %v2761, 240
        %vm4058 = vcmp.ge.s32.totalorder %v2762, 240
        %vm4059 = vcmp.ge.s32.totalorder %v2763, 240
        %vm4060 = vcmp.ge.s32.totalorder %v2764, 240
        %vm4061 = vcmp.ge.s32.totalorder %v2765, 240
        %vm4062 = vcmp.ge.s32.totalorder %v2766, 240
        %vm4063 = vcmp.ge.s32.totalorder %v2767, 240
        %vm4064 = vcmp.ge.s32.totalorder %v2768, 240
        %vm4065 = vcmp.ge.s32.totalorder %v2769, 240
        %vm4066 = vcmp.ge.s32.totalorder %v2770, 240
        %vm4067 = vcmp.ge.s32.totalorder %v2771, 240
        %vm4068 = vcmp.ge.s32.totalorder %v2772, 240
        %vm4069 = vcmp.ge.s32.totalorder %v2773, 240
        %vm4070 = vcmp.ge.s32.totalorder %v2774, 240
        %vm4071 = vcmp.ge.s32.totalorder %v2775, 240
        %vm4072 = vcmp.ge.s32.totalorder %v2776, 240
        %vm4073 = vcmp.ge.s32.totalorder %v2777, 240
        %vm4074 = vcmp.ge.s32.totalorder %v2778, 240
        %vm4075 = vcmp.ge.s32.totalorder %v2779, 240
        %vm4076 = vcmp.ge.s32.totalorder %v2780, 240
        %vm4077 = vcmp.ge.s32.totalorder %v2781, 240
        %vm4078 = vcmp.ge.s32.totalorder %v2782, 240
        %vm4079 = vcmp.ge.s32.totalorder %v2783, 240
        %vm4080 = vcmp.ge.s32.totalorder %v2784, 240
        %v4081 = vsel %vm4049, 1, 0
        %v4082 = vsel %vm4050, 1, 0
        %v4083 = vsel %vm4051, 1, 0
        %v4084 = vsel %vm4052, 1, 0
        %v4085 = vsel %vm4053, 1, 0
        %v4086 = vsel %vm4054, 1, 0
        %v4087 = vsel %vm4055, 1, 0
        %v4088 = vsel %vm4056, 1, 0
        %v4089 = vsel %vm4057, 1, 0
        %v4090 = vsel %vm4058, 1, 0
        %v4091 = vsel %vm4059, 1, 0
        %v4092 = vsel %vm4060, 1, 0
        %v4093 = vsel %vm4061, 1, 0
        %v4094 = vsel %vm4062, 1, 0
        %v4095 = vsel %vm4063, 1, 0
        %v4096 = vsel %vm4064, 1, 0
        %v4097 = vsel %vm4065, 1, 0
        %v4098 = vsel %vm4066, 1, 0
        %v4099 = vsel %vm4067, 1, 0
        %v4100 = vsel %vm4068, 1, 0
        %v4101 = vsel %vm4069, 1, 0
        %v4102 = vsel %vm4070, 1, 0
        %v4103 = vsel %vm4071, 1, 0
        %v4104 = vsel %vm4072, 1, 0
        %v4105 = vsel %vm4073, 1, 0
        %v4106 = vsel %vm4074, 1, 0
        %v4107 = vsel %vm4075, 1, 0
        %v4108 = vsel %vm4076, 1, 0
        %v4109 = vsel %vm4077, 1, 0
        %v4110 = vsel %vm4078, 1, 0
        %v4111 = vsel %vm4079, 1, 0
        %v4112 = vsel %vm4080, 1, 0
        %v4113 = vadd.s32 %v4017, %v4081
        %v4114 = vadd.s32 %v4018, %v4082
        %v4115 = vadd.s32 %v4019, %v4083
        %v4116 = vadd.s32 %v4020, %v4084
        %v4117 = vadd.s32 %v4021, %v4085
        %v4118 = vadd.s32 %v4022, %v4086
        %v4119 = vadd.s32 %v4023, %v4087
        %v4120 = vadd.s32 %v4024, %v4088
        %v4121 = vadd.s32 %v4025, %v4089
        %v4122 = vadd.s32 %v4026, %v4090
        %v4123 = vadd.s32 %v4027, %v4091
        %v4124 = vadd.s32 %v4028, %v4092
        %v4125 = vadd.s32 %v4029, %v4093
        %v4126 = vadd.s32 %v4030, %v4094
        %v4127 = vadd.s32 %v4031, %v4095
        %v4128 = vadd.s32 %v4032, %v4096
        %v4129 = vadd.s32 %v4033, %v4097
        %v4130 = vadd.s32 %v4034, %v4098
        %v4131 = vadd.s32 %v4035, %v4099
        %v4132 = vadd.s32 %v4036, %v4100
        %v4133 = vadd.s32 %v4037, %v4101
        %v4134 = vadd.s32 %v4038, %v4102
        %v4135 = vadd.s32 %v4039, %v4103
        %v4136 = vadd.s32 %v4040, %v4104
        %v4137 = vadd.s32 %v4041, %v4105
        %v4138 = vadd.s32 %v4042, %v4106
        %v4139 = vadd.s32 %v4043, %v4107
        %v4140 = vadd.s32 %v4044, %v4108
        %v4141 = vadd.s32 %v4045, %v4109
        %v4142 = vadd.s32 %v4046, %v4110
        %v4143 = vadd.s32 %v4047, %v4111
        %v4144 = vadd.s32 %v4048, %v4112
        %v4145 = vmul.u32 %v4113, 16
        %v4146 = vmul.u32 %v4114, 16
        %v4147 = vmul.u32 %v4115, 16
        %v4148 = vmul.u32 %v4116, 16
        %v4149 = vmul.u32 %v4117, 16
        %v4150 = vmul.u32 %v4118, 16
        %v4151 = vmul.u32 %v4119, 16
        %v4152 = vmul.u32 %v4120, 16
        %v4153 = vmul.u32 %v4121, 16
        %v4154 = vmul.u32 %v4122, 16
        %v4155 = vmul.u32 %v4123, 16
        %v4156 = vmul.u32 %v4124, 16
        %v4157 = vmul.u32 %v4125, 16
        %v4158 = vmul.u32 %v4126, 16
        %v4159 = vmul.u32 %v4127, 16
        %v4160 = vmul.u32 %v4128, 16
        %v4161 = vmul.u32 %v4129, 16
        %v4162 = vmul.u32 %v4130, 16
        %v4163 = vmul.u32 %v4131, 16
        %v4164 = vmul.u32 %v4132, 16
        %v4165 = vmul.u32 %v4133, 16
        %v4166 = vmul.u32 %v4134, 16
        %v4167 = vmul.u32 %v4135, 16
        %v4168 = vmul.u32 %v4136, 16
        %v4169 = vmul.u32 %v4137, 16
        %v4170 = vmul.u32 %v4138, 16
        %v4171 = vmul.u32 %v4139, 16
        %v4172 = vmul.u32 %v4140, 16
        %v4173 = vmul.u32 %v4141, 16
        %v4174 = vmul.u32 %v4142, 16
        %v4175 = vmul.u32 %v4143, 16
        %v4176 = vmul.u32 %v4144, 16
        %v4177 = vsub.s32 %v241, %v4145
        %v4178 = vsub.s32 %v242, %v4146
        %v4179 = vsub.s32 %v243, %v4147
        %v4180 = vsub.s32 %v244, %v4148
        %v4181 = vsub.s32 %v245, %v4149
        %v4182 = vsub.s32 %v246, %v4150
        %v4183 = vsub.s32 %v247, %v4151
        %v4184 = vsub.s32 %v248, %v4152
        %v4185 = vsub.s32 %v2761, %v4153
        %v4186 = vsub.s32 %v2762, %v4154
        %v4187 = vsub.s32 %v2763, %v4155
        %v4188 = vsub.s32 %v2764, %v4156
        %v4189 = vsub.s32 %v2765, %v4157
        %v4190 = vsub.s32 %v2766, %v4158
        %v4191 = vsub.s32 %v2767, %v4159
        %v4192 = vsub.s32 %v2768, %v4160
        %v4193 = vsub.s32 %v2769, %v4161
        %v4194 = vsub.s32 %v2770, %v4162
        %v4195 = vsub.s32 %v2771, %v4163
        %v4196 = vsub.s32 %v2772, %v4164
        %v4197 = vsub.s32 %v2773, %v4165
        %v4198 = vsub.s32 %v2774, %v4166
        %v4199 = vsub.s32 %v2775, %v4167
        %v4200 = vsub.s32 %v2776, %v4168
        %v4201 = vsub.s32 %v2777, %v4169
        %v4202 = vsub.s32 %v2778, %v4170
        %v4203 = vsub.s32 %v2779, %v4171
        %v4204 = vsub.s32 %v2780, %v4172
        %v4205 = vsub.s32 %v2781, %v4173
        %v4206 = vsub.s32 %v2782, %v4174
        %v4207 = vsub.s32 %v2783, %v4175
        %v4208 = vsub.s32 %v2784, %v4176
        %v4209 = vmul.u32 %v4177, 2
        %v4210 = vmul.u32 %v4178, 2
        %v4211 = vmul.u32 %v4179, 2
        %v4212 = vmul.u32 %v4180, 2
        %v4213 = vmul.u32 %v4181, 2
        %v4214 = vmul.u32 %v4182, 2
        %v4215 = vmul.u32 %v4183, 2
        %v4216 = vmul.u32 %v4184, 2
        %v4217 = vmul.u32 %v4185, 2
        %v4218 = vmul.u32 %v4186, 2
        %v4219 = vmul.u32 %v4187, 2
        %v4220 = vmul.u32 %v4188, 2
        %v4221 = vmul.u32 %v4189, 2
        %v4222 = vmul.u32 %v4190, 2
        %v4223 = vmul.u32 %v4191, 2
        %v4224 = vmul.u32 %v4192, 2
        %v4225 = vmul.u32 %v4193, 2
        %v4226 = vmul.u32 %v4194, 2
        %v4227 = vmul.u32 %v4195, 2
        %v4228 = vmul.u32 %v4196, 2
        %v4229 = vmul.u32 %v4197, 2
        %v4230 = vmul.u32 %v4198, 2
        %v4231 = vmul.u32 %v4199, 2
        %v4232 = vmul.u32 %v4200, 2
        %v4233 = vmul.u32 %v4201, 2
        %v4234 = vmul.u32 %v4202, 2
        %v4235 = vmul.u32 %v4203, 2
        %v4236 = vmul.u32 %v4204, 2
        %v4237 = vmul.u32 %v4205, 2
        %v4238 = vmul.u32 %v4206, 2
        %v4239 = vmul.u32 %v4207, 2
        %v4240 = vmul.u32 %v4208, 2
        %vm4241 = vcmp.ge.s32.totalorder %v250, %v4209
        %vm4242 = vcmp.ge.s32.totalorder %v250, %v4210
        %vm4243 = vcmp.ge.s32.totalorder %v250, %v4211
        %vm4244 = vcmp.ge.s32.totalorder %v250, %v4212
        %vm4245 = vcmp.ge.s32.totalorder %v250, %v4213
        %vm4246 = vcmp.ge.s32.totalorder %v250, %v4214
        %vm4247 = vcmp.ge.s32.totalorder %v250, %v4215
        %vm4248 = vcmp.ge.s32.totalorder %v250, %v4216
        %vm4249 = vcmp.ge.s32.totalorder %v250, %v4217
        %vm4250 = vcmp.ge.s32.totalorder %v250, %v4218
        %vm4251 = vcmp.ge.s32.totalorder %v250, %v4219
        %vm4252 = vcmp.ge.s32.totalorder %v250, %v4220
        %vm4253 = vcmp.ge.s32.totalorder %v250, %v4221
        %vm4254 = vcmp.ge.s32.totalorder %v250, %v4222
        %vm4255 = vcmp.ge.s32.totalorder %v250, %v4223
        %vm4256 = vcmp.ge.s32.totalorder %v250, %v4224
        %vm4257 = vcmp.ge.s32.totalorder %v250, %v4225
        %vm4258 = vcmp.ge.s32.totalorder %v250, %v4226
        %vm4259 = vcmp.ge.s32.totalorder %v250, %v4227
        %vm4260 = vcmp.ge.s32.totalorder %v250, %v4228
        %vm4261 = vcmp.ge.s32.totalorder %v250, %v4229
        %vm4262 = vcmp.ge.s32.totalorder %v250, %v4230
        %vm4263 = vcmp.ge.s32.totalorder %v250, %v4231
        %vm4264 = vcmp.ge.s32.totalorder %v250, %v4232
        %vm4265 = vcmp.ge.s32.totalorder %v250, %v4233
        %vm4266 = vcmp.ge.s32.totalorder %v250, %v4234
        %vm4267 = vcmp.ge.s32.totalorder %v250, %v4235
        %vm4268 = vcmp.ge.s32.totalorder %v250, %v4236
        %vm4269 = vcmp.ge.s32.totalorder %v250, %v4237
        %vm4270 = vcmp.ge.s32.totalorder %v250, %v4238
        %vm4271 = vcmp.ge.s32.totalorder %v250, %v4239
        %vm4272 = vcmp.ge.s32.totalorder %v250, %v4240
        %v4273 = vadd.s32 %v4209, 1
        %v4274 = vadd.s32 %v4210, 1
        %v4275 = vadd.s32 %v4211, 1
        %v4276 = vadd.s32 %v4212, 1
        %v4277 = vadd.s32 %v4213, 1
        %v4278 = vadd.s32 %v4214, 1
        %v4279 = vadd.s32 %v4215, 1
        %v4280 = vadd.s32 %v4216, 1
        %v4281 = vadd.s32 %v4217, 1
        %v4282 = vadd.s32 %v4218, 1
        %v4283 = vadd.s32 %v4219, 1
        %v4284 = vadd.s32 %v4220, 1
        %v4285 = vadd.s32 %v4221, 1
        %v4286 = vadd.s32 %v4222, 1
        %v4287 = vadd.s32 %v4223, 1
        %v4288 = vadd.s32 %v4224, 1
        %v4289 = vadd.s32 %v4225, 1
        %v4290 = vadd.s32 %v4226, 1
        %v4291 = vadd.s32 %v4227, 1
        %v4292 = vadd.s32 %v4228, 1
        %v4293 = vadd.s32 %v4229, 1
        %v4294 = vadd.s32 %v4230, 1
        %v4295 = vadd.s32 %v4231, 1
        %v4296 = vadd.s32 %v4232, 1
        %v4297 = vadd.s32 %v4233, 1
        %v4298 = vadd.s32 %v4234, 1
        %v4299 = vadd.s32 %v4235, 1
        %v4300 = vadd.s32 %v4236, 1
        %v4301 = vadd.s32 %v4237, 1
        %v4302 = vadd.s32 %v4238, 1
        %v4303 = vadd.s32 %v4239, 1
        %v4304 = vadd.s32 %v4240, 1
        %vm4305 = vcmp.le.s32.totalorder %v250, %v4273
        %vm4306 = vcmp.le.s32.totalorder %v250, %v4274
        %vm4307 = vcmp.le.s32.totalorder %v250, %v4275
        %vm4308 = vcmp.le.s32.totalorder %v250, %v4276
        %vm4309 = vcmp.le.s32.totalorder %v250, %v4277
        %vm4310 = vcmp.le.s32.totalorder %v250, %v4278
        %vm4311 = vcmp.le.s32.totalorder %v250, %v4279
        %vm4312 = vcmp.le.s32.totalorder %v250, %v4280
        %vm4313 = vcmp.le.s32.totalorder %v250, %v4281
        %vm4314 = vcmp.le.s32.totalorder %v250, %v4282
        %vm4315 = vcmp.le.s32.totalorder %v250, %v4283
        %vm4316 = vcmp.le.s32.totalorder %v250, %v4284
        %vm4317 = vcmp.le.s32.totalorder %v250, %v4285
        %vm4318 = vcmp.le.s32.totalorder %v250, %v4286
        %vm4319 = vcmp.le.s32.totalorder %v250, %v4287
        %vm4320 = vcmp.le.s32.totalorder %v250, %v4288
        %vm4321 = vcmp.le.s32.totalorder %v250, %v4289
        %vm4322 = vcmp.le.s32.totalorder %v250, %v4290
        %vm4323 = vcmp.le.s32.totalorder %v250, %v4291
        %vm4324 = vcmp.le.s32.totalorder %v250, %v4292
        %vm4325 = vcmp.le.s32.totalorder %v250, %v4293
        %vm4326 = vcmp.le.s32.totalorder %v250, %v4294
        %vm4327 = vcmp.le.s32.totalorder %v250, %v4295
        %vm4328 = vcmp.le.s32.totalorder %v250, %v4296
        %vm4329 = vcmp.le.s32.totalorder %v250, %v4297
        %vm4330 = vcmp.le.s32.totalorder %v250, %v4298
        %vm4331 = vcmp.le.s32.totalorder %v250, %v4299
        %vm4332 = vcmp.le.s32.totalorder %v250, %v4300
        %vm4333 = vcmp.le.s32.totalorder %v250, %v4301
        %vm4334 = vcmp.le.s32.totalorder %v250, %v4302
        %vm4335 = vcmp.le.s32.totalorder %v250, %v4303
        %vm4336 = vcmp.le.s32.totalorder %v250, %v4304
        %vm4337 = vmand %vm4241, %vm4305
        %vm4338 = vmand %vm4242, %vm4306
        %vm4339 = vmand %vm4243, %vm4307
        %vm4340 = vmand %vm4244, %vm4308
        %vm4341 = vmand %vm4245, %vm4309
        %vm4342 = vmand %vm4246, %vm4310
        %vm4343 = vmand %vm4247, %vm4311
        %vm4344 = vmand %vm4248, %vm4312
        %vm4345 = vmand %vm4249, %vm4313
        %vm4346 = vmand %vm4250, %vm4314
        %vm4347 = vmand %vm4251, %vm4315
        %vm4348 = vmand %vm4252, %vm4316
        %vm4349 = vmand %vm4253, %vm4317
        %vm4350 = vmand %vm4254, %vm4318
        %vm4351 = vmand %vm4255, %vm4319
        %vm4352 = vmand %vm4256, %vm4320
        %vm4353 = vmand %vm4257, %vm4321
        %vm4354 = vmand %vm4258, %vm4322
        %vm4355 = vmand %vm4259, %vm4323
        %vm4356 = vmand %vm4260, %vm4324
        %vm4357 = vmand %vm4261, %vm4325
        %vm4358 = vmand %vm4262, %vm4326
        %vm4359 = vmand %vm4263, %vm4327
        %vm4360 = vmand %vm4264, %vm4328
        %vm4361 = vmand %vm4265, %vm4329
        %vm4362 = vmand %vm4266, %vm4330
        %vm4363 = vmand %vm4267, %vm4331
        %vm4364 = vmand %vm4268, %vm4332
        %vm4365 = vmand %vm4269, %vm4333
        %vm4366 = vmand %vm4270, %vm4334
        %vm4367 = vmand %vm4271, %vm4335
        %vm4368 = vmand %vm4272, %vm4336
        %v4369 = vsel %vm4337, 1.0, 0.0
        %v4370 = vsel %vm4338, 1.0, 0.0
        %v4371 = vsel %vm4339, 1.0, 0.0
        %v4372 = vsel %vm4340, 1.0, 0.0
        %v4373 = vsel %vm4341, 1.0, 0.0
        %v4374 = vsel %vm4342, 1.0, 0.0
        %v4375 = vsel %vm4343, 1.0, 0.0
        %v4376 = vsel %vm4344, 1.0, 0.0
        %v4377 = vsel %vm4345, 1.0, 0.0
        %v4378 = vsel %vm4346, 1.0, 0.0
        %v4379 = vsel %vm4347, 1.0, 0.0
        %v4380 = vsel %vm4348, 1.0, 0.0
        %v4381 = vsel %vm4349, 1.0, 0.0
        %v4382 = vsel %vm4350, 1.0, 0.0
        %v4383 = vsel %vm4351, 1.0, 0.0
        %v4384 = vsel %vm4352, 1.0, 0.0
        %v4385 = vsel %vm4353, 1.0, 0.0
        %v4386 = vsel %vm4354, 1.0, 0.0
        %v4387 = vsel %vm4355, 1.0, 0.0
        %v4388 = vsel %vm4356, 1.0, 0.0
        %v4389 = vsel %vm4357, 1.0, 0.0
        %v4390 = vsel %vm4358, 1.0, 0.0
        %v4391 = vsel %vm4359, 1.0, 0.0
        %v4392 = vsel %vm4360, 1.0, 0.0
        %v4393 = vsel %vm4361, 1.0, 0.0
        %v4394 = vsel %vm4362, 1.0, 0.0
        %v4395 = vsel %vm4363, 1.0, 0.0
        %v4396 = vsel %vm4364, 1.0, 0.0
        %v4397 = vsel %vm4365, 1.0, 0.0
        %v4398 = vsel %vm4366, 1.0, 0.0
        %v4399 = vsel %vm4367, 1.0, 0.0
        %v4400 = vsel %vm4368, 1.0, 0.0
        %v4401 = vmul.f32 %v2753, %v2723
        %v4402 = vmul.f32 %v2754, %v2724
        %v4403 = vmul.f32 %v2755, %v2723
        %v4404 = vmul.f32 %v2756, %v2724
        %v4405 = vmul.f32 %v2757, %v2723
        %v4406 = vmul.f32 %v2758, %v2724
        %v4407 = vmul.f32 %v2759, %v2723
        %v4408 = vmul.f32 %v2760, %v2724
        %4409 = vmatpush.msra.mxu0 %v4384
        %4410 = vmatpush.msra.mxu0 %v4383
        %4411 = vmatpush.msra.mxu0 %v4382
        %4412 = vmatpush.msra.mxu0 %v4381
        %4413 = vmatpush.msra.mxu0 %v4380
        %4414 = vmatpush.msra.mxu0 %v4379
        %4415 = vmatpush.msra.mxu0 %v4378
        %4416 = vmatpush.msra.mxu0 %v4377
        %4417 = vmatpush.msra.mxu0 %v4376
        %4418 = vmatpush.msra.mxu0 %v4375
        %4419 = vmatpush.msra.mxu0 %v4374
        %4420 = vmatpush.msra.mxu0 %v4373
        %4421 = vmatpush.msra.mxu0 %v4372
        %4422 = vmatpush.msra.mxu0 %v4371
        %4423 = vmatpush.msra.mxu0 %v4370
        %4424 = vmatpush.msra.mxu0 %v4369
        %4425 = vmatmul.f32.gmra.mxu0 %v4401
        %v4426 = vpop.f32.mrf.mxu0
        %v4427 = vadd.f32 0.0, %v4426
        %4428 = vmatmul.f32.gmra.mxu0 %v4403
        %v4429 = vpop.f32.mrf.mxu0
        %v4430 = vadd.f32 0.0, %v4429
        %4431 = vmatmul.f32.gmra.mxu0 %v4405
        %v4432 = vpop.f32.mrf.mxu0
        %v4433 = vadd.f32 0.0, %v4432
        %4434 = vmatmul.f32.gmra.mxu0 %v4407
        %v4435 = vpop.f32.mrf.mxu0
        %v4436 = vadd.f32 0.0, %v4435
        %4437 = vdwg.mxu0
        %4438 = vmatpush.msra.mxu0 %v4400
        %4439 = vmatpush.msra.mxu0 %v4399
        %4440 = vmatpush.msra.mxu0 %v4398
        %4441 = vmatpush.msra.mxu0 %v4397
        %4442 = vmatpush.msra.mxu0 %v4396
        %4443 = vmatpush.msra.mxu0 %v4395
        %4444 = vmatpush.msra.mxu0 %v4394
        %4445 = vmatpush.msra.mxu0 %v4393
        %4446 = vmatpush.msra.mxu0 %v4392
        %4447 = vmatpush.msra.mxu0 %v4391
        %4448 = vmatpush.msra.mxu0 %v4390
        %4449 = vmatpush.msra.mxu0 %v4389
        %4450 = vmatpush.msra.mxu0 %v4388
        %4451 = vmatpush.msra.mxu0 %v4387
        %4452 = vmatpush.msra.mxu0 %v4386
        %4453 = vmatpush.msra.mxu0 %v4385
        %4454 = vmatmul.f32.gmra.mxu0 %v4402
        %v4455 = vpop.f32.mrf.mxu0
        %v4456 = vadd.f32 %v4427, %v4455
        %4457 = vmatmul.f32.gmra.mxu0 %v4404
        %v4458 = vpop.f32.mrf.mxu0
        %v4459 = vadd.f32 %v4430, %v4458
        %4460 = vmatmul.f32.gmra.mxu0 %v4406
        %v4461 = vpop.f32.mrf.mxu0
        %v4462 = vadd.f32 %v4433, %v4461
        %4463 = vmatmul.f32.gmra.mxu0 %v4408
        %v4464 = vpop.f32.mrf.mxu0
        %v4465 = vadd.f32 %v4436, %v4464
        %4466 = vdwg.mxu0
        %4467 = vst.msk [vmem:[%s219] sm:$0xff] %vm836, %v4456
        %4468 = vst.msk [vmem:[%s219 + $0x8] sm:$0xff] %vm836, %v4459
        %4469 = vst.msk [vmem:[%s219 + $0x10] sm:$0xff] %vm836, %v4462
        %4470 = vst.msk [vmem:[%s219 + $0x18] sm:$0xff] %vm836, %v4465
        %s4471 = sand.u32 %s139, 1
        %s4472 = scalar_lea.sflag [#allocation4], %s4471
        %s4473 = sand.u32 %s139, 1
        %s4474 = smul.addr %s4473, 32
        %s4475 = scalar_lea.vmem [#allocation3], %s4474
        // Predicated region
        $region41: #{decoder_forward.1} parent=39 // pred_check
          %p4476 = pneg %p149
        $region42: #{decoder_forward.1} parent=39 // pred_check_branch
          %4478 = sbr.rel (%p4476) target = $region44
        $region43: #{decoder_forward.1} parent=39 // pred_region
          %4480 = vsyncadd %s4472, 0
          %s4481 = smul.addr %s21, 4
          %s4482 = smul.addr %s4481, 8
          %s4483 = scalar_lea.hbm %s5, %s4482
          %s4484 = sshll.u32 %s4475, 4
          %s4485 = int_to_ptr.vmem [resolvable:$true] %s4484
          %s4486 = sshll.u32 %s4483, 4
          %s4487 = int_to_ptr.hbm [resolvable:$true] %s4486
          %4492 = dma.vmem_to_hbm [thread:$0]  %s4485, 512, %s4487, %s4472, 128, 128, 8
        $region44: #{decoder_forward.1} parent=39 // pred_fallthru
          _
      $region40: #{decoder_forward.1} parent=5 // pred_fallthru
        _
      %p4493 = scmp.le.s32.totalorder 2, %s16
      // Predicated region
      $region45: #{decoder_forward.1} parent=5 // pred_check
        %p4494 = pneg %p4493
      $region46: #{decoder_forward.1} parent=5 // pred_check_branch
        %4496 = sbr.rel (%p4494) target = $region48
      $region47: #{decoder_forward.1} parent=5 // pred_region
        %s4497 = ssub.s32 %s16, 2
        // Predicated region
        $region49: #{decoder_forward.1} parent=47 // pred_check
          %p4498 = pneg %p155
        $region50: #{decoder_forward.1} parent=47 // pred_check_branch
          %4500 = sbr.rel (%p4498) target = $region52
        $region51: #{decoder_forward.1} parent=47 // pred_region
          %s4501 = sand.u32 %s140, 1
          %s4502 = scalar_lea.sflag [#allocation4], %s4501
          %s4503 = sand.u32 %s140, 1
          %s4504 = smul.addr %s4503, 32
          %s4505 = scalar_lea.vmem [#allocation3], %s4504
          %4507 = dma.done %s4502, 512
        $region52: #{decoder_forward.1} parent=47 // pred_fallthru
          _
      $region48: #{decoder_forward.1} parent=5 // pred_fallthru
        _
    $region6: #{decoder_forward.1} parent=1 // loop_footer
      %s20 = sadd.s32 1, %s16
    $region7: #{decoder_forward.1} parent=1 // loop_footer_branch
      %15 = sbr.rel target = $region3
    $region8: #{decoder_forward.1} parent=1 // loop_exit
      _
    %4508 = vsyncpa [#allocation4], 1
    %s4509 = scalar_lea.sflag [#allocation4], 1
    %4510 = vsyncpa %s4509, 1

</llo_original>
